<compile_context>
chip_gen: v5e
topology: v5e:2x2
jax: 0.10.0
libtpu: 0.0.40
codegen_flags: <defaults>
</compile_context>

<pallas_src>
import jax
import jax.numpy as jnp
from jax.experimental import pallas as pl
from jax.experimental.pallas import tpu as pltpu

# ----------------------- small, module-consistent sizes ---------------------
VOCAB     = 64    # vocabularySize
VOCAB_PAD = 128   # lane-dense classifier output (padded, sliced in wrapper)
EMBED     = 256   # stands in for 8192 (embedding / LSTM input size)
FACTOR    = 256   # factor_size (== embedding size in the module)
HIDDEN    = 128   # stands in for 1024 (LSTM hidden size)
IMG_FEAT  = 64    # imageFeatureSize
ENT       = 32    # entangled_size
SEQ       = 8     # batchSequenceLength
BATCH     = 1     # module hard-codes view(1, 1, 8192) -> batch 1


# -------------------------- fully fused forward kernel ----------------------
def _fused_forward_kernel(
    seq_ref,                                   # SMEM (S, B) int32  (prefetch)
    vgg_ref, tag_ref, emb_ref,                 # inputs / embedding table
    wimg_ref, bimg_ref, wfac_ref, bfac_ref,    # image & factor linears
    v_ref, u_ref, whh_ref, blstm_ref,          # entangled LSTM weights
    wcls_ref, bcls_ref,                        # classifier (lane-padded)
    emb_out_ref, preds_ref, hn_ref, cn_ref,    # outputs
    gx_sc, hs_sc):                             # VMEM scratch
    S = emb_out_ref.shape[0]
    H = hn_ref.shape[-1]

    # ---- build LSTM input sequence directly in the output ref -------------
    # row 0 <- Image2Embedding(vggFeatures); rows 1..S-1 <- token embeddings
    img_emb = (jnp.dot(vgg_ref[...], wimg_ref[...],
                       preferred_element_type=jnp.float32) + bimg_ref[...])
    emb_out_ref[0:1, :] = img_emb
    for t in range(1, S):                      # static unroll, S is tiny
        tok = seq_ref[t, 0]
        emb_out_ref[t:t + 1, :] = emb_ref[pl.ds(tok, 1), :]

    x_all = emb_out_ref[...]                   # (S, E)

    # ---- factor from tag features ------------------------------------------
    factor = (jnp.dot(tag_ref[...], wfac_ref[...],
                      preferred_element_type=jnp.float32) + bfac_ref[...])  # (1, F)

    # ---- hoisted, batched input-to-hidden gate precompute (all timesteps) --
    xv = jnp.dot(x_all, v_ref[...], preferred_element_type=jnp.float32)     # (S, F)
    gx_sc[...] = (jnp.dot(xv * factor, u_ref[...],
                          preferred_element_type=jnp.float32)
                  + blstm_ref[...])                                          # (S, 4H)

    # ---- serial recurrence: only h @ W_hh + gate math per step -------------
    def step(t, carry):
        h, c = carry
        g = gx_sc[pl.ds(t, 1), :] + jnp.dot(
            h, whh_ref[...], preferred_element_type=jnp.float32)            # (1, 4H)
        i_g = jax.nn.sigmoid(g[:, 0 * H:1 * H])
        f_g = jax.nn.sigmoid(g[:, 1 * H:2 * H])
        g_g = jnp.tanh(g[:, 2 * H:3 * H])
        o_g = jax.nn.sigmoid(g[:, 3 * H:4 * H])
        c_new = f_g * c + i_g * g_g
        h_new = o_g * jnp.tanh(c_new)
        hs_sc[pl.ds(t, 1), :] = h_new
        return (h_new, c_new)

    h0 = jnp.zeros((1, H), jnp.float32)
    c0 = jnp.zeros((1, H), jnp.float32)
    h_fin, c_fin = jax.lax.fori_loop(0, S, step, (h0, c0), unroll=True)

    # final hidden / cell state written exactly once
    hn_ref[...] = h_fin
    cn_ref[...] = c_fin

    # ---- classifier on all timesteps at once (lane-dense output) ----------
    preds_ref[...] = (jnp.dot(hs_sc[...], wcls_ref[...],
                              preferred_element_type=jnp.float32)
                      + bcls_ref[...])


# ------------------------------ parameter init -------------------------------
def init_params(key):
    ks = jax.random.split(key, 10)
    s = 0.05
    w_cls = jax.random.normal(ks[6], (HIDDEN, VOCAB), jnp.float32) * s
    # classifier weights/bias stored lane-padded (zeros beyond VOCAB); the
    # wrapper slices the real vocab back out, so semantics are unchanged.
    w_cls_pad = jnp.zeros((HIDDEN, VOCAB_PAD), jnp.float32).at[:, :VOCAB].set(w_cls)
    b_cls_pad = jnp.zeros((1, VOCAB_PAD), jnp.float32)
    return {
        "embedding": jax.random.normal(ks[0], (VOCAB, EMBED), jnp.float32) * s,
        "w_img":  jax.random.normal(ks[1], (IMG_FEAT, EMBED), jnp.float32) * s,
        "b_img":  jnp.zeros((1, EMBED), jnp.float32),
        "w_fact": jax.random.normal(ks[2], (ENT, FACTOR), jnp.float32) * s,
        "b_fact": jnp.zeros((1, FACTOR), jnp.float32),
        "v":      jax.random.normal(ks[3], (EMBED, FACTOR), jnp.float32) * s,
        "u":      jax.random.normal(ks[4], (FACTOR, 4 * HIDDEN), jnp.float32) * s,
        "w_hh":   jax.random.normal(ks[5], (HIDDEN, 4 * HIDDEN), jnp.float32) * s,
        "b_lstm": jnp.zeros((1, 4 * HIDDEN), jnp.float32),
        "w_cls":  w_cls_pad,
        "b_cls":  b_cls_pad,
    }


# --------------------------------- forward -----------------------------------
def forward(params, vgg_features, tag_features, padded_seqs):
    """Mirrors ImageTextGeneratorModel.forward — single fused pallas_call."""
    S, B = padded_seqs.shape

    grid_spec = pltpu.PrefetchScalarGridSpec(
        num_scalar_prefetch=1,          # padded_seqs -> SMEM token ids
        grid=(1,),                      # single invocation; recurrence in-kernel
        in_specs=[
            pl.BlockSpec((1, IMG_FEAT),          lambda i, seq: (0, 0)),  # vgg
            pl.BlockSpec((1, ENT),               lambda i, seq: (0, 0)),  # tag
            pl.BlockSpec((VOCAB, EMBED),         lambda i, seq: (0, 0)),  # emb table
            pl.BlockSpec((IMG_FEAT, EMBED),      lambda i, seq: (0, 0)),  # w_img
            pl.BlockSpec((1, EMBED),             lambda i, seq: (0, 0)),  # b_img
            pl.BlockSpec((ENT, FACTOR),          lambda i, seq: (0, 0)),  # w_fact
            pl.BlockSpec((1, FACTOR),            lambda i, seq: (0, 0)),  # b_fact
            pl.BlockSpec((EMBED, FACTOR),        lambda i, seq: (0, 0)),  # V
            pl.BlockSpec((FACTOR, 4 * HIDDEN),   lambda i, seq: (0, 0)),  # U
            pl.BlockSpec((HIDDEN, 4 * HIDDEN),   lambda i, seq: (0, 0)),  # W_hh
            pl.BlockSpec((1, 4 * HIDDEN),        lambda i, seq: (0, 0)),  # b_lstm
            pl.BlockSpec((HIDDEN, VOCAB_PAD),    lambda i, seq: (0, 0)),  # w_cls
            pl.BlockSpec((1, VOCAB_PAD),         lambda i, seq: (0, 0)),  # b_cls
        ],
        out_specs=[
            pl.BlockSpec((S, EMBED),     lambda i, seq: (0, 0)),  # embeddingVectors
            pl.BlockSpec((S, VOCAB_PAD), lambda i, seq: (0, 0)),  # padded logits
            pl.BlockSpec((1, HIDDEN),    lambda i, seq: (0, 0)),  # h_n
            pl.BlockSpec((1, HIDDEN),    lambda i, seq: (0, 0)),  # c_n
        ],
        scratch_shapes=[
            pltpu.VMEM((S, 4 * HIDDEN), jnp.float32),   # precomputed gates_x
            pltpu.VMEM((S, HIDDEN), jnp.float32),       # per-step hidden states
        ],
    )
    out_shapes = (
        jax.ShapeDtypeStruct((S, EMBED), jnp.float32),
        jax.ShapeDtypeStruct((S, VOCAB_PAD), jnp.float32),
        jax.ShapeDtypeStruct((1, HIDDEN), jnp.float32),
        jax.ShapeDtypeStruct((1, HIDDEN), jnp.float32),
    )

    emb_out, preds_pad, h_n, c_n = pl.pallas_call(
        _fused_forward_kernel,
        out_shape=out_shapes,
        grid_spec=grid_spec,
        compiler_params=pltpu.CompilerParams(
            dimension_semantics=("arbitrary",)),
    )(padded_seqs, vgg_features, tag_features,
      params["embedding"], params["w_img"], params["b_img"],
      params["w_fact"], params["b_fact"], params["v"], params["u"],
      params["w_hh"], params["b_lstm"], params["w_cls"], params["b_cls"])

    preds = preds_pad[:, :VOCAB].reshape(S, B, VOCAB)
    embedding_vectors = emb_out.reshape(S, B, EMBED)
    final_hidden_state = (h_n.reshape(1, B, HIDDEN), c_n.reshape(1, B, HIDDEN))
    return preds, final_hidden_state, embedding_vectors


# ----------------------------------- main ------------------------------------
if __name__ == "__main__":
    key = jax.random.PRNGKey(0)
    k_par, k_seq, k_vgg, k_tag = jax.random.split(key, 4)

    params = init_params(k_par)
    padded_seqs = jax.random.randint(k_seq, (SEQ, BATCH), 0, VOCAB, jnp.int32)
    vgg_features = jax.random.normal(k_vgg, (1, IMG_FEAT), jnp.float32)
    tag_features = jax.random.normal(k_tag, (1, ENT), jnp.float32)

    fwd = jax.jit(forward)
    preds, (h_n, c_n), emb = fwd(params, vgg_features, tag_features,
                                 padded_seqs)
    jax.block_until_ready((preds, h_n, c_n, emb))

    assert preds.shape == (SEQ, BATCH, VOCAB)
    assert h_n.shape == (1, BATCH, HIDDEN) and c_n.shape == (1, BATCH, HIDDEN)
    assert emb.shape == (SEQ, BATCH, EMBED)
    assert bool(jnp.all(jnp.isfinite(preds)))
    print("KERNEL_OK")
</pallas_src>

<mosaic_0001>
module attributes {stable_mosaic.version = 11 : i64} {
  func.func @_fused_forward_kernel(%arg0: i32, %arg1: memref<8x1xi32, #tpu.memory_space<smem>>, %arg2: memref<1x64xf32, #tpu.memory_space<vmem>>, %arg3: memref<1x32xf32, #tpu.memory_space<vmem>>, %arg4: memref<64x256xf32, #tpu.memory_space<vmem>>, %arg5: memref<64x256xf32, #tpu.memory_space<vmem>>, %arg6: memref<1x256xf32, #tpu.memory_space<vmem>>, %arg7: memref<32x256xf32, #tpu.memory_space<vmem>>, %arg8: memref<1x256xf32, #tpu.memory_space<vmem>>, %arg9: memref<256x256xf32, #tpu.memory_space<vmem>>, %arg10: memref<256x512xf32, #tpu.memory_space<vmem>>, %arg11: memref<128x512xf32, #tpu.memory_space<vmem>>, %arg12: memref<1x512xf32, #tpu.memory_space<vmem>>, %arg13: memref<128x128xf32, #tpu.memory_space<vmem>>, %arg14: memref<1x128xf32, #tpu.memory_space<vmem>>, %arg15: memref<8x256xf32, #tpu.memory_space<vmem>>, %arg16: memref<8x128xf32, #tpu.memory_space<vmem>>, %arg17: memref<1x128xf32, #tpu.memory_space<vmem>>, %arg18: memref<1x128xf32, #tpu.memory_space<vmem>>, %arg19: memref<8x512xf32, #tpu.memory_space<vmem>>, %arg20: memref<8x128xf32, #tpu.memory_space<vmem>>) attributes {dimension_semantics = [#tpu.dimension_semantics<arbitrary>], iteration_bounds = array<i64: 1>, scalar_prefetch = 1 : i64, scratch_operands = 2 : i64, tpu.core_type = #tpu.core_type<tc>, window_params = [{pipeline_mode = #tpu.pipeline_mode<synchronous>, transform_indices = @transform_0, window_bounds = array<i64: 1, 64>}, {pipeline_mode = #tpu.pipeline_mode<synchronous>, transform_indices = @transform_1, window_bounds = array<i64: 1, 32>}, {pipeline_mode = #tpu.pipeline_mode<synchronous>, transform_indices = @transform_2, window_bounds = array<i64: 64, 256>}, {pipeline_mode = #tpu.pipeline_mode<synchronous>, transform_indices = @transform_3, window_bounds = array<i64: 64, 256>}, {pipeline_mode = #tpu.pipeline_mode<synchronous>, transform_indices = @transform_4, window_bounds = array<i64: 1, 256>}, {pipeline_mode = #tpu.pipeline_mode<synchronous>, transform_indices = @transform_5, window_bounds = array<i64: 32, 256>}, {pipeline_mode = #tpu.pipeline_mode<synchronous>, transform_indices = @transform_6, window_bounds = array<i64: 1, 256>}, {pipeline_mode = #tpu.pipeline_mode<synchronous>, transform_indices = @transform_7, window_bounds = array<i64: 256, 256>}, {pipeline_mode = #tpu.pipeline_mode<synchronous>, transform_indices = @transform_8, window_bounds = array<i64: 256, 512>}, {pipeline_mode = #tpu.pipeline_mode<synchronous>, transform_indices = @transform_9, window_bounds = array<i64: 128, 512>}, {pipeline_mode = #tpu.pipeline_mode<synchronous>, transform_indices = @transform_10, window_bounds = array<i64: 1, 512>}, {pipeline_mode = #tpu.pipeline_mode<synchronous>, transform_indices = @transform_11, window_bounds = array<i64: 128, 128>}, {pipeline_mode = #tpu.pipeline_mode<synchronous>, transform_indices = @transform_12, window_bounds = array<i64: 1, 128>}, {pipeline_mode = #tpu.pipeline_mode<synchronous>, transform_indices = @transform_13, window_bounds = array<i64: 8, 256>}, {pipeline_mode = #tpu.pipeline_mode<synchronous>, transform_indices = @transform_14, window_bounds = array<i64: 8, 128>}, {pipeline_mode = #tpu.pipeline_mode<synchronous>, transform_indices = @transform_15, window_bounds = array<i64: 1, 128>}, {pipeline_mode = #tpu.pipeline_mode<synchronous>, transform_indices = @transform_16, window_bounds = array<i64: 1, 128>}]} {
    %c0 = arith.constant 0 : index
    %c0_0 = arith.constant 0 : index
    %0 = vector.load %arg2[%c0, %c0_0] : memref<1x64xf32, #tpu.memory_space<vmem>>, vector<1x64xf32>
    %c0_1 = arith.constant 0 : index
    %c0_2 = arith.constant 0 : index
    %1 = vector.load %arg5[%c0_1, %c0_2] : memref<64x256xf32, #tpu.memory_space<vmem>>, vector<64x256xf32>
    %cst = arith.constant dense<0.000000e+00> : vector<1x256xf32>
    %2 = tpu.matmul %0, %1, %cst {dimension_numbers = #tpu.dot_dimension_numbers<[1], [0], [0], [1], [0, 0, 1, 1], [], []>} : vector<1x64xf32>, vector<64x256xf32>, vector<1x256xf32> -> vector<1x256xf32>
    %c0_3 = arith.constant 0 : index
    %c0_4 = arith.constant 0 : index
    %3 = vector.load %arg6[%c0_3, %c0_4] : memref<1x256xf32, #tpu.memory_space<vmem>>, vector<1x256xf32>
    %4 = arith.addf %2, %3 : vector<1x256xf32>
    %c0_5 = arith.constant 0 : index
    %c0_6 = arith.constant 0 : index
    %5 = vector.load %arg15[%c0_5, %c0_6] : memref<8x256xf32, #tpu.memory_space<vmem>>, vector<1x256xf32>
    tpu.vector_store %arg15[%c0_5, %c0_6], %4 {strides = array<i32>} : memref<8x256xf32, #tpu.memory_space<vmem>>, vector<1x256xf32>,
    %c1 = arith.constant 1 : index
    %c0_7 = arith.constant 0 : index
    %6 = memref.load %arg1[%c1, %c0_7] : memref<8x1xi32, #tpu.memory_space<smem>>
    %7 = arith.index_cast %6 : i32 to index
    %c0_8 = arith.constant 0 : index
    %8 = vector.load %arg4[%7, %c0_8] : memref<64x256xf32, #tpu.memory_space<vmem>>, vector<1x256xf32>
    %c1_9 = arith.constant 1 : index
    %c0_10 = arith.constant 0 : index
    %9 = vector.load %arg15[%c1_9, %c0_10] : memref<8x256xf32, #tpu.memory_space<vmem>>, vector<1x256xf32>
    tpu.vector_store %arg15[%c1_9, %c0_10], %8 {strides = array<i32>} : memref<8x256xf32, #tpu.memory_space<vmem>>, vector<1x256xf32>,
    %c2 = arith.constant 2 : index
    %c0_11 = arith.constant 0 : index
    %10 = memref.load %arg1[%c2, %c0_11] : memref<8x1xi32, #tpu.memory_space<smem>>
    %11 = arith.index_cast %10 : i32 to index
    %c0_12 = arith.constant 0 : index
    %12 = vector.load %arg4[%11, %c0_12] : memref<64x256xf32, #tpu.memory_space<vmem>>, vector<1x256xf32>
    %c2_13 = arith.constant 2 : index
    %c0_14 = arith.constant 0 : index
    %13 = vector.load %arg15[%c2_13, %c0_14] : memref<8x256xf32, #tpu.memory_space<vmem>>, vector<1x256xf32>
    tpu.vector_store %arg15[%c2_13, %c0_14], %12 {strides = array<i32>} : memref<8x256xf32, #tpu.memory_space<vmem>>, vector<1x256xf32>,
    %c3 = arith.constant 3 : index
    %c0_15 = arith.constant 0 : index
    %14 = memref.load %arg1[%c3, %c0_15] : memref<8x1xi32, #tpu.memory_space<smem>>
    %15 = arith.index_cast %14 : i32 to index
    %c0_16 = arith.constant 0 : index
    %16 = vector.load %arg4[%15, %c0_16] : memref<64x256xf32, #tpu.memory_space<vmem>>, vector<1x256xf32>
    %c3_17 = arith.constant 3 : index
    %c0_18 = arith.constant 0 : index
    %17 = vector.load %arg15[%c3_17, %c0_18] : memref<8x256xf32, #tpu.memory_space<vmem>>, vector<1x256xf32>
    tpu.vector_store %arg15[%c3_17, %c0_18], %16 {strides = array<i32>} : memref<8x256xf32, #tpu.memory_space<vmem>>, vector<1x256xf32>,
    %c4 = arith.constant 4 : index
    %c0_19 = arith.constant 0 : index
    %18 = memref.load %arg1[%c4, %c0_19] : memref<8x1xi32, #tpu.memory_space<smem>>
    %19 = arith.index_cast %18 : i32 to index
    %c0_20 = arith.constant 0 : index
    %20 = vector.load %arg4[%19, %c0_20] : memref<64x256xf32, #tpu.memory_space<vmem>>, vector<1x256xf32>
    %c4_21 = arith.constant 4 : index
    %c0_22 = arith.constant 0 : index
    %21 = vector.load %arg15[%c4_21, %c0_22] : memref<8x256xf32, #tpu.memory_space<vmem>>, vector<1x256xf32>
    tpu.vector_store %arg15[%c4_21, %c0_22], %20 {strides = array<i32>} : memref<8x256xf32, #tpu.memory_space<vmem>>, vector<1x256xf32>,
    %c5 = arith.constant 5 : index
    %c0_23 = arith.constant 0 : index
    %22 = memref.load %arg1[%c5, %c0_23] : memref<8x1xi32, #tpu.memory_space<smem>>
    %23 = arith.index_cast %22 : i32 to index
    %c0_24 = arith.constant 0 : index
    %24 = vector.load %arg4[%23, %c0_24] : memref<64x256xf32, #tpu.memory_space<vmem>>, vector<1x256xf32>
    %c5_25 = arith.constant 5 : index
    %c0_26 = arith.constant 0 : index
    %25 = vector.load %arg15[%c5_25, %c0_26] : memref<8x256xf32, #tpu.memory_space<vmem>>, vector<1x256xf32>
    tpu.vector_store %arg15[%c5_25, %c0_26], %24 {strides = array<i32>} : memref<8x256xf32, #tpu.memory_space<vmem>>, vector<1x256xf32>,
    %c6 = arith.constant 6 : index
    %c0_27 = arith.constant 0 : index
    %26 = memref.load %arg1[%c6, %c0_27] : memref<8x1xi32, #tpu.memory_space<smem>>
    %27 = arith.index_cast %26 : i32 to index
    %c0_28 = arith.constant 0 : index
    %28 = vector.load %arg4[%27, %c0_28] : memref<64x256xf32, #tpu.memory_space<vmem>>, vector<1x256xf32>
    %c6_29 = arith.constant 6 : index
    %c0_30 = arith.constant 0 : index
    %29 = vector.load %arg15[%c6_29, %c0_30] : memref<8x256xf32, #tpu.memory_space<vmem>>, vector<1x256xf32>
    tpu.vector_store %arg15[%c6_29, %c0_30], %28 {strides = array<i32>} : memref<8x256xf32, #tpu.memory_space<vmem>>, vector<1x256xf32>,
    %c7 = arith.constant 7 : index
    %c0_31 = arith.constant 0 : index
    %30 = memref.load %arg1[%c7, %c0_31] : memref<8x1xi32, #tpu.memory_space<smem>>
    %31 = arith.index_cast %30 : i32 to index
    %c0_32 = arith.constant 0 : index
    %32 = vector.load %arg4[%31, %c0_32] : memref<64x256xf32, #tpu.memory_space<vmem>>, vector<1x256xf32>
    %c7_33 = arith.constant 7 : index
    %c0_34 = arith.constant 0 : index
    %33 = vector.load %arg15[%c7_33, %c0_34] : memref<8x256xf32, #tpu.memory_space<vmem>>, vector<1x256xf32>
    tpu.vector_store %arg15[%c7_33, %c0_34], %32 {strides = array<i32>} : memref<8x256xf32, #tpu.memory_space<vmem>>, vector<1x256xf32>,
    %c0_35 = arith.constant 0 : index
    %c0_36 = arith.constant 0 : index
    %34 = vector.load %arg15[%c0_35, %c0_36] : memref<8x256xf32, #tpu.memory_space<vmem>>, vector<8x256xf32>
    %c0_37 = arith.constant 0 : index
    %c0_38 = arith.constant 0 : index
    %35 = vector.load %arg3[%c0_37, %c0_38] : memref<1x32xf32, #tpu.memory_space<vmem>>, vector<1x32xf32>
    %c0_39 = arith.constant 0 : index
    %c0_40 = arith.constant 0 : index
    %36 = vector.load %arg7[%c0_39, %c0_40] : memref<32x256xf32, #tpu.memory_space<vmem>>, vector<32x256xf32>
    %cst_41 = arith.constant dense<0.000000e+00> : vector<1x256xf32>
    %37 = tpu.matmul %35, %36, %cst_41 {dimension_numbers = #tpu.dot_dimension_numbers<[1], [0], [0], [1], [0, 0, 1, 1], [], []>} : vector<1x32xf32>, vector<32x256xf32>, vector<1x256xf32> -> vector<1x256xf32>
    %c0_42 = arith.constant 0 : index
    %c0_43 = arith.constant 0 : index
    %38 = vector.load %arg8[%c0_42, %c0_43] : memref<1x256xf32, #tpu.memory_space<vmem>>, vector<1x256xf32>
    %39 = arith.addf %37, %38 : vector<1x256xf32>
    %c0_44 = arith.constant 0 : index
    %c0_45 = arith.constant 0 : index
    %40 = vector.load %arg9[%c0_44, %c0_45] : memref<256x256xf32, #tpu.memory_space<vmem>>, vector<256x256xf32>
    %cst_46 = arith.constant dense<0.000000e+00> : vector<8x256xf32>
    %41 = tpu.matmul %34, %40, %cst_46 {dimension_numbers = #tpu.dot_dimension_numbers<[1], [0], [0], [1], [0, 0, 1, 1], [], []>} : vector<8x256xf32>, vector<256x256xf32>, vector<8x256xf32> -> vector<8x256xf32>
    %42 = vector.broadcast %39 : vector<1x256xf32> to vector<8x256xf32>
    %43 = arith.mulf %41, %42 : vector<8x256xf32>
    %c0_47 = arith.constant 0 : index
    %c0_48 = arith.constant 0 : index
    %44 = vector.load %arg10[%c0_47, %c0_48] : memref<256x512xf32, #tpu.memory_space<vmem>>, vector<256x512xf32>
    %cst_49 = arith.constant dense<0.000000e+00> : vector<8x512xf32>
    %45 = tpu.matmul %43, %44, %cst_49 {dimension_numbers = #tpu.dot_dimension_numbers<[1], [0], [0], [1], [0, 0, 1, 1], [], []>} : vector<8x256xf32>, vector<256x512xf32>, vector<8x512xf32> -> vector<8x512xf32>
    %c0_50 = arith.constant 0 : index
    %c0_51 = arith.constant 0 : index
    %46 = vector.load %arg12[%c0_50, %c0_51] : memref<1x512xf32, #tpu.memory_space<vmem>>, vector<1x512xf32>
    %47 = vector.broadcast %46 : vector<1x512xf32> to vector<8x512xf32>
    %48 = arith.addf %45, %47 : vector<8x512xf32>
    %c0_52 = arith.constant 0 : index
    %c0_53 = arith.constant 0 : index
    %49 = vector.load %arg19[%c0_52, %c0_53] : memref<8x512xf32, #tpu.memory_space<vmem>>, vector<8x512xf32>
    tpu.vector_store %arg19[%c0_52, %c0_53], %48 {strides = array<i32>} : memref<8x512xf32, #tpu.memory_space<vmem>>, vector<8x512xf32>,
    %cst_54 = arith.constant 0.000000e+00 : f32
    %50 = vector.broadcast %cst_54 : f32 to vector<1x128xf32>
    %cst_55 = arith.constant 0.000000e+00 : f32
    %51 = vector.broadcast %cst_55 : f32 to vector<1x128xf32>
    %c0_i32 = arith.constant 0 : i32
    %52 = arith.index_cast %c0_i32 : i32 to index
    %c0_56 = arith.constant 0 : index
    %53 = vector.load %arg19[%52, %c0_56] : memref<8x512xf32, #tpu.memory_space<vmem>>, vector<1x512xf32>
    %c0_57 = arith.constant 0 : index
    %c0_58 = arith.constant 0 : index
    %54 = vector.load %arg11[%c0_57, %c0_58] : memref<128x512xf32, #tpu.memory_space<vmem>>, vector<128x512xf32>
    %cst_59 = arith.constant dense<0.000000e+00> : vector<1x512xf32>
    %55 = tpu.matmul %50, %54, %cst_59 {dimension_numbers = #tpu.dot_dimension_numbers<[1], [0], [0], [1], [0, 0, 1, 1], [], []>} : vector<1x128xf32>, vector<128x512xf32>, vector<1x512xf32> -> vector<1x512xf32>
    %56 = arith.addf %53, %55 : vector<1x512xf32>
    %57 = vector.extract_strided_slice %56 {offsets = [0, 0], sizes = [1, 128], strides = [1, 1]} : vector<1x512xf32> to vector<1x128xf32>
    %58 = arith.negf %57 : vector<1x128xf32>
    %59 = math.exp %58 : vector<1x128xf32>
    %cst_60 = arith.constant 1.000000e+00 : f32
    %60 = vector.broadcast %cst_60 : f32 to vector<1x128xf32>
    %61 = arith.addf %60, %59 : vector<1x128xf32>
    %62 = arith.divf %60, %61 : vector<1x128xf32>
    %63 = vector.extract_strided_slice %56 {offsets = [0, 128], sizes = [1, 128], strides = [1, 1]} : vector<1x512xf32> to vector<1x128xf32>
    %64 = arith.negf %63 : vector<1x128xf32>
    %65 = math.exp %64 : vector<1x128xf32>
    %cst_61 = arith.constant 1.000000e+00 : f32
    %66 = vector.broadcast %cst_61 : f32 to vector<1x128xf32>
    %67 = arith.addf %66, %65 : vector<1x128xf32>
    %68 = arith.divf %66, %67 : vector<1x128xf32>
    %69 = vector.extract_strided_slice %56 {offsets = [0, 256], sizes = [1, 128], strides = [1, 1]} : vector<1x512xf32> to vector<1x128xf32>
    %70 = math.tanh %69 : vector<1x128xf32>
    %71 = vector.extract_strided_slice %56 {offsets = [0, 384], sizes = [1, 128], strides = [1, 1]} : vector<1x512xf32> to vector<1x128xf32>
    %72 = arith.negf %71 : vector<1x128xf32>
    %73 = math.exp %72 : vector<1x128xf32>
    %cst_62 = arith.constant 1.000000e+00 : f32
    %74 = vector.broadcast %cst_62 : f32 to vector<1x128xf32>
    %75 = arith.addf %74, %73 : vector<1x128xf32>
    %76 = arith.divf %74, %75 : vector<1x128xf32>
    %77 = arith.mulf %68, %51 : vector<1x128xf32>
    %78 = arith.mulf %62, %70 : vector<1x128xf32>
    %79 = arith.addf %77, %78 : vector<1x128xf32>
    %80 = math.tanh %79 : vector<1x128xf32>
    %81 = arith.mulf %76, %80 : vector<1x128xf32>
    %82 = arith.index_cast %c0_i32 : i32 to index
    %c0_63 = arith.constant 0 : index
    %83 = vector.load %arg20[%82, %c0_63] : memref<8x128xf32, #tpu.memory_space<vmem>>, vector<1x128xf32>
    tpu.vector_store %arg20[%82, %c0_63], %81 {strides = array<i32>} : memref<8x128xf32, #tpu.memory_space<vmem>>, vector<1x128xf32>,
    %c1_i32 = arith.constant 1 : i32
    %84 = arith.index_cast %c1_i32 : i32 to index
    %c0_64 = arith.constant 0 : index
    %85 = vector.load %arg19[%84, %c0_64] : memref<8x512xf32, #tpu.memory_space<vmem>>, vector<1x512xf32>
    %c0_65 = arith.constant 0 : index
    %c0_66 = arith.constant 0 : index
    %86 = vector.load %arg11[%c0_65, %c0_66] : memref<128x512xf32, #tpu.memory_space<vmem>>, vector<128x512xf32>
    %cst_67 = arith.constant dense<0.000000e+00> : vector<1x512xf32>
    %87 = tpu.matmul %81, %86, %cst_67 {dimension_numbers = #tpu.dot_dimension_numbers<[1], [0], [0], [1], [0, 0, 1, 1], [], []>} : vector<1x128xf32>, vector<128x512xf32>, vector<1x512xf32> -> vector<1x512xf32>
    %88 = arith.addf %85, %87 : vector<1x512xf32>
    %89 = vector.extract_strided_slice %88 {offsets = [0, 0], sizes = [1, 128], strides = [1, 1]} : vector<1x512xf32> to vector<1x128xf32>
    %90 = arith.negf %89 : vector<1x128xf32>
    %91 = math.exp %90 : vector<1x128xf32>
    %cst_68 = arith.constant 1.000000e+00 : f32
    %92 = vector.broadcast %cst_68 : f32 to vector<1x128xf32>
    %93 = arith.addf %92, %91 : vector<1x128xf32>
    %94 = arith.divf %92, %93 : vector<1x128xf32>
    %95 = vector.extract_strided_slice %88 {offsets = [0, 128], sizes = [1, 128], strides = [1, 1]} : vector<1x512xf32> to vector<1x128xf32>
    %96 = arith.negf %95 : vector<1x128xf32>
    %97 = math.exp %96 : vector<1x128xf32>
    %cst_69 = arith.constant 1.000000e+00 : f32
    %98 = vector.broadcast %cst_69 : f32 to vector<1x128xf32>
    %99 = arith.addf %98, %97 : vector<1x128xf32>
    %100 = arith.divf %98, %99 : vector<1x128xf32>
    %101 = vector.extract_strided_slice %88 {offsets = [0, 256], sizes = [1, 128], strides = [1, 1]} : vector<1x512xf32> to vector<1x128xf32>
    %102 = math.tanh %101 : vector<1x128xf32>
    %103 = vector.extract_strided_slice %88 {offsets = [0, 384], sizes = [1, 128], strides = [1, 1]} : vector<1x512xf32> to vector<1x128xf32>
    %104 = arith.negf %103 : vector<1x128xf32>
    %105 = math.exp %104 : vector<1x128xf32>
    %cst_70 = arith.constant 1.000000e+00 : f32
    %106 = vector.broadcast %cst_70 : f32 to vector<1x128xf32>
    %107 = arith.addf %106, %105 : vector<1x128xf32>
    %108 = arith.divf %106, %107 : vector<1x128xf32>
    %109 = arith.mulf %100, %79 : vector<1x128xf32>
    %110 = arith.mulf %94, %102 : vector<1x128xf32>
    %111 = arith.addf %109, %110 : vector<1x128xf32>
    %112 = math.tanh %111 : vector<1x128xf32>
    %113 = arith.mulf %108, %112 : vector<1x128xf32>
    %114 = arith.index_cast %c1_i32 : i32 to index
    %c0_71 = arith.constant 0 : index
    %115 = vector.load %arg20[%114, %c0_71] : memref<8x128xf32, #tpu.memory_space<vmem>>, vector<1x128xf32>
    tpu.vector_store %arg20[%114, %c0_71], %113 {strides = array<i32>} : memref<8x128xf32, #tpu.memory_space<vmem>>, vector<1x128xf32>,
    %c2_i32 = arith.constant 2 : i32
    %116 = arith.index_cast %c2_i32 : i32 to index
    %c0_72 = arith.constant 0 : index
    %117 = vector.load %arg19[%116, %c0_72] : memref<8x512xf32, #tpu.memory_space<vmem>>, vector<1x512xf32>
    %c0_73 = arith.constant 0 : index
    %c0_74 = arith.constant 0 : index
    %118 = vector.load %arg11[%c0_73, %c0_74] : memref<128x512xf32, #tpu.memory_space<vmem>>, vector<128x512xf32>
    %cst_75 = arith.constant dense<0.000000e+00> : vector<1x512xf32>
    %119 = tpu.matmul %113, %118, %cst_75 {dimension_numbers = #tpu.dot_dimension_numbers<[1], [0], [0], [1], [0, 0, 1, 1], [], []>} : vector<1x128xf32>, vector<128x512xf32>, vector<1x512xf32> -> vector<1x512xf32>
    %120 = arith.addf %117, %119 : vector<1x512xf32>
    %121 = vector.extract_strided_slice %120 {offsets = [0, 0], sizes = [1, 128], strides = [1, 1]} : vector<1x512xf32> to vector<1x128xf32>
    %122 = arith.negf %121 : vector<1x128xf32>
    %123 = math.exp %122 : vector<1x128xf32>
    %cst_76 = arith.constant 1.000000e+00 : f32
    %124 = vector.broadcast %cst_76 : f32 to vector<1x128xf32>
    %125 = arith.addf %124, %123 : vector<1x128xf32>
    %126 = arith.divf %124, %125 : vector<1x128xf32>
    %127 = vector.extract_strided_slice %120 {offsets = [0, 128], sizes = [1, 128], strides = [1, 1]} : vector<1x512xf32> to vector<1x128xf32>
    %128 = arith.negf %127 : vector<1x128xf32>
    %129 = math.exp %128 : vector<1x128xf32>
    %cst_77 = arith.constant 1.000000e+00 : f32
    %130 = vector.broadcast %cst_77 : f32 to vector<1x128xf32>
    %131 = arith.addf %130, %129 : vector<1x128xf32>
    %132 = arith.divf %130, %131 : vector<1x128xf32>
    %133 = vector.extract_strided_slice %120 {offsets = [0, 256], sizes = [1, 128], strides = [1, 1]} : vector<1x512xf32> to vector<1x128xf32>
    %134 = math.tanh %133 : vector<1x128xf32>
    %135 = vector.extract_strided_slice %120 {offsets = [0, 384], sizes = [1, 128], strides = [1, 1]} : vector<1x512xf32> to vector<1x128xf32>
    %136 = arith.negf %135 : vector<1x128xf32>
    %137 = math.exp %136 : vector<1x128xf32>
    %cst_78 = arith.constant 1.000000e+00 : f32
    %138 = vector.broadcast %cst_78 : f32 to vector<1x128xf32>
    %139 = arith.addf %138, %137 : vector<1x128xf32>
    %140 = arith.divf %138, %139 : vector<1x128xf32>
    %141 = arith.mulf %132, %111 : vector<1x128xf32>
    %142 = arith.mulf %126, %134 : vector<1x128xf32>
    %143 = arith.addf %141, %142 : vector<1x128xf32>
    %144 = math.tanh %143 : vector<1x128xf32>
    %145 = arith.mulf %140, %144 : vector<1x128xf32>
    %146 = arith.index_cast %c2_i32 : i32 to index
    %c0_79 = arith.constant 0 : index
    %147 = vector.load %arg20[%146, %c0_79] : memref<8x128xf32, #tpu.memory_space<vmem>>, vector<1x128xf32>
    tpu.vector_store %arg20[%146, %c0_79], %145 {strides = array<i32>} : memref<8x128xf32, #tpu.memory_space<vmem>>, vector<1x128xf32>,
    %c3_i32 = arith.constant 3 : i32
    %148 = arith.index_cast %c3_i32 : i32 to index
    %c0_80 = arith.constant 0 : index
    %149 = vector.load %arg19[%148, %c0_80] : memref<8x512xf32, #tpu.memory_space<vmem>>, vector<1x512xf32>
    %c0_81 = arith.constant 0 : index
    %c0_82 = arith.constant 0 : index
    %150 = vector.load %arg11[%c0_81, %c0_82] : memref<128x512xf32, #tpu.memory_space<vmem>>, vector<128x512xf32>
    %cst_83 = arith.constant dense<0.000000e+00> : vector<1x512xf32>
    %151 = tpu.matmul %145, %150, %cst_83 {dimension_numbers = #tpu.dot_dimension_numbers<[1], [0], [0], [1], [0, 0, 1, 1], [], []>} : vector<1x128xf32>, vector<128x512xf32>, vector<1x512xf32> -> vector<1x512xf32>
    %152 = arith.addf %149, %151 : vector<1x512xf32>
    %153 = vector.extract_strided_slice %152 {offsets = [0, 0], sizes = [1, 128], strides = [1, 1]} : vector<1x512xf32> to vector<1x128xf32>
    %154 = arith.negf %153 : vector<1x128xf32>
    %155 = math.exp %154 : vector<1x128xf32>
    %cst_84 = arith.constant 1.000000e+00 : f32
    %156 = vector.broadcast %cst_84 : f32 to vector<1x128xf32>
    %157 = arith.addf %156, %155 : vector<1x128xf32>
    %158 = arith.divf %156, %157 : vector<1x128xf32>
    %159 = vector.extract_strided_slice %152 {offsets = [0, 128], sizes = [1, 128], strides = [1, 1]} : vector<1x512xf32> to vector<1x128xf32>
    %160 = arith.negf %159 : vector<1x128xf32>
    %161 = math.exp %160 : vector<1x128xf32>
    %cst_85 = arith.constant 1.000000e+00 : f32
    %162 = vector.broadcast %cst_85 : f32 to vector<1x128xf32>
    %163 = arith.addf %162, %161 : vector<1x128xf32>
    %164 = arith.divf %162, %163 : vector<1x128xf32>
    %165 = vector.extract_strided_slice %152 {offsets = [0, 256], sizes = [1, 128], strides = [1, 1]} : vector<1x512xf32> to vector<1x128xf32>
    %166 = math.tanh %165 : vector<1x128xf32>
    %167 = vector.extract_strided_slice %152 {offsets = [0, 384], sizes = [1, 128], strides = [1, 1]} : vector<1x512xf32> to vector<1x128xf32>
    %168 = arith.negf %167 : vector<1x128xf32>
    %169 = math.exp %168 : vector<1x128xf32>
    %cst_86 = arith.constant 1.000000e+00 : f32
    %170 = vector.broadcast %cst_86 : f32 to vector<1x128xf32>
    %171 = arith.addf %170, %169 : vector<1x128xf32>
    %172 = arith.divf %170, %171 : vector<1x128xf32>
    %173 = arith.mulf %164, %143 : vector<1x128xf32>
    %174 = arith.mulf %158, %166 : vector<1x128xf32>
    %175 = arith.addf %173, %174 : vector<1x128xf32>
    %176 = math.tanh %175 : vector<1x128xf32>
    %177 = arith.mulf %172, %176 : vector<1x128xf32>
    %178 = arith.index_cast %c3_i32 : i32 to index
    %c0_87 = arith.constant 0 : index
    %179 = vector.load %arg20[%178, %c0_87] : memref<8x128xf32, #tpu.memory_space<vmem>>, vector<1x128xf32>
    tpu.vector_store %arg20[%178, %c0_87], %177 {strides = array<i32>} : memref<8x128xf32, #tpu.memory_space<vmem>>, vector<1x128xf32>,
    %c4_i32 = arith.constant 4 : i32
    %180 = arith.index_cast %c4_i32 : i32 to index
    %c0_88 = arith.constant 0 : index
    %181 = vector.load %arg19[%180, %c0_88] : memref<8x512xf32, #tpu.memory_space<vmem>>, vector<1x512xf32>
    %c0_89 = arith.constant 0 : index
    %c0_90 = arith.constant 0 : index
    %182 = vector.load %arg11[%c0_89, %c0_90] : memref<128x512xf32, #tpu.memory_space<vmem>>, vector<128x512xf32>
    %cst_91 = arith.constant dense<0.000000e+00> : vector<1x512xf32>
    %183 = tpu.matmul %177, %182, %cst_91 {dimension_numbers = #tpu.dot_dimension_numbers<[1], [0], [0], [1], [0, 0, 1, 1], [], []>} : vector<1x128xf32>, vector<128x512xf32>, vector<1x512xf32> -> vector<1x512xf32>
    %184 = arith.addf %181, %183 : vector<1x512xf32>
    %185 = vector.extract_strided_slice %184 {offsets = [0, 0], sizes = [1, 128], strides = [1, 1]} : vector<1x512xf32> to vector<1x128xf32>
    %186 = arith.negf %185 : vector<1x128xf32>
    %187 = math.exp %186 : vector<1x128xf32>
    %cst_92 = arith.constant 1.000000e+00 : f32
    %188 = vector.broadcast %cst_92 : f32 to vector<1x128xf32>
    %189 = arith.addf %188, %187 : vector<1x128xf32>
    %190 = arith.divf %188, %189 : vector<1x128xf32>
    %191 = vector.extract_strided_slice %184 {offsets = [0, 128], sizes = [1, 128], strides = [1, 1]} : vector<1x512xf32> to vector<1x128xf32>
    %192 = arith.negf %191 : vector<1x128xf32>
    %193 = math.exp %192 : vector<1x128xf32>
    %cst_93 = arith.constant 1.000000e+00 : f32
    %194 = vector.broadcast %cst_93 : f32 to vector<1x128xf32>
    %195 = arith.addf %194, %193 : vector<1x128xf32>
    %196 = arith.divf %194, %195 : vector<1x128xf32>
    %197 = vector.extract_strided_slice %184 {offsets = [0, 256], sizes = [1, 128], strides = [1, 1]} : vector<1x512xf32> to vector<1x128xf32>
    %198 = math.tanh %197 : vector<1x128xf32>
    %199 = vector.extract_strided_slice %184 {offsets = [0, 384], sizes = [1, 128], strides = [1, 1]} : vector<1x512xf32> to vector<1x128xf32>
    %200 = arith.negf %199 : vector<1x128xf32>
    %201 = math.exp %200 : vector<1x128xf32>
    %cst_94 = arith.constant 1.000000e+00 : f32
    %202 = vector.broadcast %cst_94 : f32 to vector<1x128xf32>
    %203 = arith.addf %202, %201 : vector<1x128xf32>
    %204 = arith.divf %202, %203 : vector<1x128xf32>
    %205 = arith.mulf %196, %175 : vector<1x128xf32>
    %206 = arith.mulf %190, %198 : vector<1x128xf32>
    %207 = arith.addf %205, %206 : vector<1x128xf32>
    %208 = math.tanh %207 : vector<1x128xf32>
    %209 = arith.mulf %204, %208 : vector<1x128xf32>
    %210 = arith.index_cast %c4_i32 : i32 to index
    %c0_95 = arith.constant 0 : index
    %211 = vector.load %arg20[%210, %c0_95] : memref<8x128xf32, #tpu.memory_space<vmem>>, vector<1x128xf32>
    tpu.vector_store %arg20[%210, %c0_95], %209 {strides = array<i32>} : memref<8x128xf32, #tpu.memory_space<vmem>>, vector<1x128xf32>,
    %c5_i32 = arith.constant 5 : i32
    %212 = arith.index_cast %c5_i32 : i32 to index
    %c0_96 = arith.constant 0 : index
    %213 = vector.load %arg19[%212, %c0_96] : memref<8x512xf32, #tpu.memory_space<vmem>>, vector<1x512xf32>
    %c0_97 = arith.constant 0 : index
    %c0_98 = arith.constant 0 : index
    %214 = vector.load %arg11[%c0_97, %c0_98] : memref<128x512xf32, #tpu.memory_space<vmem>>, vector<128x512xf32>
    %cst_99 = arith.constant dense<0.000000e+00> : vector<1x512xf32>
    %215 = tpu.matmul %209, %214, %cst_99 {dimension_numbers = #tpu.dot_dimension_numbers<[1], [0], [0], [1], [0, 0, 1, 1], [], []>} : vector<1x128xf32>, vector<128x512xf32>, vector<1x512xf32> -> vector<1x512xf32>
    %216 = arith.addf %213, %215 : vector<1x512xf32>
    %217 = vector.extract_strided_slice %216 {offsets = [0, 0], sizes = [1, 128], strides = [1, 1]} : vector<1x512xf32> to vector<1x128xf32>
    %218 = arith.negf %217 : vector<1x128xf32>
    %219 = math.exp %218 : vector<1x128xf32>
    %cst_100 = arith.constant 1.000000e+00 : f32
    %220 = vector.broadcast %cst_100 : f32 to vector<1x128xf32>
    %221 = arith.addf %220, %219 : vector<1x128xf32>
    %222 = arith.divf %220, %221 : vector<1x128xf32>
    %223 = vector.extract_strided_slice %216 {offsets = [0, 128], sizes = [1, 128], strides = [1, 1]} : vector<1x512xf32> to vector<1x128xf32>
    %224 = arith.negf %223 : vector<1x128xf32>
    %225 = math.exp %224 : vector<1x128xf32>
    %cst_101 = arith.constant 1.000000e+00 : f32
    %226 = vector.broadcast %cst_101 : f32 to vector<1x128xf32>
    %227 = arith.addf %226, %225 : vector<1x128xf32>
    %228 = arith.divf %226, %227 : vector<1x128xf32>
    %229 = vector.extract_strided_slice %216 {offsets = [0, 256], sizes = [1, 128], strides = [1, 1]} : vector<1x512xf32> to vector<1x128xf32>
    %230 = math.tanh %229 : vector<1x128xf32>
    %231 = vector.extract_strided_slice %216 {offsets = [0, 384], sizes = [1, 128], strides = [1, 1]} : vector<1x512xf32> to vector<1x128xf32>
    %232 = arith.negf %231 : vector<1x128xf32>
    %233 = math.exp %232 : vector<1x128xf32>
    %cst_102 = arith.constant 1.000000e+00 : f32
    %234 = vector.broadcast %cst_102 : f32 to vector<1x128xf32>
    %235 = arith.addf %234, %233 : vector<1x128xf32>
    %236 = arith.divf %234, %235 : vector<1x128xf32>
    %237 = arith.mulf %228, %207 : vector<1x128xf32>
    %238 = arith.mulf %222, %230 : vector<1x128xf32>
    %239 = arith.addf %237, %238 : vector<1x128xf32>
    %240 = math.tanh %239 : vector<1x128xf32>
    %241 = arith.mulf %236, %240 : vector<1x128xf32>
    %242 = arith.index_cast %c5_i32 : i32 to index
    %c0_103 = arith.constant 0 : index
    %243 = vector.load %arg20[%242, %c0_103] : memref<8x128xf32, #tpu.memory_space<vmem>>, vector<1x128xf32>
    tpu.vector_store %arg20[%242, %c0_103], %241 {strides = array<i32>} : memref<8x128xf32, #tpu.memory_space<vmem>>, vector<1x128xf32>,
    %c6_i32 = arith.constant 6 : i32
    %244 = arith.index_cast %c6_i32 : i32 to index
    %c0_104 = arith.constant 0 : index
    %245 = vector.load %arg19[%244, %c0_104] : memref<8x512xf32, #tpu.memory_space<vmem>>, vector<1x512xf32>
    %c0_105 = arith.constant 0 : index
    %c0_106 = arith.constant 0 : index
    %246 = vector.load %arg11[%c0_105, %c0_106] : memref<128x512xf32, #tpu.memory_space<vmem>>, vector<128x512xf32>
    %cst_107 = arith.constant dense<0.000000e+00> : vector<1x512xf32>
    %247 = tpu.matmul %241, %246, %cst_107 {dimension_numbers = #tpu.dot_dimension_numbers<[1], [0], [0], [1], [0, 0, 1, 1], [], []>} : vector<1x128xf32>, vector<128x512xf32>, vector<1x512xf32> -> vector<1x512xf32>
    %248 = arith.addf %245, %247 : vector<1x512xf32>
    %249 = vector.extract_strided_slice %248 {offsets = [0, 0], sizes = [1, 128], strides = [1, 1]} : vector<1x512xf32> to vector<1x128xf32>
    %250 = arith.negf %249 : vector<1x128xf32>
    %251 = math.exp %250 : vector<1x128xf32>
    %cst_108 = arith.constant 1.000000e+00 : f32
    %252 = vector.broadcast %cst_108 : f32 to vector<1x128xf32>
    %253 = arith.addf %252, %251 : vector<1x128xf32>
    %254 = arith.divf %252, %253 : vector<1x128xf32>
    %255 = vector.extract_strided_slice %248 {offsets = [0, 128], sizes = [1, 128], strides = [1, 1]} : vector<1x512xf32> to vector<1x128xf32>
    %256 = arith.negf %255 : vector<1x128xf32>
    %257 = math.exp %256 : vector<1x128xf32>
    %cst_109 = arith.constant 1.000000e+00 : f32
    %258 = vector.broadcast %cst_109 : f32 to vector<1x128xf32>
    %259 = arith.addf %258, %257 : vector<1x128xf32>
    %260 = arith.divf %258, %259 : vector<1x128xf32>
    %261 = vector.extract_strided_slice %248 {offsets = [0, 256], sizes = [1, 128], strides = [1, 1]} : vector<1x512xf32> to vector<1x128xf32>
    %262 = math.tanh %261 : vector<1x128xf32>
    %263 = vector.extract_strided_slice %248 {offsets = [0, 384], sizes = [1, 128], strides = [1, 1]} : vector<1x512xf32> to vector<1x128xf32>
    %264 = arith.negf %263 : vector<1x128xf32>
    %265 = math.exp %264 : vector<1x128xf32>
    %cst_110 = arith.constant 1.000000e+00 : f32
    %266 = vector.broadcast %cst_110 : f32 to vector<1x128xf32>
    %267 = arith.addf %266, %265 : vector<1x128xf32>
    %268 = arith.divf %266, %267 : vector<1x128xf32>
    %269 = arith.mulf %260, %239 : vector<1x128xf32>
    %270 = arith.mulf %254, %262 : vector<1x128xf32>
    %271 = arith.addf %269, %270 : vector<1x128xf32>
    %272 = math.tanh %271 : vector<1x128xf32>
    %273 = arith.mulf %268, %272 : vector<1x128xf32>
    %274 = arith.index_cast %c6_i32 : i32 to index
    %c0_111 = arith.constant 0 : index
    %275 = vector.load %arg20[%274, %c0_111] : memref<8x128xf32, #tpu.memory_space<vmem>>, vector<1x128xf32>
    tpu.vector_store %arg20[%274, %c0_111], %273 {strides = array<i32>} : memref<8x128xf32, #tpu.memory_space<vmem>>, vector<1x128xf32>,
    %c7_i32 = arith.constant 7 : i32
    %276 = arith.index_cast %c7_i32 : i32 to index
    %c0_112 = arith.constant 0 : index
    %277 = vector.load %arg19[%276, %c0_112] : memref<8x512xf32, #tpu.memory_space<vmem>>, vector<1x512xf32>
    %c0_113 = arith.constant 0 : index
    %c0_114 = arith.constant 0 : index
    %278 = vector.load %arg11[%c0_113, %c0_114] : memref<128x512xf32, #tpu.memory_space<vmem>>, vector<128x512xf32>
    %cst_115 = arith.constant dense<0.000000e+00> : vector<1x512xf32>
    %279 = tpu.matmul %273, %278, %cst_115 {dimension_numbers = #tpu.dot_dimension_numbers<[1], [0], [0], [1], [0, 0, 1, 1], [], []>} : vector<1x128xf32>, vector<128x512xf32>, vector<1x512xf32> -> vector<1x512xf32>
    %280 = arith.addf %277, %279 : vector<1x512xf32>
    %281 = vector.extract_strided_slice %280 {offsets = [0, 0], sizes = [1, 128], strides = [1, 1]} : vector<1x512xf32> to vector<1x128xf32>
    %282 = arith.negf %281 : vector<1x128xf32>
    %283 = math.exp %282 : vector<1x128xf32>
    %cst_116 = arith.constant 1.000000e+00 : f32
    %284 = vector.broadcast %cst_116 : f32 to vector<1x128xf32>
    %285 = arith.addf %284, %283 : vector<1x128xf32>
    %286 = arith.divf %284, %285 : vector<1x128xf32>
    %287 = vector.extract_strided_slice %280 {offsets = [0, 128], sizes = [1, 128], strides = [1, 1]} : vector<1x512xf32> to vector<1x128xf32>
    %288 = arith.negf %287 : vector<1x128xf32>
    %289 = math.exp %288 : vector<1x128xf32>
    %cst_117 = arith.constant 1.000000e+00 : f32
    %290 = vector.broadcast %cst_117 : f32 to vector<1x128xf32>
    %291 = arith.addf %290, %289 : vector<1x128xf32>
    %292 = arith.divf %290, %291 : vector<1x128xf32>
    %293 = vector.extract_strided_slice %280 {offsets = [0, 256], sizes = [1, 128], strides = [1, 1]} : vector<1x512xf32> to vector<1x128xf32>
    %294 = math.tanh %293 : vector<1x128xf32>
    %295 = vector.extract_strided_slice %280 {offsets = [0, 384], sizes = [1, 128], strides = [1, 1]} : vector<1x512xf32> to vector<1x128xf32>
    %296 = arith.negf %295 : vector<1x128xf32>
    %297 = math.exp %296 : vector<1x128xf32>
    %cst_118 = arith.constant 1.000000e+00 : f32
    %298 = vector.broadcast %cst_118 : f32 to vector<1x128xf32>
    %299 = arith.addf %298, %297 : vector<1x128xf32>
    %300 = arith.divf %298, %299 : vector<1x128xf32>
    %301 = arith.mulf %292, %271 : vector<1x128xf32>
    %302 = arith.mulf %286, %294 : vector<1x128xf32>
    %303 = arith.addf %301, %302 : vector<1x128xf32>
    %304 = math.tanh %303 : vector<1x128xf32>
    %305 = arith.mulf %300, %304 : vector<1x128xf32>
    %306 = arith.index_cast %c7_i32 : i32 to index
    %c0_119 = arith.constant 0 : index
    %307 = vector.load %arg20[%306, %c0_119] : memref<8x128xf32, #tpu.memory_space<vmem>>, vector<1x128xf32>
    tpu.vector_store %arg20[%306, %c0_119], %305 {strides = array<i32>} : memref<8x128xf32, #tpu.memory_space<vmem>>, vector<1x128xf32>,
    %c8_i32 = arith.constant 8 : i32
    %c0_120 = arith.constant 0 : index
    %c0_121 = arith.constant 0 : index
    %308 = vector.load %arg17[%c0_120, %c0_121] : memref<1x128xf32, #tpu.memory_space<vmem>>, vector<1x128xf32>
    tpu.vector_store %arg17[%c0_120, %c0_121], %305 {strides = array<i32>} : memref<1x128xf32, #tpu.memory_space<vmem>>, vector<1x128xf32>,
    %c0_122 = arith.constant 0 : index
    %c0_123 = arith.constant 0 : index
    %309 = vector.load %arg18[%c0_122, %c0_123] : memref<1x128xf32, #tpu.memory_space<vmem>>, vector<1x128xf32>
    tpu.vector_store %arg18[%c0_122, %c0_123], %303 {strides = array<i32>} : memref<1x128xf32, #tpu.memory_space<vmem>>, vector<1x128xf32>,
    %c0_124 = arith.constant 0 : index
    %c0_125 = arith.constant 0 : index
    %310 = vector.load %arg20[%c0_124, %c0_125] : memref<8x128xf32, #tpu.memory_space<vmem>>, vector<8x128xf32>
    %c0_126 = arith.constant 0 : index
    %c0_127 = arith.constant 0 : index
    %311 = vector.load %arg13[%c0_126, %c0_127] : memref<128x128xf32, #tpu.memory_space<vmem>>, vector<128x128xf32>
    %cst_128 = arith.constant dense<0.000000e+00> : vector<8x128xf32>
    %312 = tpu.matmul %310, %311, %cst_128 {dimension_numbers = #tpu.dot_dimension_numbers<[1], [0], [0], [1], [0, 0, 1, 1], [], []>} : vector<8x128xf32>, vector<128x128xf32>, vector<8x128xf32> -> vector<8x128xf32>
    %c0_129 = arith.constant 0 : index
    %c0_130 = arith.constant 0 : index
    %313 = vector.load %arg14[%c0_129, %c0_130] : memref<1x128xf32, #tpu.memory_space<vmem>>, vector<1x128xf32>
    %314 = vector.broadcast %313 : vector<1x128xf32> to vector<8x128xf32>
    %315 = arith.addf %312, %314 : vector<8x128xf32>
    %c0_131 = arith.constant 0 : index
    %c0_132 = arith.constant 0 : index
    %316 = vector.load %arg16[%c0_131, %c0_132] : memref<8x128xf32, #tpu.memory_space<vmem>>, vector<8x128xf32>
    tpu.vector_store %arg16[%c0_131, %c0_132], %315 {strides = array<i32>} : memref<8x128xf32, #tpu.memory_space<vmem>>, vector<8x128xf32>,
    return
  }
  func.func @transform_0(%arg0: i32, %arg1: memref<8x1xi32, #tpu.memory_space<smem>>) -> (i32, i32) {
    %c0_i32 = arith.constant 0 : i32
    %c0_i32_0 = arith.constant 0 : i32
    %c0_i32_1 = arith.constant 0 : i32
    return %c0_i32, %c0_i32_0 : i32, i32
  }
  func.func @transform_1(%arg0: i32, %arg1: memref<8x1xi32, #tpu.memory_space<smem>>) -> (i32, i32) {
    %c0_i32 = arith.constant 0 : i32
    %c0_i32_0 = arith.constant 0 : i32
    %c0_i32_1 = arith.constant 0 : i32
    return %c0_i32, %c0_i32_0 : i32, i32
  }
  func.func @transform_2(%arg0: i32, %arg1: memref<8x1xi32, #tpu.memory_space<smem>>) -> (i32, i32) {
    %c0_i32 = arith.constant 0 : i32
    %c0_i32_0 = arith.constant 0 : i32
    %c0_i32_1 = arith.constant 0 : i32
    return %c0_i32, %c0_i32_0 : i32, i32
  }
  func.func @transform_3(%arg0: i32, %arg1: memref<8x1xi32, #tpu.memory_space<smem>>) -> (i32, i32) {
    %c0_i32 = arith.constant 0 : i32
    %c0_i32_0 = arith.constant 0 : i32
    %c0_i32_1 = arith.constant 0 : i32
    return %c0_i32, %c0_i32_0 : i32, i32
  }
  func.func @transform_4(%arg0: i32, %arg1: memref<8x1xi32, #tpu.memory_space<smem>>) -> (i32, i32) {
    %c0_i32 = arith.constant 0 : i32
    %c0_i32_0 = arith.constant 0 : i32
    %c0_i32_1 = arith.constant 0 : i32
    return %c0_i32, %c0_i32_0 : i32, i32
  }
  func.func @transform_5(%arg0: i32, %arg1: memref<8x1xi32, #tpu.memory_space<smem>>) -> (i32, i32) {
    %c0_i32 = arith.constant 0 : i32
    %c0_i32_0 = arith.constant 0 : i32
    %c0_i32_1 = arith.constant 0 : i32
    return %c0_i32, %c0_i32_0 : i32, i32
  }
  func.func @transform_6(%arg0: i32, %arg1: memref<8x1xi32, #tpu.memory_space<smem>>) -> (i32, i32) {
    %c0_i32 = arith.constant 0 : i32
    %c0_i32_0 = arith.constant 0 : i32
    %c0_i32_1 = arith.constant 0 : i32
    return %c0_i32, %c0_i32_0 : i32, i32
  }
  func.func @transform_7(%arg0: i32, %arg1: memref<8x1xi32, #tpu.memory_space<smem>>) -> (i32, i32) {
    %c0_i32 = arith.constant 0 : i32
    %c0_i32_0 = arith.constant 0 : i32
    %c0_i32_1 = arith.constant 0 : i32
    return %c0_i32, %c0_i32_0 : i32, i32
  }
  func.func @transform_8(%arg0: i32, %arg1: memref<8x1xi32, #tpu.memory_space<smem>>) -> (i32, i32) {
    %c0_i32 = arith.constant 0 : i32
    %c0_i32_0 = arith.constant 0 : i32
    %c0_i32_1 = arith.constant 0 : i32
    return %c0_i32, %c0_i32_0 : i32, i32
  }
  func.func @transform_9(%arg0: i32, %arg1: memref<8x1xi32, #tpu.memory_space<smem>>) -> (i32, i32) {
    %c0_i32 = arith.constant 0 : i32
    %c0_i32_0 = arith.constant 0 : i32
    %c0_i32_1 = arith.constant 0 : i32
    return %c0_i32, %c0_i32_0 : i32, i32
  }
  func.func @transform_10(%arg0: i32, %arg1: memref<8x1xi32, #tpu.memory_space<smem>>) -> (i32, i32) {
    %c0_i32 = arith.constant 0 : i32
    %c0_i32_0 = arith.constant 0 : i32
    %c0_i32_1 = arith.constant 0 : i32
    return %c0_i32, %c0_i32_0 : i32, i32
  }
  func.func @transform_11(%arg0: i32, %arg1: memref<8x1xi32, #tpu.memory_space<smem>>) -> (i32, i32) {
    %c0_i32 = arith.constant 0 : i32
    %c0_i32_0 = arith.constant 0 : i32
    %c0_i32_1 = arith.constant 0 : i32
    return %c0_i32, %c0_i32_0 : i32, i32
  }
  func.func @transform_12(%arg0: i32, %arg1: memref<8x1xi32, #tpu.memory_space<smem>>) -> (i32, i32) {
    %c0_i32 = arith.constant 0 : i32
    %c0_i32_0 = arith.constant 0 : i32
    %c0_i32_1 = arith.constant 0 : i32
    return %c0_i32, %c0_i32_0 : i32, i32
  }
  func.func @transform_13(%arg0: i32, %arg1: memref<8x1xi32, #tpu.memory_space<smem>>) -> (i32, i32) {
    %c0_i32 = arith.constant 0 : i32
    %c0_i32_0 = arith.constant 0 : i32
    %c0_i32_1 = arith.constant 0 : i32
    return %c0_i32, %c0_i32_0 : i32, i32
  }
  func.func @transform_14(%arg0: i32, %arg1: memref<8x1xi32, #tpu.memory_space<smem>>) -> (i32, i32) {
    %c0_i32 = arith.constant 0 : i32
    %c0_i32_0 = arith.constant 0 : i32
    %c0_i32_1 = arith.constant 0 : i32
    return %c0_i32, %c0_i32_0 : i32, i32
  }
  func.func @transform_15(%arg0: i32, %arg1: memref<8x1xi32, #tpu.memory_space<smem>>) -> (i32, i32) {
    %c0_i32 = arith.constant 0 : i32
    %c0_i32_0 = arith.constant 0 : i32
    %c0_i32_1 = arith.constant 0 : i32
    return %c0_i32, %c0_i32_0 : i32, i32
  }
  func.func @transform_16(%arg0: i32, %arg1: memref<8x1xi32, #tpu.memory_space<smem>>) -> (i32, i32) {
    %c0_i32 = arith.constant 0 : i32
    %c0_i32_0 = arith.constant 0 : i32
    %c0_i32_1 = arith.constant 0 : i32
    return %c0_i32, %c0_i32_0 : i32, i32
  }
}

</mosaic_0001>

<llo_original>
// kernel: forward.1
$region0: #{forward.1}
  #allocation0 [shape = 'u32[]', space=smem, size = 0x4, offset = 0x4, fixed_abs, tag = 'smem constant byte address 0x4 - core index']
  #allocation1 [shape = 'u32[72,128]{1,0:T(1,128)}', space=vmem, size = 0x9000, scoped, tag = 'internal scratch']
  #allocation2 [shape = 'f32[8,512]{1,0:T(8,128)}', space=vmem, size = 0x4000, scoped, tag = 'scratch operand']
  #allocation3 [shape = 'f32[8,128]{1,0:T(8,128)}', space=vmem, size = 0x1000, scoped, tag = 'scratch operand']
  #allocation4 [shape = 's32[1]{0}', space=sflag, size = 0x4, scoped, tag = 'scoped memory for forward.1']
  #allocation5 [shape = 'u8[4096]{0}', space=smem, size = 0x1000, scoped, tag = 'prefetched SMEM operand 0']
  %s0 = inlined_call_operand.vmem [shape: s32[8,1], index: 0, kind: input, shape index: {}]
  %s1 = inlined_call_operand.vmem [shape: f32[1,64], index: 1, kind: input, shape index: {}]
  %s2 = inlined_call_operand.vmem [shape: f32[1,32], index: 2, kind: input, shape index: {}]
  %s3 = inlined_call_operand.hbm [shape: f32[64,256], index: 3, kind: input, shape index: {}]
  %s4 = inlined_call_operand.hbm [shape: f32[64,256], index: 4, kind: input, shape index: {}]
  %s5 = inlined_call_operand.vmem [shape: f32[1,256], index: 5, kind: input, shape index: {}]
  %s6 = inlined_call_operand.hbm [shape: f32[32,256], index: 6, kind: input, shape index: {}]
  %s7 = inlined_call_operand.vmem [shape: f32[1,256], index: 7, kind: input, shape index: {}]
  %s8 = inlined_call_operand.hbm [shape: f32[256,256], index: 8, kind: input, shape index: {}]
  %s9 = inlined_call_operand.hbm [shape: f32[256,512], index: 9, kind: input, shape index: {}]
  %s10 = inlined_call_operand.hbm [shape: f32[128,512], index: 10, kind: input, shape index: {}]
  %s11 = inlined_call_operand.vmem [shape: f32[1,512], index: 11, kind: input, shape index: {}]
  %s12 = inlined_call_operand.hbm [shape: f32[128,128], index: 12, kind: input, shape index: {}]
  %s13 = inlined_call_operand.hbm [shape: f32[1,128], index: 13, kind: input, shape index: {}]
  %s14 = inlined_call_operand.vmem [shape: f32[8,256], index: 14, kind: output, shape index: {0}]
  %s15 = inlined_call_operand.hbm [shape: f32[8,128], index: 15, kind: output, shape index: {1}]
  %s16 = inlined_call_operand.hbm [shape: f32[1,128], index: 16, kind: output, shape index: {2}]
  %s17 = inlined_call_operand.hbm [shape: f32[1,128], index: 17, kind: output, shape index: {3}]
  %18 = xla_tuple %s14, %s15, %s16, %s17
  %s19 = sld [smem:[#allocation0]]
  $region118: #{forward.1} parent=0
    _
  %s21 = ssub.s32 1, %s19
  %s22 = scalar_select 0, %s21, %s19
  %s24 = sshll.u32 %s0, 4
  %s25 = int_to_ptr.vmem [resolvable:$true] %s24
  %27 = dma.vmem_to_smem %s25, 128, [#allocation5], [#allocation4]
  %29 = dma.done [#allocation4], 128
  %30 = sfence
  $region1: #{forward.1} parent=0
    #allocation6 [shape = 'u8[65536]{0}', space=vmem, size = 0x10000, scoped, tag = 'input window, operand 3, single buffered']
    #allocation7 [shape = 's32[1]{0}', space=sflag, size = 0x4, scoped, tag = 'scoped memory for forward.1']
    #allocation8 [shape = 's32[1]{0}', space=sflag, size = 0x4, scoped, tag = 'scoped memory for forward.1']
    #allocation9 [shape = 'u8[65536]{0}', space=vmem, size = 0x10000, scoped, tag = 'input window, operand 4, single buffered']
    #allocation10 [shape = 's32[1]{0}', space=sflag, size = 0x4, scoped, tag = 'scoped memory for forward.1']
    #allocation11 [shape = 'u8[32768]{0}', space=vmem, size = 0x8000, scoped, tag = 'input window, operand 6, single buffered']
    #allocation12 [shape = 'u8[262144]{0}', space=vmem, size = 0x40000, scoped, tag = 'input window, operand 8, single buffered']
    #allocation13 [shape = 's32[1]{0}', space=sflag, size = 0x4, scoped, tag = 'scoped memory for forward.1']
    #allocation14 [shape = 'u8[524288]{0}', space=vmem, size = 0x80000, scoped, tag = 'input window, operand 9, single buffered']
    #allocation15 [shape = 'u8[262144]{0}', space=vmem, size = 0x40000, scoped, tag = 'input window, operand 10, single buffered']
    #allocation16 [shape = 's32[1]{0}', space=sflag, size = 0x4, scoped, tag = 'scoped memory for forward.1']
    #allocation17 [shape = 'u8[65536]{0}', space=vmem, size = 0x10000, scoped, tag = 'input window, operand 12, single buffered']
    #allocation18 [shape = 'u8[512]{0}', space=vmem, size = 0x400, scoped, tag = 'input window, operand 13, single buffered']
    #allocation19 [shape = 's32[1]{0}', space=sflag, size = 0x4, scoped, tag = 'scoped memory for forward.1']
    #allocation20 [shape = 'u8[4096]{0}', space=vmem, size = 0x1000, scoped, tag = 'output window, operand 1, single buffered']
    #allocation21 [shape = 'u8[512]{0}', space=vmem, size = 0x400, scoped, tag = 'output window, operand 2, single buffered']
    #allocation22 [shape = 's32[1]{0}', space=sflag, size = 0x4, scoped, tag = 'scoped memory for forward.1']
    #allocation23 [shape = 'u8[512]{0}', space=vmem, size = 0x400, scoped, tag = 'output window, operand 3, single buffered']
    %31 = vsyncpa [#allocation7], 0
    %32 = vsyncpa [#allocation10], 0
    %33 = vsyncpa [#allocation13], 0
    %34 = vsyncpa [#allocation16], 0
    %35 = vsyncpa [#allocation19], 0
    %36 = vsyncpa [#allocation8], 0
    %37 = vsyncpa [#allocation22], 0
    // Predicated region
    $region2: #{forward.1} parent=1 // pred_check
      _
    $region3: #{forward.1} parent=1 // pred_check_branch
      %39 = sbr.rel (0) target = $region5
    $region4: #{forward.1} parent=1 // pred_region
      _
    $region5: #{forward.1} parent=1 // pred_fallthru
      _
    // Predicated region
    $region6: #{forward.1} parent=1 // pred_check
      _
    $region7: #{forward.1} parent=1 // pred_check_branch
      %41 = sbr.rel (0) target = $region9
    $region8: #{forward.1} parent=1 // pred_region
      _
    $region9: #{forward.1} parent=1 // pred_fallthru
      _
    // Predicated region
    $region10: #{forward.1} parent=1 // pred_check
      _
    $region11: #{forward.1} parent=1 // pred_check_branch
      %43 = sbr.rel (0) target = $region13
    $region12: #{forward.1} parent=1 // pred_region
      %45 = vsyncadd [#allocation7], 0
      %s46 = sshll.u32 %s3, 4
      %s47 = int_to_ptr.hbm [resolvable:$true] %s46
      %s48 = sshll.u32 [#allocation6], 4
      %s49 = int_to_ptr.vmem [resolvable:$true] %s48
      %54 = dma.hbm_to_vmem [thread:$0]  %s47, 2048, %s49, [#allocation7], 256, 256, 16
    $region13: #{forward.1} parent=1 // pred_fallthru
      _
    // Predicated region
    $region14: #{forward.1} parent=1 // pred_check
      _
    $region15: #{forward.1} parent=1 // pred_check_branch
      %56 = sbr.rel (0) target = $region17
    $region16: #{forward.1} parent=1 // pred_region
      %58 = vsyncadd [#allocation10], 0
      %s59 = sshll.u32 %s4, 4
      %s60 = int_to_ptr.hbm [resolvable:$true] %s59
      %s61 = sshll.u32 [#allocation9], 4
      %s62 = int_to_ptr.vmem [resolvable:$true] %s61
      %67 = dma.hbm_to_vmem [thread:$0]  %s60, 2048, %s62, [#allocation10], 256, 256, 16
    $region17: #{forward.1} parent=1 // pred_fallthru
      _
    // Predicated region
    $region18: #{forward.1} parent=1 // pred_check
      _
    $region19: #{forward.1} parent=1 // pred_check_branch
      %69 = sbr.rel (0) target = $region21
    $region20: #{forward.1} parent=1 // pred_region
      _
    $region21: #{forward.1} parent=1 // pred_fallthru
      _
    // Predicated region
    $region22: #{forward.1} parent=1 // pred_check
      _
    $region23: #{forward.1} parent=1 // pred_check_branch
      %71 = sbr.rel (0) target = $region25
    $region24: #{forward.1} parent=1 // pred_region
      %73 = vsyncadd [#allocation10], 0
      %s74 = sshll.u32 %s6, 4
      %s75 = int_to_ptr.hbm [resolvable:$true] %s74
      %s76 = sshll.u32 [#allocation11], 4
      %s77 = int_to_ptr.vmem [resolvable:$true] %s76
      %82 = dma.hbm_to_vmem [thread:$0]  %s75, 1024, %s77, [#allocation10], 256, 256, 16
    $region25: #{forward.1} parent=1 // pred_fallthru
      _
    // Predicated region
    $region26: #{forward.1} parent=1 // pred_check
      _
    $region27: #{forward.1} parent=1 // pred_check_branch
      %84 = sbr.rel (0) target = $region29
    $region28: #{forward.1} parent=1 // pred_region
      _
    $region29: #{forward.1} parent=1 // pred_fallthru
      _
    // Predicated region
    $region30: #{forward.1} parent=1 // pred_check
      _
    $region31: #{forward.1} parent=1 // pred_check_branch
      %86 = sbr.rel (0) target = $region33
    $region32: #{forward.1} parent=1 // pred_region
      %88 = vsyncadd [#allocation13], 0
      %s89 = sshll.u32 %s8, 4
      %s90 = int_to_ptr.hbm [resolvable:$true] %s89
      %s91 = sshll.u32 [#allocation12], 4
      %s92 = int_to_ptr.vmem [resolvable:$true] %s91
      %97 = dma.hbm_to_vmem [thread:$0]  %s90, 8192, %s92, [#allocation13], 256, 256, 16
    $region33: #{forward.1} parent=1 // pred_fallthru
      _
    // Predicated region
    $region34: #{forward.1} parent=1 // pred_check
      _
    $region35: #{forward.1} parent=1 // pred_check_branch
      %99 = sbr.rel (0) target = $region37
    $region36: #{forward.1} parent=1 // pred_region
      %101 = vsyncadd [#allocation13], 0
      %s102 = sshll.u32 %s9, 4
      %s103 = int_to_ptr.hbm [resolvable:$true] %s102
      %s104 = sshll.u32 [#allocation14], 4
      %s105 = int_to_ptr.vmem [resolvable:$true] %s104
      %110 = dma.hbm_to_vmem [thread:$0]  %s103, 16384, %s105, [#allocation13], 512, 512, 32
    $region37: #{forward.1} parent=1 // pred_fallthru
      _
    // Predicated region
    $region38: #{forward.1} parent=1 // pred_check
      _
    $region39: #{forward.1} parent=1 // pred_check_branch
      %112 = sbr.rel (0) target = $region41
    $region40: #{forward.1} parent=1 // pred_region
      %114 = vsyncadd [#allocation16], 0
      %s115 = sshll.u32 %s10, 4
      %s116 = int_to_ptr.hbm [resolvable:$true] %s115
      %s117 = sshll.u32 [#allocation15], 4
      %s118 = int_to_ptr.vmem [resolvable:$true] %s117
      %123 = dma.hbm_to_vmem [thread:$0]  %s116, 8192, %s118, [#allocation16], 512, 512, 32
    $region41: #{forward.1} parent=1 // pred_fallthru
      _
    // Predicated region
    $region42: #{forward.1} parent=1 // pred_check
      _
    $region43: #{forward.1} parent=1 // pred_check_branch
      %125 = sbr.rel (0) target = $region45
    $region44: #{forward.1} parent=1 // pred_region
      _
    $region45: #{forward.1} parent=1 // pred_fallthru
      _
    // Predicated region
    $region46: #{forward.1} parent=1 // pred_check
      _
    $region47: #{forward.1} parent=1 // pred_check_branch
      %127 = sbr.rel (0) target = $region49
    $region48: #{forward.1} parent=1 // pred_region
      %129 = vsyncadd [#allocation16], 0
      %s130 = sshll.u32 %s12, 4
      %s131 = int_to_ptr.hbm [resolvable:$true] %s130
      %s132 = sshll.u32 [#allocation17], 4
      %s133 = int_to_ptr.vmem [resolvable:$true] %s132
      %138 = dma.hbm_to_vmem [thread:$0]  %s131, 2048, %s133, [#allocation16], 128, 128, 8
    $region49: #{forward.1} parent=1 // pred_fallthru
      _
    // Predicated region
    $region50: #{forward.1} parent=1 // pred_check
      _
    $region51: #{forward.1} parent=1 // pred_check_branch
      %140 = sbr.rel (0) target = $region53
    $region52: #{forward.1} parent=1 // pred_region
      %142 = vsyncadd [#allocation19], 0
      %s144 = sshll.u32 %s13, 4
      %s145 = int_to_ptr.hbm [resolvable:$true] %s144
      %s146 = sshll.u32 [#allocation18], 4
      %s147 = int_to_ptr.vmem [resolvable:$true] %s146
      %149 = dma.hbm_to_vmem [thread:$0]  %s145, 16, %s147, [#allocation19]
    $region53: #{forward.1} parent=1 // pred_fallthru
      _
    // Predicated region
    $region54: #{forward.1} parent=1 // pred_check
      _
    $region55: #{forward.1} parent=1 // pred_check_branch
      %151 = sbr.rel (0) target = $region57
    $region56: #{forward.1} parent=1 // pred_region
      %153 = dma.done [#allocation7], 2048
    $region57: #{forward.1} parent=1 // pred_fallthru
      _
    // Predicated region
    $region58: #{forward.1} parent=1 // pred_check
      _
    $region59: #{forward.1} parent=1 // pred_check_branch
      %155 = sbr.rel (0) target = $region61
    $region60: #{forward.1} parent=1 // pred_region
      %157 = dma.done [#allocation10], 2048
    $region61: #{forward.1} parent=1 // pred_fallthru
      _
    // Predicated region
    $region62: #{forward.1} parent=1 // pred_check
      _
    $region63: #{forward.1} parent=1 // pred_check_branch
      %159 = sbr.rel (0) target = $region65
    $region64: #{forward.1} parent=1 // pred_region
      %161 = dma.done [#allocation10], 1024
    $region65: #{forward.1} parent=1 // pred_fallthru
      _
    // Predicated region
    $region66: #{forward.1} parent=1 // pred_check
      _
    $region67: #{forward.1} parent=1 // pred_check_branch
      %163 = sbr.rel (0) target = $region69
    $region68: #{forward.1} parent=1 // pred_region
      %165 = dma.done [#allocation13], 8192
    $region69: #{forward.1} parent=1 // pred_fallthru
      _
    // Predicated region
    $region70: #{forward.1} parent=1 // pred_check
      _
    $region71: #{forward.1} parent=1 // pred_check_branch
      %167 = sbr.rel (0) target = $region73
    $region72: #{forward.1} parent=1 // pred_region
      %169 = dma.done [#allocation13], 16384
    $region73: #{forward.1} parent=1 // pred_fallthru
      _
    // Predicated region
    $region74: #{forward.1} parent=1 // pred_check
      _
    $region75: #{forward.1} parent=1 // pred_check_branch
      %171 = sbr.rel (0) target = $region77
    $region76: #{forward.1} parent=1 // pred_region
      %173 = dma.done [#allocation16], 8192
    $region77: #{forward.1} parent=1 // pred_fallthru
      _
    // Predicated region
    $region78: #{forward.1} parent=1 // pred_check
      _
    $region79: #{forward.1} parent=1 // pred_check_branch
      %175 = sbr.rel (0) target = $region81
    $region80: #{forward.1} parent=1 // pred_region
      %177 = dma.done [#allocation16], 2048
    $region81: #{forward.1} parent=1 // pred_fallthru
      _
    // Predicated region
    $region82: #{forward.1} parent=1 // pred_check
      _
    $region83: #{forward.1} parent=1 // pred_check_branch
      %179 = sbr.rel (0) target = $region85
    $region84: #{forward.1} parent=1 // pred_region
      %181 = dma.done [#allocation19], 16
    $region85: #{forward.1} parent=1 // pred_fallthru
      _
    %v182 = vld [vmem:[%s1] sm:$0x1]
    %v183 = vld [vmem:[#allocation9] sm:$0xff]
    %v184 = vld [vmem:[#allocation9 + $0x8] sm:$0xff]
    %v185 = vld [vmem:[#allocation9 + $0x10] sm:$0xff]
    %v186 = vld [vmem:[#allocation9 + $0x18] sm:$0xff]
    %v187 = vld [vmem:[#allocation9 + $0x20] sm:$0xff]
    %v188 = vld [vmem:[#allocation9 + $0x28] sm:$0xff]
    %v189 = vld [vmem:[#allocation9 + $0x30] sm:$0xff]
    %v190 = vld [vmem:[#allocation9 + $0x38] sm:$0xff]
    %v191 = vld [vmem:[#allocation9 + $0x40] sm:$0xff]
    %v192 = vld [vmem:[#allocation9 + $0x48] sm:$0xff]
    %v193 = vld [vmem:[#allocation9 + $0x50] sm:$0xff]
    %v194 = vld [vmem:[#allocation9 + $0x58] sm:$0xff]
    %v195 = vld [vmem:[#allocation9 + $0x60] sm:$0xff]
    %v196 = vld [vmem:[#allocation9 + $0x68] sm:$0xff]
    %v197 = vld [vmem:[#allocation9 + $0x70] sm:$0xff]
    %v198 = vld [vmem:[#allocation9 + $0x78] sm:$0xff]
    %v199 = vld [vmem:[%s5] sm:$0x3]
    %v201 = vperm.slane %v199, 0
    %v202 = vperm.slane %v199, 1
    %vm205 = vcmask 523264
    %v207 = vsel %vm205, %v182, 0
    %209 = vmatpush.msra.mxu0 0.0
    %210 = vmatpush.msra.mxu0 0.0
    %211 = vmatpush.msra.mxu0 0.0
    %212 = vmatpush.msra.mxu0 0.0
    %213 = vmatpush.msra.mxu0 0.0
    %214 = vmatpush.msra.mxu0 0.0
    %215 = vmatpush.msra.mxu0 0.0
    %216 = vmatpush.msra.mxu0 0.0
    %217 = vmatpush.msra.mxu0 %v197
    %218 = vmatpush.msra.mxu0 %v195
    %219 = vmatpush.msra.mxu0 %v193
    %220 = vmatpush.msra.mxu0 %v191
    %221 = vmatpush.msra.mxu0 %v189
    %222 = vmatpush.msra.mxu0 %v187
    %223 = vmatpush.msra.mxu0 %v185
    %224 = vmatpush.msra.mxu0 %v183
    %225 = vmatmul.f32.gmra.mxu0 %v207
    %v226 = vpop.f32.mrf.mxu0
    %v227 = vadd.f32 %v201, %v226
    %228 = vdwg.mxu0
    %229 = vmatpush.msra.mxu0 0.0
    %230 = vmatpush.msra.mxu0 0.0
    %231 = vmatpush.msra.mxu0 0.0
    %232 = vmatpush.msra.mxu0 0.0
    %233 = vmatpush.msra.mxu0 0.0
    %234 = vmatpush.msra.mxu0 0.0
    %235 = vmatpush.msra.mxu0 0.0
    %236 = vmatpush.msra.mxu0 0.0
    %237 = vmatpush.msra.mxu0 %v198
    %238 = vmatpush.msra.mxu0 %v196
    %239 = vmatpush.msra.mxu0 %v194
    %240 = vmatpush.msra.mxu0 %v192
    %241 = vmatpush.msra.mxu0 %v190
    %242 = vmatpush.msra.mxu0 %v188
    %243 = vmatpush.msra.mxu0 %v186
    %244 = vmatpush.msra.mxu0 %v184
    %245 = vmatmul.f32.gmra.mxu0 %v207
    %v246 = vpop.f32.mrf.mxu0
    %v247 = vadd.f32 %v202, %v246
    %248 = vdwg.mxu0
    %v251 = vrot.slane %v247, 7
    %vm252 = vcmask 1040384
    %v253 = vsel %vm252, %v227, %v251
    %v255 = vlaneseq
    %vm256 = vcmp.ge.s32.totalorder %v255, 0
    %vm257 = vcmp.lt.s32.totalorder %v255, 256
    %vm258 = vmand %vm256, %vm257
    %259 = vst.msk [vmem:[%s14] ss:$8 sm:$0x3] %vm258, %v253
    %260 = vst.msk [vmem:[%s14] ss:$8 sm:$0x0] %vm258, %v253
    %s261 = sld [smem:[#allocation5 + $0x80]]
    %s262 = sshra.s32 %s261, 3
    %s263 = sand.u32 %s261, 7
    %s264 = sshra.s32 %s261, 3
    %s265 = sand.u32 %s261, 7
    %s266 = smul.u32 %s262, 2
    %s267 = smul.u32 %s266, 8
    %s268 = sadd.s32 %s267, %s265
    %s269 = scalar_lea.vmem [#allocation6], %s268
    %v270 = vld [vmem:[%s269] ss:$8 sm:$0x3]
    %s271 = scalar_lea.vmem %s14, 1
    %272 = vst.msk [vmem:[%s271] ss:$8 sm:$0x3] %vm258, %v270
    %273 = vst.msk [vmem:[%s271] ss:$8 sm:$0x0] %vm258, %v270
    %s274 = sld [smem:[#allocation5 + $0x100]]
    %s275 = sshra.s32 %s274, 3
    %s276 = sand.u32 %s274, 7
    %s277 = sshra.s32 %s274, 3
    %s278 = sand.u32 %s274, 7
    %s279 = smul.u32 %s275, 2
    %s280 = smul.u32 %s279, 8
    %s281 = sadd.s32 %s280, %s278
    %s282 = scalar_lea.vmem [#allocation6], %s281
    %v283 = vld [vmem:[%s282] ss:$8 sm:$0x3]
    %s284 = scalar_lea.vmem %s14, 2
    %285 = vst.msk [vmem:[%s284] ss:$8 sm:$0x3] %vm258, %v283
    %286 = vst.msk [vmem:[%s284] ss:$8 sm:$0x0] %vm258, %v283
    %s287 = sld [smem:[#allocation5 + $0x180]]
    %s288 = sshra.s32 %s287, 3
    %s289 = sand.u32 %s287, 7
    %s290 = sshra.s32 %s287, 3
    %s291 = sand.u32 %s287, 7
    %s292 = smul.u32 %s288, 2
    %s293 = smul.u32 %s292, 8
    %s294 = sadd.s32 %s293, %s291
    %s295 = scalar_lea.vmem [#allocation6], %s294
    %v296 = vld [vmem:[%s295] ss:$8 sm:$0x3]
    %s297 = scalar_lea.vmem %s14, 3
    %298 = vst.msk [vmem:[%s297] ss:$8 sm:$0x3] %vm258, %v296
    %299 = vst.msk [vmem:[%s297] ss:$8 sm:$0x0] %vm258, %v296
    %s300 = sld [smem:[#allocation5 + $0x200]]
    %s301 = sshra.s32 %s300, 3
    %s302 = sand.u32 %s300, 7
    %s303 = sshra.s32 %s300, 3
    %s304 = sand.u32 %s300, 7
    %s305 = smul.u32 %s301, 2
    %s306 = smul.u32 %s305, 8
    %s307 = sadd.s32 %s306, %s304
    %s308 = scalar_lea.vmem [#allocation6], %s307
    %v309 = vld [vmem:[%s308] ss:$8 sm:$0x3]
    %s310 = scalar_lea.vmem %s14, 4
    %311 = vst.msk [vmem:[%s310] ss:$8 sm:$0x3] %vm258, %v309
    %312 = vst.msk [vmem:[%s310] ss:$8 sm:$0x0] %vm258, %v309
    %s313 = sld [smem:[#allocation5 + $0x280]]
    %s314 = sshra.s32 %s313, 3
    %s315 = sand.u32 %s313, 7
    %s316 = sshra.s32 %s313, 3
    %s317 = sand.u32 %s313, 7
    %s318 = smul.u32 %s314, 2
    %s319 = smul.u32 %s318, 8
    %s320 = sadd.s32 %s319, %s317
    %s321 = scalar_lea.vmem [#allocation6], %s320
    %v322 = vld [vmem:[%s321] ss:$8 sm:$0x3]
    %s323 = scalar_lea.vmem %s14, 5
    %324 = vst.msk [vmem:[%s323] ss:$8 sm:$0x3] %vm258, %v322
    %325 = vst.msk [vmem:[%s323] ss:$8 sm:$0x0] %vm258, %v322
    %s326 = sld [smem:[#allocation5 + $0x300]]
    %s327 = sshra.s32 %s326, 3
    %s328 = sand.u32 %s326, 7
    %s329 = sshra.s32 %s326, 3
    %s330 = sand.u32 %s326, 7
    %s331 = smul.u32 %s327, 2
    %s332 = smul.u32 %s331, 8
    %s333 = sadd.s32 %s332, %s330
    %s334 = scalar_lea.vmem [#allocation6], %s333
    %v335 = vld [vmem:[%s334] ss:$8 sm:$0x3]
    %s336 = scalar_lea.vmem %s14, 6
    %337 = vst.msk [vmem:[%s336] ss:$8 sm:$0x3] %vm258, %v335
    %338 = vst.msk [vmem:[%s336] ss:$8 sm:$0x0] %vm258, %v335
    %s339 = sld [smem:[#allocation5 + $0x380]]
    %s340 = sshra.s32 %s339, 3
    %s341 = sand.u32 %s339, 7
    %s342 = sshra.s32 %s339, 3
    %s343 = sand.u32 %s339, 7
    %s344 = smul.u32 %s340, 2
    %s345 = smul.u32 %s344, 8
    %s346 = sadd.s32 %s345, %s343
    %s347 = scalar_lea.vmem [#allocation6], %s346
    %v348 = vld [vmem:[%s347] ss:$8 sm:$0x3]
    %s349 = scalar_lea.vmem %s14, 7
    %350 = vst.msk [vmem:[%s349] ss:$8 sm:$0x3] %vm258, %v348
    %351 = vst.msk [vmem:[%s349] ss:$8 sm:$0x0] %vm258, %v348
    %v352 = vld [vmem:[%s14] sm:$0xff]
    %v353 = vld [vmem:[%s14 + $0x8] sm:$0xff]
    %v354 = vld [vmem:[%s2] sm:$0x1]
    %v355 = vld [vmem:[#allocation11] sm:$0xff]
    %v356 = vld [vmem:[#allocation11 + $0x8] sm:$0xff]
    %v357 = vld [vmem:[#allocation11 + $0x10] sm:$0xff]
    %v358 = vld [vmem:[#allocation11 + $0x18] sm:$0xff]
    %v359 = vld [vmem:[#allocation11 + $0x20] sm:$0xff]
    %v360 = vld [vmem:[#allocation11 + $0x28] sm:$0xff]
    %v361 = vld [vmem:[#allocation11 + $0x30] sm:$0xff]
    %v362 = vld [vmem:[#allocation11 + $0x38] sm:$0xff]
    %v363 = vld [vmem:[%s7] sm:$0x3]
    %v365 = vperm.slane %v363, 0
    %v366 = vperm.slane %v363, 1
    %vm369 = vcmask 261120
    %v371 = vsel %vm369, %v354, 0
    %373 = vmatpush.msra.mxu0 0.0
    %374 = vmatpush.msra.mxu0 0.0
    %375 = vmatpush.msra.mxu0 0.0
    %376 = vmatpush.msra.mxu0 0.0
    %377 = vmatpush.msra.mxu0 0.0
    %378 = vmatpush.msra.mxu0 0.0
    %379 = vmatpush.msra.mxu0 0.0
    %380 = vmatpush.msra.mxu0 0.0
    %381 = vmatpush.msra.mxu0 0.0
    %382 = vmatpush.msra.mxu0 0.0
    %383 = vmatpush.msra.mxu0 0.0
    %384 = vmatpush.msra.mxu0 0.0
    %385 = vmatpush.msra.mxu0 %v361
    %386 = vmatpush.msra.mxu0 %v359
    %387 = vmatpush.msra.mxu0 %v357
    %388 = vmatpush.msra.mxu0 %v355
    %389 = vmatmul.f32.gmra.mxu0 %v371
    %v390 = vpop.f32.mrf.mxu0
    %v391 = vadd.f32 %v365, %v390
    %392 = vdwg.mxu0
    %393 = vmatpush.msra.mxu0 0.0
    %394 = vmatpush.msra.mxu0 0.0
    %395 = vmatpush.msra.mxu0 0.0
    %396 = vmatpush.msra.mxu0 0.0
    %397 = vmatpush.msra.mxu0 0.0
    %398 = vmatpush.msra.mxu0 0.0
    %399 = vmatpush.msra.mxu0 0.0
    %400 = vmatpush.msra.mxu0 0.0
    %401 = vmatpush.msra.mxu0 0.0
    %402 = vmatpush.msra.mxu0 0.0
    %403 = vmatpush.msra.mxu0 0.0
    %404 = vmatpush.msra.mxu0 0.0
    %405 = vmatpush.msra.mxu0 %v362
    %406 = vmatpush.msra.mxu0 %v360
    %407 = vmatpush.msra.mxu0 %v358
    %408 = vmatpush.msra.mxu0 %v356
    %409 = vmatmul.f32.gmra.mxu0 %v371
    %v410 = vpop.f32.mrf.mxu0
    %v411 = vadd.f32 %v366, %v410
    %412 = vdwg.mxu0
    %v413 = vld [vmem:[#allocation12] sm:$0xff]
    %v414 = vld [vmem:[#allocation12 + $0x8] sm:$0xff]
    %v415 = vld [vmem:[#allocation12 + $0x10] sm:$0xff]
    %v416 = vld [vmem:[#allocation12 + $0x18] sm:$0xff]
    %v417 = vld [vmem:[#allocation12 + $0x20] sm:$0xff]
    %v418 = vld [vmem:[#allocation12 + $0x28] sm:$0xff]
    %v419 = vld [vmem:[#allocation12 + $0x30] sm:$0xff]
    %v420 = vld [vmem:[#allocation12 + $0x38] sm:$0xff]
    %v421 = vld [vmem:[#allocation12 + $0x40] sm:$0xff]
    %v422 = vld [vmem:[#allocation12 + $0x48] sm:$0xff]
    %v423 = vld [vmem:[#allocation12 + $0x50] sm:$0xff]
    %v424 = vld [vmem:[#allocation12 + $0x58] sm:$0xff]
    %v425 = vld [vmem:[#allocation12 + $0x60] sm:$0xff]
    %v426 = vld [vmem:[#allocation12 + $0x68] sm:$0xff]
    %v427 = vld [vmem:[#allocation12 + $0x70] sm:$0xff]
    %v428 = vld [vmem:[#allocation12 + $0x78] sm:$0xff]
    %v429 = vld [vmem:[#allocation12 + $0x80] sm:$0xff]
    %v430 = vld [vmem:[#allocation12 + $0x88] sm:$0xff]
    %v431 = vld [vmem:[#allocation12 + $0x90] sm:$0xff]
    %v432 = vld [vmem:[#allocation12 + $0x98] sm:$0xff]
    %v433 = vld [vmem:[#allocation12 + $0xa0] sm:$0xff]
    %v434 = vld [vmem:[#allocation12 + $0xa8] sm:$0xff]
    %v435 = vld [vmem:[#allocation12 + $0xb0] sm:$0xff]
    %v436 = vld [vmem:[#allocation12 + $0xb8] sm:$0xff]
    %v437 = vld [vmem:[#allocation12 + $0xc0] sm:$0xff]
    %v438 = vld [vmem:[#allocation12 + $0xc8] sm:$0xff]
    %v439 = vld [vmem:[#allocation12 + $0xd0] sm:$0xff]
    %v440 = vld [vmem:[#allocation12 + $0xd8] sm:$0xff]
    %v441 = vld [vmem:[#allocation12 + $0xe0] sm:$0xff]
    %v442 = vld [vmem:[#allocation12 + $0xe8] sm:$0xff]
    %v443 = vld [vmem:[#allocation12 + $0xf0] sm:$0xff]
    %v444 = vld [vmem:[#allocation12 + $0xf8] sm:$0xff]
    %v445 = vld [vmem:[#allocation12 + $0x100] sm:$0xff]
    %v446 = vld [vmem:[#allocation12 + $0x108] sm:$0xff]
    %v447 = vld [vmem:[#allocation12 + $0x110] sm:$0xff]
    %v448 = vld [vmem:[#allocation12 + $0x118] sm:$0xff]
    %v449 = vld [vmem:[#allocation12 + $0x120] sm:$0xff]
    %v450 = vld [vmem:[#allocation12 + $0x128] sm:$0xff]
    %v451 = vld [vmem:[#allocation12 + $0x130] sm:$0xff]
    %v452 = vld [vmem:[#allocation12 + $0x138] sm:$0xff]
    %v453 = vld [vmem:[#allocation12 + $0x140] sm:$0xff]
    %v454 = vld [vmem:[#allocation12 + $0x148] sm:$0xff]
    %v455 = vld [vmem:[#allocation12 + $0x150] sm:$0xff]
    %v456 = vld [vmem:[#allocation12 + $0x158] sm:$0xff]
    %v457 = vld [vmem:[#allocation12 + $0x160] sm:$0xff]
    %v458 = vld [vmem:[#allocation12 + $0x168] sm:$0xff]
    %v459 = vld [vmem:[#allocation12 + $0x170] sm:$0xff]
    %v460 = vld [vmem:[#allocation12 + $0x178] sm:$0xff]
    %v461 = vld [vmem:[#allocation12 + $0x180] sm:$0xff]
    %v462 = vld [vmem:[#allocation12 + $0x188] sm:$0xff]
    %v463 = vld [vmem:[#allocation12 + $0x190] sm:$0xff]
    %v464 = vld [vmem:[#allocation12 + $0x198] sm:$0xff]
    %v465 = vld [vmem:[#allocation12 + $0x1a0] sm:$0xff]
    %v466 = vld [vmem:[#allocation12 + $0x1a8] sm:$0xff]
    %v467 = vld [vmem:[#allocation12 + $0x1b0] sm:$0xff]
    %v468 = vld [vmem:[#allocation12 + $0x1b8] sm:$0xff]
    %v469 = vld [vmem:[#allocation12 + $0x1c0] sm:$0xff]
    %v470 = vld [vmem:[#allocation12 + $0x1c8] sm:$0xff]
    %v471 = vld [vmem:[#allocation12 + $0x1d0] sm:$0xff]
    %v472 = vld [vmem:[#allocation12 + $0x1d8] sm:$0xff]
    %v473 = vld [vmem:[#allocation12 + $0x1e0] sm:$0xff]
    %v474 = vld [vmem:[#allocation12 + $0x1e8] sm:$0xff]
    %v475 = vld [vmem:[#allocation12 + $0x1f0] sm:$0xff]
    %v476 = vld [vmem:[#allocation12 + $0x1f8] sm:$0xff]
    %477 = vmatpush.msra.mxu0 %v443
    %478 = vmatpush.msra.mxu0 %v441
    %479 = vmatpush.msra.mxu0 %v439
    %480 = vmatpush.msra.mxu0 %v437
    %481 = vmatpush.msra.mxu0 %v435
    %482 = vmatpush.msra.mxu0 %v433
    %483 = vmatpush.msra.mxu0 %v431
    %484 = vmatpush.msra.mxu0 %v429
    %485 = vmatpush.msra.mxu0 %v427
    %486 = vmatpush.msra.mxu0 %v425
    %487 = vmatpush.msra.mxu0 %v423
    %488 = vmatpush.msra.mxu0 %v421
    %489 = vmatpush.msra.mxu0 %v419
    %490 = vmatpush.msra.mxu0 %v417
    %491 = vmatpush.msra.mxu0 %v415
    %492 = vmatpush.msra.mxu0 %v413
    %493 = vmatmul.f32.gmra.mxu0 %v352
    %v494 = vpop.f32.mrf.mxu0
    %v495 = vadd.f32 0.0, %v494
    %496 = vdwg.mxu0
    %497 = vmatpush.msra.mxu0 %v475
    %498 = vmatpush.msra.mxu0 %v473
    %499 = vmatpush.msra.mxu0 %v471
    %500 = vmatpush.msra.mxu0 %v469
    %501 = vmatpush.msra.mxu0 %v467
    %502 = vmatpush.msra.mxu0 %v465
    %503 = vmatpush.msra.mxu0 %v463
    %504 = vmatpush.msra.mxu0 %v461
    %505 = vmatpush.msra.mxu0 %v459
    %506 = vmatpush.msra.mxu0 %v457
    %507 = vmatpush.msra.mxu0 %v455
    %508 = vmatpush.msra.mxu0 %v453
    %509 = vmatpush.msra.mxu0 %v451
    %510 = vmatpush.msra.mxu0 %v449
    %511 = vmatpush.msra.mxu0 %v447
    %512 = vmatpush.msra.mxu0 %v445
    %513 = vmatmul.f32.gmra.mxu0 %v353
    %v514 = vpop.f32.mrf.mxu0
    %v515 = vadd.f32 %v495, %v514
    %516 = vdwg.mxu0
    %517 = vmatpush.msra.mxu0 %v444
    %518 = vmatpush.msra.mxu0 %v442
    %519 = vmatpush.msra.mxu0 %v440
    %520 = vmatpush.msra.mxu0 %v438
    %521 = vmatpush.msra.mxu0 %v436
    %522 = vmatpush.msra.mxu0 %v434
    %523 = vmatpush.msra.mxu0 %v432
    %524 = vmatpush.msra.mxu0 %v430
    %525 = vmatpush.msra.mxu0 %v428
    %526 = vmatpush.msra.mxu0 %v426
    %527 = vmatpush.msra.mxu0 %v424
    %528 = vmatpush.msra.mxu0 %v422
    %529 = vmatpush.msra.mxu0 %v420
    %530 = vmatpush.msra.mxu0 %v418
    %531 = vmatpush.msra.mxu0 %v416
    %532 = vmatpush.msra.mxu0 %v414
    %533 = vmatmul.f32.gmra.mxu0 %v352
    %v534 = vpop.f32.mrf.mxu0
    %v535 = vadd.f32 0.0, %v534
    %536 = vdwg.mxu0
    %537 = vmatpush.msra.mxu0 %v476
    %538 = vmatpush.msra.mxu0 %v474
    %539 = vmatpush.msra.mxu0 %v472
    %540 = vmatpush.msra.mxu0 %v470
    %541 = vmatpush.msra.mxu0 %v468
    %542 = vmatpush.msra.mxu0 %v466
    %543 = vmatpush.msra.mxu0 %v464
    %544 = vmatpush.msra.mxu0 %v462
    %545 = vmatpush.msra.mxu0 %v460
    %546 = vmatpush.msra.mxu0 %v458
    %547 = vmatpush.msra.mxu0 %v456
    %548 = vmatpush.msra.mxu0 %v454
    %549 = vmatpush.msra.mxu0 %v452
    %550 = vmatpush.msra.mxu0 %v450
    %551 = vmatpush.msra.mxu0 %v448
    %552 = vmatpush.msra.mxu0 %v446
    %553 = vmatmul.f32.gmra.mxu0 %v353
    %v554 = vpop.f32.mrf.mxu0
    %v555 = vadd.f32 %v535, %v554
    %556 = vdwg.mxu0
    %v557 = vperm.slane %v391, 0
    %v558 = vperm.slane %v411, 0
    %v559 = vmul.f32 %v515, %v557
    %v560 = vmul.f32 %v555, %v558
    %v561 = vld [vmem:[#allocation14] sm:$0xff]
    %v562 = vld [vmem:[#allocation14 + $0x8] sm:$0xff]
    %v563 = vld [vmem:[#allocation14 + $0x10] sm:$0xff]
    %v564 = vld [vmem:[#allocation14 + $0x18] sm:$0xff]
    %v565 = vld [vmem:[#allocation14 + $0x20] sm:$0xff]
    %v566 = vld [vmem:[#allocation14 + $0x28] sm:$0xff]
    %v567 = vld [vmem:[#allocation14 + $0x30] sm:$0xff]
    %v568 = vld [vmem:[#allocation14 + $0x38] sm:$0xff]
    %v569 = vld [vmem:[#allocation14 + $0x40] sm:$0xff]
    %v570 = vld [vmem:[#allocation14 + $0x48] sm:$0xff]
    %v571 = vld [vmem:[#allocation14 + $0x50] sm:$0xff]
    %v572 = vld [vmem:[#allocation14 + $0x58] sm:$0xff]
    %v573 = vld [vmem:[#allocation14 + $0x60] sm:$0xff]
    %v574 = vld [vmem:[#allocation14 + $0x68] sm:$0xff]
    %v575 = vld [vmem:[#allocation14 + $0x70] sm:$0xff]
    %v576 = vld [vmem:[#allocation14 + $0x78] sm:$0xff]
    %v577 = vld [vmem:[#allocation14 + $0x80] sm:$0xff]
    %v578 = vld [vmem:[#allocation14 + $0x88] sm:$0xff]
    %v579 = vld [vmem:[#allocation14 + $0x90] sm:$0xff]
    %v580 = vld [vmem:[#allocation14 + $0x98] sm:$0xff]
    %v581 = vld [vmem:[#allocation14 + $0xa0] sm:$0xff]
    %v582 = vld [vmem:[#allocation14 + $0xa8] sm:$0xff]
    %v583 = vld [vmem:[#allocation14 + $0xb0] sm:$0xff]
    %v584 = vld [vmem:[#allocation14 + $0xb8] sm:$0xff]
    %v585 = vld [vmem:[#allocation14 + $0xc0] sm:$0xff]
    %v586 = vld [vmem:[#allocation14 + $0xc8] sm:$0xff]
    %v587 = vld [vmem:[#allocation14 + $0xd0] sm:$0xff]
    %v588 = vld [vmem:[#allocation14 + $0xd8] sm:$0xff]
    %v589 = vld [vmem:[#allocation14 + $0xe0] sm:$0xff]
    %v590 = vld [vmem:[#allocation14 + $0xe8] sm:$0xff]
    %v591 = vld [vmem:[#allocation14 + $0xf0] sm:$0xff]
    %v592 = vld [vmem:[#allocation14 + $0xf8] sm:$0xff]
    %v593 = vld [vmem:[#allocation14 + $0x100] sm:$0xff]
    %v594 = vld [vmem:[#allocation14 + $0x108] sm:$0xff]
    %v595 = vld [vmem:[#allocation14 + $0x110] sm:$0xff]
    %v596 = vld [vmem:[#allocation14 + $0x118] sm:$0xff]
    %v597 = vld [vmem:[#allocation14 + $0x120] sm:$0xff]
    %v598 = vld [vmem:[#allocation14 + $0x128] sm:$0xff]
    %v599 = vld [vmem:[#allocation14 + $0x130] sm:$0xff]
    %v600 = vld [vmem:[#allocation14 + $0x138] sm:$0xff]
    %v601 = vld [vmem:[#allocation14 + $0x140] sm:$0xff]
    %v602 = vld [vmem:[#allocation14 + $0x148] sm:$0xff]
    %v603 = vld [vmem:[#allocation14 + $0x150] sm:$0xff]
    %v604 = vld [vmem:[#allocation14 + $0x158] sm:$0xff]
    %v605 = vld [vmem:[#allocation14 + $0x160] sm:$0xff]
    %v606 = vld [vmem:[#allocation14 + $0x168] sm:$0xff]
    %v607 = vld [vmem:[#allocation14 + $0x170] sm:$0xff]
    %v608 = vld [vmem:[#allocation14 + $0x178] sm:$0xff]
    %v609 = vld [vmem:[#allocation14 + $0x180] sm:$0xff]
    %v610 = vld [vmem:[#allocation14 + $0x188] sm:$0xff]
    %v611 = vld [vmem:[#allocation14 + $0x190] sm:$0xff]
    %v612 = vld [vmem:[#allocation14 + $0x198] sm:$0xff]
    %v613 = vld [vmem:[#allocation14 + $0x1a0] sm:$0xff]
    %v614 = vld [vmem:[#allocation14 + $0x1a8] sm:$0xff]
    %v615 = vld [vmem:[#allocation14 + $0x1b0] sm:$0xff]
    %v616 = vld [vmem:[#allocation14 + $0x1b8] sm:$0xff]
    %v617 = vld [vmem:[#allocation14 + $0x1c0] sm:$0xff]
    %v618 = vld [vmem:[#allocation14 + $0x1c8] sm:$0xff]
    %v619 = vld [vmem:[#allocation14 + $0x1d0] sm:$0xff]
    %v620 = vld [vmem:[#allocation14 + $0x1d8] sm:$0xff]
    %v621 = vld [vmem:[#allocation14 + $0x1e0] sm:$0xff]
    %v622 = vld [vmem:[#allocation14 + $0x1e8] sm:$0xff]
    %v623 = vld [vmem:[#allocation14 + $0x1f0] sm:$0xff]
    %v624 = vld [vmem:[#allocation14 + $0x1f8] sm:$0xff]
    %v625 = vld [vmem:[#allocation14 + $0x200] sm:$0xff]
    %v626 = vld [vmem:[#allocation14 + $0x208] sm:$0xff]
    %v627 = vld [vmem:[#allocation14 + $0x210] sm:$0xff]
    %v628 = vld [vmem:[#allocation14 + $0x218] sm:$0xff]
    %v629 = vld [vmem:[#allocation14 + $0x220] sm:$0xff]
    %v630 = vld [vmem:[#allocation14 + $0x228] sm:$0xff]
    %v631 = vld [vmem:[#allocation14 + $0x230] sm:$0xff]
    %v632 = vld [vmem:[#allocation14 + $0x238] sm:$0xff]
    %v633 = vld [vmem:[#allocation14 + $0x240] sm:$0xff]
    %v634 = vld [vmem:[#allocation14 + $0x248] sm:$0xff]
    %v635 = vld [vmem:[#allocation14 + $0x250] sm:$0xff]
    %v636 = vld [vmem:[#allocation14 + $0x258] sm:$0xff]
    %v637 = vld [vmem:[#allocation14 + $0x260] sm:$0xff]
    %v638 = vld [vmem:[#allocation14 + $0x268] sm:$0xff]
    %v639 = vld [vmem:[#allocation14 + $0x270] sm:$0xff]
    %v640 = vld [vmem:[#allocation14 + $0x278] sm:$0xff]
    %v641 = vld [vmem:[#allocation14 + $0x280] sm:$0xff]
    %v642 = vld [vmem:[#allocation14 + $0x288] sm:$0xff]
    %v643 = vld [vmem:[#allocation14 + $0x290] sm:$0xff]
    %v644 = vld [vmem:[#allocation14 + $0x298] sm:$0xff]
    %v645 = vld [vmem:[#allocation14 + $0x2a0] sm:$0xff]
    %v646 = vld [vmem:[#allocation14 + $0x2a8] sm:$0xff]
    %v647 = vld [vmem:[#allocation14 + $0x2b0] sm:$0xff]
    %v648 = vld [vmem:[#allocation14 + $0x2b8] sm:$0xff]
    %v649 = vld [vmem:[#allocation14 + $0x2c0] sm:$0xff]
    %v650 = vld [vmem:[#allocation14 + $0x2c8] sm:$0xff]
    %v651 = vld [vmem:[#allocation14 + $0x2d0] sm:$0xff]
    %v652 = vld [vmem:[#allocation14 + $0x2d8] sm:$0xff]
    %v653 = vld [vmem:[#allocation14 + $0x2e0] sm:$0xff]
    %v654 = vld [vmem:[#allocation14 + $0x2e8] sm:$0xff]
    %v655 = vld [vmem:[#allocation14 + $0x2f0] sm:$0xff]
    %v656 = vld [vmem:[#allocation14 + $0x2f8] sm:$0xff]
    %v657 = vld [vmem:[#allocation14 + $0x300] sm:$0xff]
    %v658 = vld [vmem:[#allocation14 + $0x308] sm:$0xff]
    %v659 = vld [vmem:[#allocation14 + $0x310] sm:$0xff]
    %v660 = vld [vmem:[#allocation14 + $0x318] sm:$0xff]
    %v661 = vld [vmem:[#allocation14 + $0x320] sm:$0xff]
    %v662 = vld [vmem:[#allocation14 + $0x328] sm:$0xff]
    %v663 = vld [vmem:[#allocation14 + $0x330] sm:$0xff]
    %v664 = vld [vmem:[#allocation14 + $0x338] sm:$0xff]
    %v665 = vld [vmem:[#allocation14 + $0x340] sm:$0xff]
    %v666 = vld [vmem:[#allocation14 + $0x348] sm:$0xff]
    %v667 = vld [vmem:[#allocation14 + $0x350] sm:$0xff]
    %v668 = vld [vmem:[#allocation14 + $0x358] sm:$0xff]
    %v669 = vld [vmem:[#allocation14 + $0x360] sm:$0xff]
    %v670 = vld [vmem:[#allocation14 + $0x368] sm:$0xff]
    %v671 = vld [vmem:[#allocation14 + $0x370] sm:$0xff]
    %v672 = vld [vmem:[#allocation14 + $0x378] sm:$0xff]
    %v673 = vld [vmem:[#allocation14 + $0x380] sm:$0xff]
    %v674 = vld [vmem:[#allocation14 + $0x388] sm:$0xff]
    %v675 = vld [vmem:[#allocation14 + $0x390] sm:$0xff]
    %v676 = vld [vmem:[#allocation14 + $0x398] sm:$0xff]
    %v677 = vld [vmem:[#allocation14 + $0x3a0] sm:$0xff]
    %v678 = vld [vmem:[#allocation14 + $0x3a8] sm:$0xff]
    %v679 = vld [vmem:[#allocation14 + $0x3b0] sm:$0xff]
    %v680 = vld [vmem:[#allocation14 + $0x3b8] sm:$0xff]
    %v681 = vld [vmem:[#allocation14 + $0x3c0] sm:$0xff]
    %v682 = vld [vmem:[#allocation14 + $0x3c8] sm:$0xff]
    %v683 = vld [vmem:[#allocation14 + $0x3d0] sm:$0xff]
    %v684 = vld [vmem:[#allocation14 + $0x3d8] sm:$0xff]
    %v685 = vld [vmem:[#allocation14 + $0x3e0] sm:$0xff]
    %v686 = vld [vmem:[#allocation14 + $0x3e8] sm:$0xff]
    %v687 = vld [vmem:[#allocation14 + $0x3f0] sm:$0xff]
    %v688 = vld [vmem:[#allocation14 + $0x3f8] sm:$0xff]
    %v689 = vld [vmem:[%s11] sm:$0xf]
    %v691 = vperm.slane %v689, 0
    %v692 = vperm.slane %v689, 1
    %v693 = vperm.slane %v689, 2
    %v694 = vperm.slane %v689, 3
    %699 = vmatpush.msra.mxu0 %v621
    %700 = vmatpush.msra.mxu0 %v617
    %701 = vmatpush.msra.mxu0 %v613
    %702 = vmatpush.msra.mxu0 %v609
    %703 = vmatpush.msra.mxu0 %v605
    %704 = vmatpush.msra.mxu0 %v601
    %705 = vmatpush.msra.mxu0 %v597
    %706 = vmatpush.msra.mxu0 %v593
    %707 = vmatpush.msra.mxu0 %v589
    %708 = vmatpush.msra.mxu0 %v585
    %709 = vmatpush.msra.mxu0 %v581
    %710 = vmatpush.msra.mxu0 %v577
    %711 = vmatpush.msra.mxu0 %v573
    %712 = vmatpush.msra.mxu0 %v569
    %713 = vmatpush.msra.mxu0 %v565
    %714 = vmatpush.msra.mxu0 %v561
    %715 = vmatmul.f32.gmra.mxu0 %v559
    %v716 = vpop.f32.mrf.mxu0
    %v717 = vadd.f32 %v691, %v716
    %718 = vdwg.mxu0
    %719 = vmatpush.msra.mxu0 %v685
    %720 = vmatpush.msra.mxu0 %v681
    %721 = vmatpush.msra.mxu0 %v677
    %722 = vmatpush.msra.mxu0 %v673
    %723 = vmatpush.msra.mxu0 %v669
    %724 = vmatpush.msra.mxu0 %v665
    %725 = vmatpush.msra.mxu0 %v661
    %726 = vmatpush.msra.mxu0 %v657
    %727 = vmatpush.msra.mxu0 %v653
    %728 = vmatpush.msra.mxu0 %v649
    %729 = vmatpush.msra.mxu0 %v645
    %730 = vmatpush.msra.mxu0 %v641
    %731 = vmatpush.msra.mxu0 %v637
    %732 = vmatpush.msra.mxu0 %v633
    %733 = vmatpush.msra.mxu0 %v629
    %734 = vmatpush.msra.mxu0 %v625
    %735 = vmatmul.f32.gmra.mxu0 %v560
    %v736 = vpop.f32.mrf.mxu0
    %v737 = vadd.f32 %v717, %v736
    %738 = vdwg.mxu0
    %739 = vmatpush.msra.mxu0 %v622
    %740 = vmatpush.msra.mxu0 %v618
    %741 = vmatpush.msra.mxu0 %v614
    %742 = vmatpush.msra.mxu0 %v610
    %743 = vmatpush.msra.mxu0 %v606
    %744 = vmatpush.msra.mxu0 %v602
    %745 = vmatpush.msra.mxu0 %v598
    %746 = vmatpush.msra.mxu0 %v594
    %747 = vmatpush.msra.mxu0 %v590
    %748 = vmatpush.msra.mxu0 %v586
    %749 = vmatpush.msra.mxu0 %v582
    %750 = vmatpush.msra.mxu0 %v578
    %751 = vmatpush.msra.mxu0 %v574
    %752 = vmatpush.msra.mxu0 %v570
    %753 = vmatpush.msra.mxu0 %v566
    %754 = vmatpush.msra.mxu0 %v562
    %755 = vmatmul.f32.gmra.mxu0 %v559
    %v756 = vpop.f32.mrf.mxu0
    %v757 = vadd.f32 %v692, %v756
    %758 = vdwg.mxu0
    %759 = vmatpush.msra.mxu0 %v686
    %760 = vmatpush.msra.mxu0 %v682
    %761 = vmatpush.msra.mxu0 %v678
    %762 = vmatpush.msra.mxu0 %v674
    %763 = vmatpush.msra.mxu0 %v670
    %764 = vmatpush.msra.mxu0 %v666
    %765 = vmatpush.msra.mxu0 %v662
    %766 = vmatpush.msra.mxu0 %v658
    %767 = vmatpush.msra.mxu0 %v654
    %768 = vmatpush.msra.mxu0 %v650
    %769 = vmatpush.msra.mxu0 %v646
    %770 = vmatpush.msra.mxu0 %v642
    %771 = vmatpush.msra.mxu0 %v638
    %772 = vmatpush.msra.mxu0 %v634
    %773 = vmatpush.msra.mxu0 %v630
    %774 = vmatpush.msra.mxu0 %v626
    %775 = vmatmul.f32.gmra.mxu0 %v560
    %v776 = vpop.f32.mrf.mxu0
    %v777 = vadd.f32 %v757, %v776
    %778 = vdwg.mxu0
    %779 = vmatpush.msra.mxu0 %v623
    %780 = vmatpush.msra.mxu0 %v619
    %781 = vmatpush.msra.mxu0 %v615
    %782 = vmatpush.msra.mxu0 %v611
    %783 = vmatpush.msra.mxu0 %v607
    %784 = vmatpush.msra.mxu0 %v603
    %785 = vmatpush.msra.mxu0 %v599
    %786 = vmatpush.msra.mxu0 %v595
    %787 = vmatpush.msra.mxu0 %v591
    %788 = vmatpush.msra.mxu0 %v587
    %789 = vmatpush.msra.mxu0 %v583
    %790 = vmatpush.msra.mxu0 %v579
    %791 = vmatpush.msra.mxu0 %v575
    %792 = vmatpush.msra.mxu0 %v571
    %793 = vmatpush.msra.mxu0 %v567
    %794 = vmatpush.msra.mxu0 %v563
    %795 = vmatmul.f32.gmra.mxu0 %v559
    %v796 = vpop.f32.mrf.mxu0
    %v797 = vadd.f32 %v693, %v796
    %798 = vdwg.mxu0
    %799 = vmatpush.msra.mxu0 %v687
    %800 = vmatpush.msra.mxu0 %v683
    %801 = vmatpush.msra.mxu0 %v679
    %802 = vmatpush.msra.mxu0 %v675
    %803 = vmatpush.msra.mxu0 %v671
    %804 = vmatpush.msra.mxu0 %v667
    %805 = vmatpush.msra.mxu0 %v663
    %806 = vmatpush.msra.mxu0 %v659
    %807 = vmatpush.msra.mxu0 %v655
    %808 = vmatpush.msra.mxu0 %v651
    %809 = vmatpush.msra.mxu0 %v647
    %810 = vmatpush.msra.mxu0 %v643
    %811 = vmatpush.msra.mxu0 %v639
    %812 = vmatpush.msra.mxu0 %v635
    %813 = vmatpush.msra.mxu0 %v631
    %814 = vmatpush.msra.mxu0 %v627
    %815 = vmatmul.f32.gmra.mxu0 %v560
    %v816 = vpop.f32.mrf.mxu0
    %v817 = vadd.f32 %v797, %v816
    %818 = vdwg.mxu0
    %819 = vmatpush.msra.mxu0 %v624
    %820 = vmatpush.msra.mxu0 %v620
    %821 = vmatpush.msra.mxu0 %v616
    %822 = vmatpush.msra.mxu0 %v612
    %823 = vmatpush.msra.mxu0 %v608
    %824 = vmatpush.msra.mxu0 %v604
    %825 = vmatpush.msra.mxu0 %v600
    %826 = vmatpush.msra.mxu0 %v596
    %827 = vmatpush.msra.mxu0 %v592
    %828 = vmatpush.msra.mxu0 %v588
    %829 = vmatpush.msra.mxu0 %v584
    %830 = vmatpush.msra.mxu0 %v580
    %831 = vmatpush.msra.mxu0 %v576
    %832 = vmatpush.msra.mxu0 %v572
    %833 = vmatpush.msra.mxu0 %v568
    %834 = vmatpush.msra.mxu0 %v564
    %835 = vmatmul.f32.gmra.mxu0 %v559
    %v836 = vpop.f32.mrf.mxu0
    %v837 = vadd.f32 %v694, %v836
    %838 = vdwg.mxu0
    %839 = vmatpush.msra.mxu0 %v688
    %840 = vmatpush.msra.mxu0 %v684
    %841 = vmatpush.msra.mxu0 %v680
    %842 = vmatpush.msra.mxu0 %v676
    %843 = vmatpush.msra.mxu0 %v672
    %844 = vmatpush.msra.mxu0 %v668
    %845 = vmatpush.msra.mxu0 %v664
    %846 = vmatpush.msra.mxu0 %v660
    %847 = vmatpush.msra.mxu0 %v656
    %848 = vmatpush.msra.mxu0 %v652
    %849 = vmatpush.msra.mxu0 %v648
    %850 = vmatpush.msra.mxu0 %v644
    %851 = vmatpush.msra.mxu0 %v640
    %852 = vmatpush.msra.mxu0 %v636
    %853 = vmatpush.msra.mxu0 %v632
    %854 = vmatpush.msra.mxu0 %v628
    %855 = vmatmul.f32.gmra.mxu0 %v560
    %v856 = vpop.f32.mrf.mxu0
    %v857 = vadd.f32 %v837, %v856
    %858 = vdwg.mxu0
    %859 = vst [vmem:[#allocation2] sm:$0xff] %v737
    %860 = vst [vmem:[#allocation2 + $0x8] sm:$0xff] %v777
    %861 = vst [vmem:[#allocation2 + $0x10] sm:$0xff] %v817
    %862 = vst [vmem:[#allocation2 + $0x18] sm:$0xff] %v857
    %v863 = vld [vmem:[#allocation2] ss:$8 sm:$0xf]
    %v864 = vld [vmem:[#allocation15] sm:$0xff]
    %v865 = vld [vmem:[#allocation15 + $0x8] sm:$0xff]
    %v866 = vld [vmem:[#allocation15 + $0x10] sm:$0xff]
    %v867 = vld [vmem:[#allocation15 + $0x18] sm:$0xff]
    %v868 = vld [vmem:[#allocation15 + $0x20] sm:$0xff]
    %v869 = vld [vmem:[#allocation15 + $0x28] sm:$0xff]
    %v870 = vld [vmem:[#allocation15 + $0x30] sm:$0xff]
    %v871 = vld [vmem:[#allocation15 + $0x38] sm:$0xff]
    %v872 = vld [vmem:[#allocation15 + $0x40] sm:$0xff]
    %v873 = vld [vmem:[#allocation15 + $0x48] sm:$0xff]
    %v874 = vld [vmem:[#allocation15 + $0x50] sm:$0xff]
    %v875 = vld [vmem:[#allocation15 + $0x58] sm:$0xff]
    %v876 = vld [vmem:[#allocation15 + $0x60] sm:$0xff]
    %v877 = vld [vmem:[#allocation15 + $0x68] sm:$0xff]
    %v878 = vld [vmem:[#allocation15 + $0x70] sm:$0xff]
    %v879 = vld [vmem:[#allocation15 + $0x78] sm:$0xff]
    %v880 = vld [vmem:[#allocation15 + $0x80] sm:$0xff]
    %v881 = vld [vmem:[#allocation15 + $0x88] sm:$0xff]
    %v882 = vld [vmem:[#allocation15 + $0x90] sm:$0xff]
    %v883 = vld [vmem:[#allocation15 + $0x98] sm:$0xff]
    %v884 = vld [vmem:[#allocation15 + $0xa0] sm:$0xff]
    %v885 = vld [vmem:[#allocation15 + $0xa8] sm:$0xff]
    %v886 = vld [vmem:[#allocation15 + $0xb0] sm:$0xff]
    %v887 = vld [vmem:[#allocation15 + $0xb8] sm:$0xff]
    %v888 = vld [vmem:[#allocation15 + $0xc0] sm:$0xff]
    %v889 = vld [vmem:[#allocation15 + $0xc8] sm:$0xff]
    %v890 = vld [vmem:[#allocation15 + $0xd0] sm:$0xff]
    %v891 = vld [vmem:[#allocation15 + $0xd8] sm:$0xff]
    %v892 = vld [vmem:[#allocation15 + $0xe0] sm:$0xff]
    %v893 = vld [vmem:[#allocation15 + $0xe8] sm:$0xff]
    %v894 = vld [vmem:[#allocation15 + $0xf0] sm:$0xff]
    %v895 = vld [vmem:[#allocation15 + $0xf8] sm:$0xff]
    %v896 = vld [vmem:[#allocation15 + $0x100] sm:$0xff]
    %v897 = vld [vmem:[#allocation15 + $0x108] sm:$0xff]
    %v898 = vld [vmem:[#allocation15 + $0x110] sm:$0xff]
    %v899 = vld [vmem:[#allocation15 + $0x118] sm:$0xff]
    %v900 = vld [vmem:[#allocation15 + $0x120] sm:$0xff]
    %v901 = vld [vmem:[#allocation15 + $0x128] sm:$0xff]
    %v902 = vld [vmem:[#allocation15 + $0x130] sm:$0xff]
    %v903 = vld [vmem:[#allocation15 + $0x138] sm:$0xff]
    %v904 = vld [vmem:[#allocation15 + $0x140] sm:$0xff]
    %v905 = vld [vmem:[#allocation15 + $0x148] sm:$0xff]
    %v906 = vld [vmem:[#allocation15 + $0x150] sm:$0xff]
    %v907 = vld [vmem:[#allocation15 + $0x158] sm:$0xff]
    %v908 = vld [vmem:[#allocation15 + $0x160] sm:$0xff]
    %v909 = vld [vmem:[#allocation15 + $0x168] sm:$0xff]
    %v910 = vld [vmem:[#allocation15 + $0x170] sm:$0xff]
    %v911 = vld [vmem:[#allocation15 + $0x178] sm:$0xff]
    %v912 = vld [vmem:[#allocation15 + $0x180] sm:$0xff]
    %v913 = vld [vmem:[#allocation15 + $0x188] sm:$0xff]
    %v914 = vld [vmem:[#allocation15 + $0x190] sm:$0xff]
    %v915 = vld [vmem:[#allocation15 + $0x198] sm:$0xff]
    %v916 = vld [vmem:[#allocation15 + $0x1a0] sm:$0xff]
    %v917 = vld [vmem:[#allocation15 + $0x1a8] sm:$0xff]
    %v918 = vld [vmem:[#allocation15 + $0x1b0] sm:$0xff]
    %v919 = vld [vmem:[#allocation15 + $0x1b8] sm:$0xff]
    %v920 = vld [vmem:[#allocation15 + $0x1c0] sm:$0xff]
    %v921 = vld [vmem:[#allocation15 + $0x1c8] sm:$0xff]
    %v922 = vld [vmem:[#allocation15 + $0x1d0] sm:$0xff]
    %v923 = vld [vmem:[#allocation15 + $0x1d8] sm:$0xff]
    %v924 = vld [vmem:[#allocation15 + $0x1e0] sm:$0xff]
    %v925 = vld [vmem:[#allocation15 + $0x1e8] sm:$0xff]
    %v926 = vld [vmem:[#allocation15 + $0x1f0] sm:$0xff]
    %v927 = vld [vmem:[#allocation15 + $0x1f8] sm:$0xff]
    %928 = vmatpush.msra.mxu0 %v924
    %929 = vmatpush.msra.mxu0 %v920
    %930 = vmatpush.msra.mxu0 %v916
    %931 = vmatpush.msra.mxu0 %v912
    %932 = vmatpush.msra.mxu0 %v908
    %933 = vmatpush.msra.mxu0 %v904
    %934 = vmatpush.msra.mxu0 %v900
    %935 = vmatpush.msra.mxu0 %v896
    %936 = vmatpush.msra.mxu0 %v892
    %937 = vmatpush.msra.mxu0 %v888
    %938 = vmatpush.msra.mxu0 %v884
    %939 = vmatpush.msra.mxu0 %v880
    %940 = vmatpush.msra.mxu0 %v876
    %941 = vmatpush.msra.mxu0 %v872
    %942 = vmatpush.msra.mxu0 %v868
    %943 = vmatpush.msra.mxu0 %v864
    %944 = vmatmul.f32.gmra.mxu0 0.0
    %v945 = vpop.f32.mrf.mxu0
    %v946 = vadd.f32 0.0, %v945
    %947 = vdwg.mxu0
    %948 = vmatpush.msra.mxu0 %v925
    %949 = vmatpush.msra.mxu0 %v921
    %950 = vmatpush.msra.mxu0 %v917
    %951 = vmatpush.msra.mxu0 %v913
    %952 = vmatpush.msra.mxu0 %v909
    %953 = vmatpush.msra.mxu0 %v905
    %954 = vmatpush.msra.mxu0 %v901
    %955 = vmatpush.msra.mxu0 %v897
    %956 = vmatpush.msra.mxu0 %v893
    %957 = vmatpush.msra.mxu0 %v889
    %958 = vmatpush.msra.mxu0 %v885
    %959 = vmatpush.msra.mxu0 %v881
    %960 = vmatpush.msra.mxu0 %v877
    %961 = vmatpush.msra.mxu0 %v873
    %962 = vmatpush.msra.mxu0 %v869
    %963 = vmatpush.msra.mxu0 %v865
    %964 = vmatmul.f32.gmra.mxu0 0.0
    %v965 = vpop.f32.mrf.mxu0
    %v966 = vadd.f32 0.0, %v965
    %967 = vdwg.mxu0
    %968 = vmatpush.msra.mxu0 %v926
    %969 = vmatpush.msra.mxu0 %v922
    %970 = vmatpush.msra.mxu0 %v918
    %971 = vmatpush.msra.mxu0 %v914
    %972 = vmatpush.msra.mxu0 %v910
    %973 = vmatpush.msra.mxu0 %v906
    %974 = vmatpush.msra.mxu0 %v902
    %975 = vmatpush.msra.mxu0 %v898
    %976 = vmatpush.msra.mxu0 %v894
    %977 = vmatpush.msra.mxu0 %v890
    %978 = vmatpush.msra.mxu0 %v886
    %979 = vmatpush.msra.mxu0 %v882
    %980 = vmatpush.msra.mxu0 %v878
    %981 = vmatpush.msra.mxu0 %v874
    %982 = vmatpush.msra.mxu0 %v870
    %983 = vmatpush.msra.mxu0 %v866
    %984 = vmatmul.f32.gmra.mxu0 0.0
    %v985 = vpop.f32.mrf.mxu0
    %v986 = vadd.f32 0.0, %v985
    %987 = vdwg.mxu0
    %988 = vmatpush.msra.mxu0 %v927
    %989 = vmatpush.msra.mxu0 %v923
    %990 = vmatpush.msra.mxu0 %v919
    %991 = vmatpush.msra.mxu0 %v915
    %992 = vmatpush.msra.mxu0 %v911
    %993 = vmatpush.msra.mxu0 %v907
    %994 = vmatpush.msra.mxu0 %v903
    %995 = vmatpush.msra.mxu0 %v899
    %996 = vmatpush.msra.mxu0 %v895
    %997 = vmatpush.msra.mxu0 %v891
    %998 = vmatpush.msra.mxu0 %v887
    %999 = vmatpush.msra.mxu0 %v883
    %1000 = vmatpush.msra.mxu0 %v879
    %1001 = vmatpush.msra.mxu0 %v875
    %1002 = vmatpush.msra.mxu0 %v871
    %1003 = vmatpush.msra.mxu0 %v867
    %1004 = vmatmul.f32.gmra.mxu0 0.0
    %v1005 = vpop.f32.mrf.mxu0
    %v1006 = vadd.f32 0.0, %v1005
    %1007 = vdwg.mxu0
    %v1012 = vrot.slane %v966, 7
    %v1013 = vrot.slane %v986, 6
    %v1014 = vrot.slane %v1006, 5
    %v1015 = vsel %vm252, %v946, %v1012
    %vm1016 = vcmask 1042434
    %v1017 = vsel %vm1016, %v1013, %v1014
    %vm1018 = vcmask 1041408
    %v1019 = vsel %vm1018, %v1015, %v1017
    %v1021 = vadd.f32 %v863, %v1019
    %v1022 = vxor.u32 %v1021, 2147483648
    %v1023 = vmul.f32 %v1022, 1.442695
    %v1024 = vpow.pop %v1023
    %v1025 = vadd.f32 %v1024, 1.0
    %v1026 = vrcp.pop %v1025
    %v1027 = vmul.f32 %v1025, %v1026
    %v1028 = vsub.f32 1.0, %v1027
    %v1029 = vmul.f32 %v1026, %v1028
    %v1030 = vadd.f32 %v1026, %v1029
    %vm1031 = vweird.f32 %v1025
    %vm1032 = vweird.f32 %v1026
    %vm1033 = vmor %vm1031, %vm1032
    %v1034 = vsel %vm1033, %v1026, %v1030
    %v1035 = vand.u32 2147483647, %v1025
    %vm1036 = vcmp.eq.f32.partialorder %v1035, 8.507059e+37
    %v1037 = vand.u32 %v1025, 2147483648
    %v1038 = vor.u32 1.1754944e-38, %v1037
    %v1039 = vsel %vm1036, %v1038, %v1034
    %v1040 = vmul.f32 1.0, %v1039
    %v1042 = vrot.slane %v1021, 1
    %v1044 = vxor.u32 %v1042, 2147483648
    %v1045 = vmul.f32 %v1044, 1.442695
    %v1046 = vpow.pop %v1045
    %v1047 = vadd.f32 %v1046, 1.0
    %v1048 = vrcp.pop %v1047
    %v1049 = vmul.f32 %v1047, %v1048
    %v1050 = vsub.f32 1.0, %v1049
    %v1051 = vmul.f32 %v1048, %v1050
    %v1052 = vadd.f32 %v1048, %v1051
    %vm1053 = vweird.f32 %v1047
    %vm1054 = vweird.f32 %v1048
    %vm1055 = vmor %vm1053, %vm1054
    %v1056 = vsel %vm1055, %v1048, %v1052
    %v1057 = vand.u32 2147483647, %v1047
    %vm1058 = vcmp.eq.f32.partialorder %v1057, 8.507059e+37
    %v1059 = vand.u32 %v1047, 2147483648
    %v1060 = vor.u32 1.1754944e-38, %v1059
    %v1061 = vsel %vm1058, %v1060, %v1056
    %v1062 = vmul.f32 1.0, %v1061
    %v1063 = vrot.slane %v1021, 2
    %v1065 = vtanh.pop %v1063
    %v1066 = vrot.slane %v1021, 3
    %v1068 = vxor.u32 %v1066, 2147483648
    %v1069 = vmul.f32 %v1068, 1.442695
    %v1070 = vpow.pop %v1069
    %v1071 = vadd.f32 %v1070, 1.0
    %v1072 = vrcp.pop %v1071
    %v1073 = vmul.f32 %v1071, %v1072
    %v1074 = vsub.f32 1.0, %v1073
    %v1075 = vmul.f32 %v1072, %v1074
    %v1076 = vadd.f32 %v1072, %v1075
    %vm1077 = vweird.f32 %v1071
    %vm1078 = vweird.f32 %v1072
    %vm1079 = vmor %vm1077, %vm1078
    %v1080 = vsel %vm1079, %v1072, %v1076
    %v1081 = vand.u32 2147483647, %v1071
    %vm1082 = vcmp.eq.f32.partialorder %v1081, 8.507059e+37
    %v1083 = vand.u32 %v1071, 2147483648
    %v1084 = vor.u32 1.1754944e-38, %v1083
    %v1085 = vsel %vm1082, %v1084, %v1080
    %v1086 = vmul.f32 1.0, %v1085
    %v1087 = vmul.f32 %v1062, 0.0
    %v1088 = vmul.f32 %v1040, %v1065
    %v1089 = vadd.f32 %v1087, %v1088
    %v1090 = vtanh.pop %v1089
    %v1091 = vmul.f32 %v1086, %v1090
    %1092 = vst [vmem:[#allocation3] sm:$0x1] %v1091
    %s1093 = scalar_lea.vmem [#allocation2], 1
    %v1094 = vld [vmem:[%s1093] ss:$8 sm:$0xf]
    %v1095 = vld [vmem:[#allocation15] sm:$0xff]
    %v1096 = vld [vmem:[#allocation15 + $0x8] sm:$0xff]
    %v1097 = vld [vmem:[#allocation15 + $0x10] sm:$0xff]
    %v1098 = vld [vmem:[#allocation15 + $0x18] sm:$0xff]
    %v1099 = vld [vmem:[#allocation15 + $0x20] sm:$0xff]
    %v1100 = vld [vmem:[#allocation15 + $0x28] sm:$0xff]
    %v1101 = vld [vmem:[#allocation15 + $0x30] sm:$0xff]
    %v1102 = vld [vmem:[#allocation15 + $0x38] sm:$0xff]
    %v1103 = vld [vmem:[#allocation15 + $0x40] sm:$0xff]
    %v1104 = vld [vmem:[#allocation15 + $0x48] sm:$0xff]
    %v1105 = vld [vmem:[#allocation15 + $0x50] sm:$0xff]
    %v1106 = vld [vmem:[#allocation15 + $0x58] sm:$0xff]
    %v1107 = vld [vmem:[#allocation15 + $0x60] sm:$0xff]
    %v1108 = vld [vmem:[#allocation15 + $0x68] sm:$0xff]
    %v1109 = vld [vmem:[#allocation15 + $0x70] sm:$0xff]
    %v1110 = vld [vmem:[#allocation15 + $0x78] sm:$0xff]
    %v1111 = vld [vmem:[#allocation15 + $0x80] sm:$0xff]
    %v1112 = vld [vmem:[#allocation15 + $0x88] sm:$0xff]
    %v1113 = vld [vmem:[#allocation15 + $0x90] sm:$0xff]
    %v1114 = vld [vmem:[#allocation15 + $0x98] sm:$0xff]
    %v1115 = vld [vmem:[#allocation15 + $0xa0] sm:$0xff]
    %v1116 = vld [vmem:[#allocation15 + $0xa8] sm:$0xff]
    %v1117 = vld [vmem:[#allocation15 + $0xb0] sm:$0xff]
    %v1118 = vld [vmem:[#allocation15 + $0xb8] sm:$0xff]
    %v1119 = vld [vmem:[#allocation15 + $0xc0] sm:$0xff]
    %v1120 = vld [vmem:[#allocation15 + $0xc8] sm:$0xff]
    %v1121 = vld [vmem:[#allocation15 + $0xd0] sm:$0xff]
    %v1122 = vld [vmem:[#allocation15 + $0xd8] sm:$0xff]
    %v1123 = vld [vmem:[#allocation15 + $0xe0] sm:$0xff]
    %v1124 = vld [vmem:[#allocation15 + $0xe8] sm:$0xff]
    %v1125 = vld [vmem:[#allocation15 + $0xf0] sm:$0xff]
    %v1126 = vld [vmem:[#allocation15 + $0xf8] sm:$0xff]
    %v1127 = vld [vmem:[#allocation15 + $0x100] sm:$0xff]
    %v1128 = vld [vmem:[#allocation15 + $0x108] sm:$0xff]
    %v1129 = vld [vmem:[#allocation15 + $0x110] sm:$0xff]
    %v1130 = vld [vmem:[#allocation15 + $0x118] sm:$0xff]
    %v1131 = vld [vmem:[#allocation15 + $0x120] sm:$0xff]
    %v1132 = vld [vmem:[#allocation15 + $0x128] sm:$0xff]
    %v1133 = vld [vmem:[#allocation15 + $0x130] sm:$0xff]
    %v1134 = vld [vmem:[#allocation15 + $0x138] sm:$0xff]
    %v1135 = vld [vmem:[#allocation15 + $0x140] sm:$0xff]
    %v1136 = vld [vmem:[#allocation15 + $0x148] sm:$0xff]
    %v1137 = vld [vmem:[#allocation15 + $0x150] sm:$0xff]
    %v1138 = vld [vmem:[#allocation15 + $0x158] sm:$0xff]
    %v1139 = vld [vmem:[#allocation15 + $0x160] sm:$0xff]
    %v1140 = vld [vmem:[#allocation15 + $0x168] sm:$0xff]
    %v1141 = vld [vmem:[#allocation15 + $0x170] sm:$0xff]
    %v1142 = vld [vmem:[#allocation15 + $0x178] sm:$0xff]
    %v1143 = vld [vmem:[#allocation15 + $0x180] sm:$0xff]
    %v1144 = vld [vmem:[#allocation15 + $0x188] sm:$0xff]
    %v1145 = vld [vmem:[#allocation15 + $0x190] sm:$0xff]
    %v1146 = vld [vmem:[#allocation15 + $0x198] sm:$0xff]
    %v1147 = vld [vmem:[#allocation15 + $0x1a0] sm:$0xff]
    %v1148 = vld [vmem:[#allocation15 + $0x1a8] sm:$0xff]
    %v1149 = vld [vmem:[#allocation15 + $0x1b0] sm:$0xff]
    %v1150 = vld [vmem:[#allocation15 + $0x1b8] sm:$0xff]
    %v1151 = vld [vmem:[#allocation15 + $0x1c0] sm:$0xff]
    %v1152 = vld [vmem:[#allocation15 + $0x1c8] sm:$0xff]
    %v1153 = vld [vmem:[#allocation15 + $0x1d0] sm:$0xff]
    %v1154 = vld [vmem:[#allocation15 + $0x1d8] sm:$0xff]
    %v1155 = vld [vmem:[#allocation15 + $0x1e0] sm:$0xff]
    %v1156 = vld [vmem:[#allocation15 + $0x1e8] sm:$0xff]
    %v1157 = vld [vmem:[#allocation15 + $0x1f0] sm:$0xff]
    %v1158 = vld [vmem:[#allocation15 + $0x1f8] sm:$0xff]
    %1159 = vmatpush.msra.mxu0 %v1155
    %1160 = vmatpush.msra.mxu0 %v1151
    %1161 = vmatpush.msra.mxu0 %v1147
    %1162 = vmatpush.msra.mxu0 %v1143
    %1163 = vmatpush.msra.mxu0 %v1139
    %1164 = vmatpush.msra.mxu0 %v1135
    %1165 = vmatpush.msra.mxu0 %v1131
    %1166 = vmatpush.msra.mxu0 %v1127
    %1167 = vmatpush.msra.mxu0 %v1123
    %1168 = vmatpush.msra.mxu0 %v1119
    %1169 = vmatpush.msra.mxu0 %v1115
    %1170 = vmatpush.msra.mxu0 %v1111
    %1171 = vmatpush.msra.mxu0 %v1107
    %1172 = vmatpush.msra.mxu0 %v1103
    %1173 = vmatpush.msra.mxu0 %v1099
    %1174 = vmatpush.msra.mxu0 %v1095
    %1175 = vmatmul.f32.gmra.mxu0 %v1091
    %v1176 = vpop.f32.mrf.mxu0
    %v1177 = vadd.f32 0.0, %v1176
    %1178 = vdwg.mxu0
    %1179 = vmatpush.msra.mxu0 %v1156
    %1180 = vmatpush.msra.mxu0 %v1152
    %1181 = vmatpush.msra.mxu0 %v1148
    %1182 = vmatpush.msra.mxu0 %v1144
    %1183 = vmatpush.msra.mxu0 %v1140
    %1184 = vmatpush.msra.mxu0 %v1136
    %1185 = vmatpush.msra.mxu0 %v1132
    %1186 = vmatpush.msra.mxu0 %v1128
    %1187 = vmatpush.msra.mxu0 %v1124
    %1188 = vmatpush.msra.mxu0 %v1120
    %1189 = vmatpush.msra.mxu0 %v1116
    %1190 = vmatpush.msra.mxu0 %v1112
    %1191 = vmatpush.msra.mxu0 %v1108
    %1192 = vmatpush.msra.mxu0 %v1104
    %1193 = vmatpush.msra.mxu0 %v1100
    %1194 = vmatpush.msra.mxu0 %v1096
    %1195 = vmatmul.f32.gmra.mxu0 %v1091
    %v1196 = vpop.f32.mrf.mxu0
    %v1197 = vadd.f32 0.0, %v1196
    %1198 = vdwg.mxu0
    %1199 = vmatpush.msra.mxu0 %v1157
    %1200 = vmatpush.msra.mxu0 %v1153
    %1201 = vmatpush.msra.mxu0 %v1149
    %1202 = vmatpush.msra.mxu0 %v1145
    %1203 = vmatpush.msra.mxu0 %v1141
    %1204 = vmatpush.msra.mxu0 %v1137
    %1205 = vmatpush.msra.mxu0 %v1133
    %1206 = vmatpush.msra.mxu0 %v1129
    %1207 = vmatpush.msra.mxu0 %v1125
    %1208 = vmatpush.msra.mxu0 %v1121
    %1209 = vmatpush.msra.mxu0 %v1117
    %1210 = vmatpush.msra.mxu0 %v1113
    %1211 = vmatpush.msra.mxu0 %v1109
    %1212 = vmatpush.msra.mxu0 %v1105
    %1213 = vmatpush.msra.mxu0 %v1101
    %1214 = vmatpush.msra.mxu0 %v1097
    %1215 = vmatmul.f32.gmra.mxu0 %v1091
    %v1216 = vpop.f32.mrf.mxu0
    %v1217 = vadd.f32 0.0, %v1216
    %1218 = vdwg.mxu0
    %1219 = vmatpush.msra.mxu0 %v1158
    %1220 = vmatpush.msra.mxu0 %v1154
    %1221 = vmatpush.msra.mxu0 %v1150
    %1222 = vmatpush.msra.mxu0 %v1146
    %1223 = vmatpush.msra.mxu0 %v1142
    %1224 = vmatpush.msra.mxu0 %v1138
    %1225 = vmatpush.msra.mxu0 %v1134
    %1226 = vmatpush.msra.mxu0 %v1130
    %1227 = vmatpush.msra.mxu0 %v1126
    %1228 = vmatpush.msra.mxu0 %v1122
    %1229 = vmatpush.msra.mxu0 %v1118
    %1230 = vmatpush.msra.mxu0 %v1114
    %1231 = vmatpush.msra.mxu0 %v1110
    %1232 = vmatpush.msra.mxu0 %v1106
    %1233 = vmatpush.msra.mxu0 %v1102
    %1234 = vmatpush.msra.mxu0 %v1098
    %1235 = vmatmul.f32.gmra.mxu0 %v1091
    %v1236 = vpop.f32.mrf.mxu0
    %v1237 = vadd.f32 0.0, %v1236
    %1238 = vdwg.mxu0
    %v1243 = vrot.slane %v1197, 7
    %v1244 = vrot.slane %v1217, 6
    %v1245 = vrot.slane %v1237, 5
    %v1246 = vsel %vm252, %v1177, %v1243
    %v1247 = vsel %vm1016, %v1244, %v1245
    %v1248 = vsel %vm1018, %v1246, %v1247
    %v1250 = vadd.f32 %v1094, %v1248
    %v1251 = vxor.u32 %v1250, 2147483648
    %v1252 = vmul.f32 %v1251, 1.442695
    %v1253 = vpow.pop %v1252
    %v1254 = vadd.f32 %v1253, 1.0
    %v1255 = vrcp.pop %v1254
    %v1256 = vmul.f32 %v1254, %v1255
    %v1257 = vsub.f32 1.0, %v1256
    %v1258 = vmul.f32 %v1255, %v1257
    %v1259 = vadd.f32 %v1255, %v1258
    %vm1260 = vweird.f32 %v1254
    %vm1261 = vweird.f32 %v1255
    %vm1262 = vmor %vm1260, %vm1261
    %v1263 = vsel %vm1262, %v1255, %v1259
    %v1264 = vand.u32 2147483647, %v1254
    %vm1265 = vcmp.eq.f32.partialorder %v1264, 8.507059e+37
    %v1266 = vand.u32 %v1254, 2147483648
    %v1267 = vor.u32 1.1754944e-38, %v1266
    %v1268 = vsel %vm1265, %v1267, %v1263
    %v1269 = vmul.f32 1.0, %v1268
    %v1271 = vrot.slane %v1250, 1
    %v1273 = vxor.u32 %v1271, 2147483648
    %v1274 = vmul.f32 %v1273, 1.442695
    %v1275 = vpow.pop %v1274
    %v1276 = vadd.f32 %v1275, 1.0
    %v1277 = vrcp.pop %v1276
    %v1278 = vmul.f32 %v1276, %v1277
    %v1279 = vsub.f32 1.0, %v1278
    %v1280 = vmul.f32 %v1277, %v1279
    %v1281 = vadd.f32 %v1277, %v1280
    %vm1282 = vweird.f32 %v1276
    %vm1283 = vweird.f32 %v1277
    %vm1284 = vmor %vm1282, %vm1283
    %v1285 = vsel %vm1284, %v1277, %v1281
    %v1286 = vand.u32 2147483647, %v1276
    %vm1287 = vcmp.eq.f32.partialorder %v1286, 8.507059e+37
    %v1288 = vand.u32 %v1276, 2147483648
    %v1289 = vor.u32 1.1754944e-38, %v1288
    %v1290 = vsel %vm1287, %v1289, %v1285
    %v1291 = vmul.f32 1.0, %v1290
    %v1292 = vrot.slane %v1250, 2
    %v1294 = vtanh.pop %v1292
    %v1295 = vrot.slane %v1250, 3
    %v1297 = vxor.u32 %v1295, 2147483648
    %v1298 = vmul.f32 %v1297, 1.442695
    %v1299 = vpow.pop %v1298
    %v1300 = vadd.f32 %v1299, 1.0
    %v1301 = vrcp.pop %v1300
    %v1302 = vmul.f32 %v1300, %v1301
    %v1303 = vsub.f32 1.0, %v1302
    %v1304 = vmul.f32 %v1301, %v1303
    %v1305 = vadd.f32 %v1301, %v1304
    %vm1306 = vweird.f32 %v1300
    %vm1307 = vweird.f32 %v1301
    %vm1308 = vmor %vm1306, %vm1307
    %v1309 = vsel %vm1308, %v1301, %v1305
    %v1310 = vand.u32 2147483647, %v1300
    %vm1311 = vcmp.eq.f32.partialorder %v1310, 8.507059e+37
    %v1312 = vand.u32 %v1300, 2147483648
    %v1313 = vor.u32 1.1754944e-38, %v1312
    %v1314 = vsel %vm1311, %v1313, %v1309
    %v1315 = vmul.f32 1.0, %v1314
    %v1316 = vmul.f32 %v1291, %v1089
    %v1317 = vmul.f32 %v1269, %v1294
    %v1318 = vadd.f32 %v1316, %v1317
    %v1319 = vtanh.pop %v1318
    %v1320 = vmul.f32 %v1315, %v1319
    %1321 = vst [vmem:[#allocation3 + $0x1] sm:$0x1] %v1320
    %s1322 = scalar_lea.vmem [#allocation2], 2
    %v1323 = vld [vmem:[%s1322] ss:$8 sm:$0xf]
    %v1324 = vld [vmem:[#allocation15] sm:$0xff]
    %v1325 = vld [vmem:[#allocation15 + $0x8] sm:$0xff]
    %v1326 = vld [vmem:[#allocation15 + $0x10] sm:$0xff]
    %v1327 = vld [vmem:[#allocation15 + $0x18] sm:$0xff]
    %v1328 = vld [vmem:[#allocation15 + $0x20] sm:$0xff]
    %v1329 = vld [vmem:[#allocation15 + $0x28] sm:$0xff]
    %v1330 = vld [vmem:[#allocation15 + $0x30] sm:$0xff]
    %v1331 = vld [vmem:[#allocation15 + $0x38] sm:$0xff]
    %v1332 = vld [vmem:[#allocation15 + $0x40] sm:$0xff]
    %v1333 = vld [vmem:[#allocation15 + $0x48] sm:$0xff]
    %v1334 = vld [vmem:[#allocation15 + $0x50] sm:$0xff]
    %v1335 = vld [vmem:[#allocation15 + $0x58] sm:$0xff]
    %v1336 = vld [vmem:[#allocation15 + $0x60] sm:$0xff]
    %v1337 = vld [vmem:[#allocation15 + $0x68] sm:$0xff]
    %v1338 = vld [vmem:[#allocation15 + $0x70] sm:$0xff]
    %v1339 = vld [vmem:[#allocation15 + $0x78] sm:$0xff]
    %v1340 = vld [vmem:[#allocation15 + $0x80] sm:$0xff]
    %v1341 = vld [vmem:[#allocation15 + $0x88] sm:$0xff]
    %v1342 = vld [vmem:[#allocation15 + $0x90] sm:$0xff]
    %v1343 = vld [vmem:[#allocation15 + $0x98] sm:$0xff]
    %v1344 = vld [vmem:[#allocation15 + $0xa0] sm:$0xff]
    %v1345 = vld [vmem:[#allocation15 + $0xa8] sm:$0xff]
    %v1346 = vld [vmem:[#allocation15 + $0xb0] sm:$0xff]
    %v1347 = vld [vmem:[#allocation15 + $0xb8] sm:$0xff]
    %v1348 = vld [vmem:[#allocation15 + $0xc0] sm:$0xff]
    %v1349 = vld [vmem:[#allocation15 + $0xc8] sm:$0xff]
    %v1350 = vld [vmem:[#allocation15 + $0xd0] sm:$0xff]
    %v1351 = vld [vmem:[#allocation15 + $0xd8] sm:$0xff]
    %v1352 = vld [vmem:[#allocation15 + $0xe0] sm:$0xff]
    %v1353 = vld [vmem:[#allocation15 + $0xe8] sm:$0xff]
    %v1354 = vld [vmem:[#allocation15 + $0xf0] sm:$0xff]
    %v1355 = vld [vmem:[#allocation15 + $0xf8] sm:$0xff]
    %v1356 = vld [vmem:[#allocation15 + $0x100] sm:$0xff]
    %v1357 = vld [vmem:[#allocation15 + $0x108] sm:$0xff]
    %v1358 = vld [vmem:[#allocation15 + $0x110] sm:$0xff]
    %v1359 = vld [vmem:[#allocation15 + $0x118] sm:$0xff]
    %v1360 = vld [vmem:[#allocation15 + $0x120] sm:$0xff]
    %v1361 = vld [vmem:[#allocation15 + $0x128] sm:$0xff]
    %v1362 = vld [vmem:[#allocation15 + $0x130] sm:$0xff]
    %v1363 = vld [vmem:[#allocation15 + $0x138] sm:$0xff]
    %v1364 = vld [vmem:[#allocation15 + $0x140] sm:$0xff]
    %v1365 = vld [vmem:[#allocation15 + $0x148] sm:$0xff]
    %v1366 = vld [vmem:[#allocation15 + $0x150] sm:$0xff]
    %v1367 = vld [vmem:[#allocation15 + $0x158] sm:$0xff]
    %v1368 = vld [vmem:[#allocation15 + $0x160] sm:$0xff]
    %v1369 = vld [vmem:[#allocation15 + $0x168] sm:$0xff]
    %v1370 = vld [vmem:[#allocation15 + $0x170] sm:$0xff]
    %v1371 = vld [vmem:[#allocation15 + $0x178] sm:$0xff]
    %v1372 = vld [vmem:[#allocation15 + $0x180] sm:$0xff]
    %v1373 = vld [vmem:[#allocation15 + $0x188] sm:$0xff]
    %v1374 = vld [vmem:[#allocation15 + $0x190] sm:$0xff]
    %v1375 = vld [vmem:[#allocation15 + $0x198] sm:$0xff]
    %v1376 = vld [vmem:[#allocation15 + $0x1a0] sm:$0xff]
    %v1377 = vld [vmem:[#allocation15 + $0x1a8] sm:$0xff]
    %v1378 = vld [vmem:[#allocation15 + $0x1b0] sm:$0xff]
    %v1379 = vld [vmem:[#allocation15 + $0x1b8] sm:$0xff]
    %v1380 = vld [vmem:[#allocation15 + $0x1c0] sm:$0xff]
    %v1381 = vld [vmem:[#allocation15 + $0x1c8] sm:$0xff]
    %v1382 = vld [vmem:[#allocation15 + $0x1d0] sm:$0xff]
    %v1383 = vld [vmem:[#allocation15 + $0x1d8] sm:$0xff]
    %v1384 = vld [vmem:[#allocation15 + $0x1e0] sm:$0xff]
    %v1385 = vld [vmem:[#allocation15 + $0x1e8] sm:$0xff]
    %v1386 = vld [vmem:[#allocation15 + $0x1f0] sm:$0xff]
    %v1387 = vld [vmem:[#allocation15 + $0x1f8] sm:$0xff]
    %1388 = vmatpush.msra.mxu0 %v1384
    %1389 = vmatpush.msra.mxu0 %v1380
    %1390 = vmatpush.msra.mxu0 %v1376
    %1391 = vmatpush.msra.mxu0 %v1372
    %1392 = vmatpush.msra.mxu0 %v1368
    %1393 = vmatpush.msra.mxu0 %v1364
    %1394 = vmatpush.msra.mxu0 %v1360
    %1395 = vmatpush.msra.mxu0 %v1356
    %1396 = vmatpush.msra.mxu0 %v1352
    %1397 = vmatpush.msra.mxu0 %v1348
    %1398 = vmatpush.msra.mxu0 %v1344
    %1399 = vmatpush.msra.mxu0 %v1340
    %1400 = vmatpush.msra.mxu0 %v1336
    %1401 = vmatpush.msra.mxu0 %v1332
    %1402 = vmatpush.msra.mxu0 %v1328
    %1403 = vmatpush.msra.mxu0 %v1324
    %1404 = vmatmul.f32.gmra.mxu0 %v1320
    %v1405 = vpop.f32.mrf.mxu0
    %v1406 = vadd.f32 0.0, %v1405
    %1407 = vdwg.mxu0
    %1408 = vmatpush.msra.mxu0 %v1385
    %1409 = vmatpush.msra.mxu0 %v1381
    %1410 = vmatpush.msra.mxu0 %v1377
    %1411 = vmatpush.msra.mxu0 %v1373
    %1412 = vmatpush.msra.mxu0 %v1369
    %1413 = vmatpush.msra.mxu0 %v1365
    %1414 = vmatpush.msra.mxu0 %v1361
    %1415 = vmatpush.msra.mxu0 %v1357
    %1416 = vmatpush.msra.mxu0 %v1353
    %1417 = vmatpush.msra.mxu0 %v1349
    %1418 = vmatpush.msra.mxu0 %v1345
    %1419 = vmatpush.msra.mxu0 %v1341
    %1420 = vmatpush.msra.mxu0 %v1337
    %1421 = vmatpush.msra.mxu0 %v1333
    %1422 = vmatpush.msra.mxu0 %v1329
    %1423 = vmatpush.msra.mxu0 %v1325
    %1424 = vmatmul.f32.gmra.mxu0 %v1320
    %v1425 = vpop.f32.mrf.mxu0
    %v1426 = vadd.f32 0.0, %v1425
    %1427 = vdwg.mxu0
    %1428 = vmatpush.msra.mxu0 %v1386
    %1429 = vmatpush.msra.mxu0 %v1382
    %1430 = vmatpush.msra.mxu0 %v1378
    %1431 = vmatpush.msra.mxu0 %v1374
    %1432 = vmatpush.msra.mxu0 %v1370
    %1433 = vmatpush.msra.mxu0 %v1366
    %1434 = vmatpush.msra.mxu0 %v1362
    %1435 = vmatpush.msra.mxu0 %v1358
    %1436 = vmatpush.msra.mxu0 %v1354
    %1437 = vmatpush.msra.mxu0 %v1350
    %1438 = vmatpush.msra.mxu0 %v1346
    %1439 = vmatpush.msra.mxu0 %v1342
    %1440 = vmatpush.msra.mxu0 %v1338
    %1441 = vmatpush.msra.mxu0 %v1334
    %1442 = vmatpush.msra.mxu0 %v1330
    %1443 = vmatpush.msra.mxu0 %v1326
    %1444 = vmatmul.f32.gmra.mxu0 %v1320
    %v1445 = vpop.f32.mrf.mxu0
    %v1446 = vadd.f32 0.0, %v1445
    %1447 = vdwg.mxu0
    %1448 = vmatpush.msra.mxu0 %v1387
    %1449 = vmatpush.msra.mxu0 %v1383
    %1450 = vmatpush.msra.mxu0 %v1379
    %1451 = vmatpush.msra.mxu0 %v1375
    %1452 = vmatpush.msra.mxu0 %v1371
    %1453 = vmatpush.msra.mxu0 %v1367
    %1454 = vmatpush.msra.mxu0 %v1363
    %1455 = vmatpush.msra.mxu0 %v1359
    %1456 = vmatpush.msra.mxu0 %v1355
    %1457 = vmatpush.msra.mxu0 %v1351
    %1458 = vmatpush.msra.mxu0 %v1347
    %1459 = vmatpush.msra.mxu0 %v1343
    %1460 = vmatpush.msra.mxu0 %v1339
    %1461 = vmatpush.msra.mxu0 %v1335
    %1462 = vmatpush.msra.mxu0 %v1331
    %1463 = vmatpush.msra.mxu0 %v1327
    %1464 = vmatmul.f32.gmra.mxu0 %v1320
    %v1465 = vpop.f32.mrf.mxu0
    %v1466 = vadd.f32 0.0, %v1465
    %1467 = vdwg.mxu0
    %v1472 = vrot.slane %v1426, 7
    %v1473 = vrot.slane %v1446, 6
    %v1474 = vrot.slane %v1466, 5
    %v1475 = vsel %vm252, %v1406, %v1472
    %v1476 = vsel %vm1016, %v1473, %v1474
    %v1477 = vsel %vm1018, %v1475, %v1476
    %v1479 = vadd.f32 %v1323, %v1477
    %v1480 = vxor.u32 %v1479, 2147483648
    %v1481 = vmul.f32 %v1480, 1.442695
    %v1482 = vpow.pop %v1481
    %v1483 = vadd.f32 %v1482, 1.0
    %v1484 = vrcp.pop %v1483
    %v1485 = vmul.f32 %v1483, %v1484
    %v1486 = vsub.f32 1.0, %v1485
    %v1487 = vmul.f32 %v1484, %v1486
    %v1488 = vadd.f32 %v1484, %v1487
    %vm1489 = vweird.f32 %v1483
    %vm1490 = vweird.f32 %v1484
    %vm1491 = vmor %vm1489, %vm1490
    %v1492 = vsel %vm1491, %v1484, %v1488
    %v1493 = vand.u32 2147483647, %v1483
    %vm1494 = vcmp.eq.f32.partialorder %v1493, 8.507059e+37
    %v1495 = vand.u32 %v1483, 2147483648
    %v1496 = vor.u32 1.1754944e-38, %v1495
    %v1497 = vsel %vm1494, %v1496, %v1492
    %v1498 = vmul.f32 1.0, %v1497
    %v1500 = vrot.slane %v1479, 1
    %v1502 = vxor.u32 %v1500, 2147483648
    %v1503 = vmul.f32 %v1502, 1.442695
    %v1504 = vpow.pop %v1503
    %v1505 = vadd.f32 %v1504, 1.0
    %v1506 = vrcp.pop %v1505
    %v1507 = vmul.f32 %v1505, %v1506
    %v1508 = vsub.f32 1.0, %v1507
    %v1509 = vmul.f32 %v1506, %v1508
    %v1510 = vadd.f32 %v1506, %v1509
    %vm1511 = vweird.f32 %v1505
    %vm1512 = vweird.f32 %v1506
    %vm1513 = vmor %vm1511, %vm1512
    %v1514 = vsel %vm1513, %v1506, %v1510
    %v1515 = vand.u32 2147483647, %v1505
    %vm1516 = vcmp.eq.f32.partialorder %v1515, 8.507059e+37
    %v1517 = vand.u32 %v1505, 2147483648
    %v1518 = vor.u32 1.1754944e-38, %v1517
    %v1519 = vsel %vm1516, %v1518, %v1514
    %v1520 = vmul.f32 1.0, %v1519
    %v1521 = vrot.slane %v1479, 2
    %v1523 = vtanh.pop %v1521
    %v1524 = vrot.slane %v1479, 3
    %v1526 = vxor.u32 %v1524, 2147483648
    %v1527 = vmul.f32 %v1526, 1.442695
    %v1528 = vpow.pop %v1527
    %v1529 = vadd.f32 %v1528, 1.0
    %v1530 = vrcp.pop %v1529
    %v1531 = vmul.f32 %v1529, %v1530
    %v1532 = vsub.f32 1.0, %v1531
    %v1533 = vmul.f32 %v1530, %v1532
    %v1534 = vadd.f32 %v1530, %v1533
    %vm1535 = vweird.f32 %v1529
    %vm1536 = vweird.f32 %v1530
    %vm1537 = vmor %vm1535, %vm1536
    %v1538 = vsel %vm1537, %v1530, %v1534
    %v1539 = vand.u32 2147483647, %v1529
    %vm1540 = vcmp.eq.f32.partialorder %v1539, 8.507059e+37
    %v1541 = vand.u32 %v1529, 2147483648
    %v1542 = vor.u32 1.1754944e-38, %v1541
    %v1543 = vsel %vm1540, %v1542, %v1538
    %v1544 = vmul.f32 1.0, %v1543
    %v1545 = vmul.f32 %v1520, %v1318
    %v1546 = vmul.f32 %v1498, %v1523
    %v1547 = vadd.f32 %v1545, %v1546
    %v1548 = vtanh.pop %v1547
    %v1549 = vmul.f32 %v1544, %v1548
    %1550 = vst [vmem:[#allocation3 + $0x2] sm:$0x1] %v1549
    %s1551 = scalar_lea.vmem [#allocation2], 3
    %v1552 = vld [vmem:[%s1551] ss:$8 sm:$0xf]
    %v1553 = vld [vmem:[#allocation15] sm:$0xff]
    %v1554 = vld [vmem:[#allocation15 + $0x8] sm:$0xff]
    %v1555 = vld [vmem:[#allocation15 + $0x10] sm:$0xff]
    %v1556 = vld [vmem:[#allocation15 + $0x18] sm:$0xff]
    %v1557 = vld [vmem:[#allocation15 + $0x20] sm:$0xff]
    %v1558 = vld [vmem:[#allocation15 + $0x28] sm:$0xff]
    %v1559 = vld [vmem:[#allocation15 + $0x30] sm:$0xff]
    %v1560 = vld [vmem:[#allocation15 + $0x38] sm:$0xff]
    %v1561 = vld [vmem:[#allocation15 + $0x40] sm:$0xff]
    %v1562 = vld [vmem:[#allocation15 + $0x48] sm:$0xff]
    %v1563 = vld [vmem:[#allocation15 + $0x50] sm:$0xff]
    %v1564 = vld [vmem:[#allocation15 + $0x58] sm:$0xff]
    %v1565 = vld [vmem:[#allocation15 + $0x60] sm:$0xff]
    %v1566 = vld [vmem:[#allocation15 + $0x68] sm:$0xff]
    %v1567 = vld [vmem:[#allocation15 + $0x70] sm:$0xff]
    %v1568 = vld [vmem:[#allocation15 + $0x78] sm:$0xff]
    %v1569 = vld [vmem:[#allocation15 + $0x80] sm:$0xff]
    %v1570 = vld [vmem:[#allocation15 + $0x88] sm:$0xff]
    %v1571 = vld [vmem:[#allocation15 + $0x90] sm:$0xff]
    %v1572 = vld [vmem:[#allocation15 + $0x98] sm:$0xff]
    %v1573 = vld [vmem:[#allocation15 + $0xa0] sm:$0xff]
    %v1574 = vld [vmem:[#allocation15 + $0xa8] sm:$0xff]
    %v1575 = vld [vmem:[#allocation15 + $0xb0] sm:$0xff]
    %v1576 = vld [vmem:[#allocation15 + $0xb8] sm:$0xff]
    %v1577 = vld [vmem:[#allocation15 + $0xc0] sm:$0xff]
    %v1578 = vld [vmem:[#allocation15 + $0xc8] sm:$0xff]
    %v1579 = vld [vmem:[#allocation15 + $0xd0] sm:$0xff]
    %v1580 = vld [vmem:[#allocation15 + $0xd8] sm:$0xff]
    %v1581 = vld [vmem:[#allocation15 + $0xe0] sm:$0xff]
    %v1582 = vld [vmem:[#allocation15 + $0xe8] sm:$0xff]
    %v1583 = vld [vmem:[#allocation15 + $0xf0] sm:$0xff]
    %v1584 = vld [vmem:[#allocation15 + $0xf8] sm:$0xff]
    %v1585 = vld [vmem:[#allocation15 + $0x100] sm:$0xff]
    %v1586 = vld [vmem:[#allocation15 + $0x108] sm:$0xff]
    %v1587 = vld [vmem:[#allocation15 + $0x110] sm:$0xff]
    %v1588 = vld [vmem:[#allocation15 + $0x118] sm:$0xff]
    %v1589 = vld [vmem:[#allocation15 + $0x120] sm:$0xff]
    %v1590 = vld [vmem:[#allocation15 + $0x128] sm:$0xff]
    %v1591 = vld [vmem:[#allocation15 + $0x130] sm:$0xff]
    %v1592 = vld [vmem:[#allocation15 + $0x138] sm:$0xff]
    %v1593 = vld [vmem:[#allocation15 + $0x140] sm:$0xff]
    %v1594 = vld [vmem:[#allocation15 + $0x148] sm:$0xff]
    %v1595 = vld [vmem:[#allocation15 + $0x150] sm:$0xff]
    %v1596 = vld [vmem:[#allocation15 + $0x158] sm:$0xff]
    %v1597 = vld [vmem:[#allocation15 + $0x160] sm:$0xff]
    %v1598 = vld [vmem:[#allocation15 + $0x168] sm:$0xff]
    %v1599 = vld [vmem:[#allocation15 + $0x170] sm:$0xff]
    %v1600 = vld [vmem:[#allocation15 + $0x178] sm:$0xff]
    %v1601 = vld [vmem:[#allocation15 + $0x180] sm:$0xff]
    %v1602 = vld [vmem:[#allocation15 + $0x188] sm:$0xff]
    %v1603 = vld [vmem:[#allocation15 + $0x190] sm:$0xff]
    %v1604 = vld [vmem:[#allocation15 + $0x198] sm:$0xff]
    %v1605 = vld [vmem:[#allocation15 + $0x1a0] sm:$0xff]
    %v1606 = vld [vmem:[#allocation15 + $0x1a8] sm:$0xff]
    %v1607 = vld [vmem:[#allocation15 + $0x1b0] sm:$0xff]
    %v1608 = vld [vmem:[#allocation15 + $0x1b8] sm:$0xff]
    %v1609 = vld [vmem:[#allocation15 + $0x1c0] sm:$0xff]
    %v1610 = vld [vmem:[#allocation15 + $0x1c8] sm:$0xff]
    %v1611 = vld [vmem:[#allocation15 + $0x1d0] sm:$0xff]
    %v1612 = vld [vmem:[#allocation15 + $0x1d8] sm:$0xff]
    %v1613 = vld [vmem:[#allocation15 + $0x1e0] sm:$0xff]
    %v1614 = vld [vmem:[#allocation15 + $0x1e8] sm:$0xff]
    %v1615 = vld [vmem:[#allocation15 + $0x1f0] sm:$0xff]
    %v1616 = vld [vmem:[#allocation15 + $0x1f8] sm:$0xff]
    %1617 = vmatpush.msra.mxu0 %v1613
    %1618 = vmatpush.msra.mxu0 %v1609
    %1619 = vmatpush.msra.mxu0 %v1605
    %1620 = vmatpush.msra.mxu0 %v1601
    %1621 = vmatpush.msra.mxu0 %v1597
    %1622 = vmatpush.msra.mxu0 %v1593
    %1623 = vmatpush.msra.mxu0 %v1589
    %1624 = vmatpush.msra.mxu0 %v1585
    %1625 = vmatpush.msra.mxu0 %v1581
    %1626 = vmatpush.msra.mxu0 %v1577
    %1627 = vmatpush.msra.mxu0 %v1573
    %1628 = vmatpush.msra.mxu0 %v1569
    %1629 = vmatpush.msra.mxu0 %v1565
    %1630 = vmatpush.msra.mxu0 %v1561
    %1631 = vmatpush.msra.mxu0 %v1557
    %1632 = vmatpush.msra.mxu0 %v1553
    %1633 = vmatmul.f32.gmra.mxu0 %v1549
    %v1634 = vpop.f32.mrf.mxu0
    %v1635 = vadd.f32 0.0, %v1634
    %1636 = vdwg.mxu0
    %1637 = vmatpush.msra.mxu0 %v1614
    %1638 = vmatpush.msra.mxu0 %v1610
    %1639 = vmatpush.msra.mxu0 %v1606
    %1640 = vmatpush.msra.mxu0 %v1602
    %1641 = vmatpush.msra.mxu0 %v1598
    %1642 = vmatpush.msra.mxu0 %v1594
    %1643 = vmatpush.msra.mxu0 %v1590
    %1644 = vmatpush.msra.mxu0 %v1586
    %1645 = vmatpush.msra.mxu0 %v1582
    %1646 = vmatpush.msra.mxu0 %v1578
    %1647 = vmatpush.msra.mxu0 %v1574
    %1648 = vmatpush.msra.mxu0 %v1570
    %1649 = vmatpush.msra.mxu0 %v1566
    %1650 = vmatpush.msra.mxu0 %v1562
    %1651 = vmatpush.msra.mxu0 %v1558
    %1652 = vmatpush.msra.mxu0 %v1554
    %1653 = vmatmul.f32.gmra.mxu0 %v1549
    %v1654 = vpop.f32.mrf.mxu0
    %v1655 = vadd.f32 0.0, %v1654
    %1656 = vdwg.mxu0
    %1657 = vmatpush.msra.mxu0 %v1615
    %1658 = vmatpush.msra.mxu0 %v1611
    %1659 = vmatpush.msra.mxu0 %v1607
    %1660 = vmatpush.msra.mxu0 %v1603
    %1661 = vmatpush.msra.mxu0 %v1599
    %1662 = vmatpush.msra.mxu0 %v1595
    %1663 = vmatpush.msra.mxu0 %v1591
    %1664 = vmatpush.msra.mxu0 %v1587
    %1665 = vmatpush.msra.mxu0 %v1583
    %1666 = vmatpush.msra.mxu0 %v1579
    %1667 = vmatpush.msra.mxu0 %v1575
    %1668 = vmatpush.msra.mxu0 %v1571
    %1669 = vmatpush.msra.mxu0 %v1567
    %1670 = vmatpush.msra.mxu0 %v1563
    %1671 = vmatpush.msra.mxu0 %v1559
    %1672 = vmatpush.msra.mxu0 %v1555
    %1673 = vmatmul.f32.gmra.mxu0 %v1549
    %v1674 = vpop.f32.mrf.mxu0
    %v1675 = vadd.f32 0.0, %v1674
    %1676 = vdwg.mxu0
    %1677 = vmatpush.msra.mxu0 %v1616
    %1678 = vmatpush.msra.mxu0 %v1612
    %1679 = vmatpush.msra.mxu0 %v1608
    %1680 = vmatpush.msra.mxu0 %v1604
    %1681 = vmatpush.msra.mxu0 %v1600
    %1682 = vmatpush.msra.mxu0 %v1596
    %1683 = vmatpush.msra.mxu0 %v1592
    %1684 = vmatpush.msra.mxu0 %v1588
    %1685 = vmatpush.msra.mxu0 %v1584
    %1686 = vmatpush.msra.mxu0 %v1580
    %1687 = vmatpush.msra.mxu0 %v1576
    %1688 = vmatpush.msra.mxu0 %v1572
    %1689 = vmatpush.msra.mxu0 %v1568
    %1690 = vmatpush.msra.mxu0 %v1564
    %1691 = vmatpush.msra.mxu0 %v1560
    %1692 = vmatpush.msra.mxu0 %v1556
    %1693 = vmatmul.f32.gmra.mxu0 %v1549
    %v1694 = vpop.f32.mrf.mxu0
    %v1695 = vadd.f32 0.0, %v1694
    %1696 = vdwg.mxu0
    %v1701 = vrot.slane %v1655, 7
    %v1702 = vrot.slane %v1675, 6
    %v1703 = vrot.slane %v1695, 5
    %v1704 = vsel %vm252, %v1635, %v1701
    %v1705 = vsel %vm1016, %v1702, %v1703
    %v1706 = vsel %vm1018, %v1704, %v1705
    %v1708 = vadd.f32 %v1552, %v1706
    %v1709 = vxor.u32 %v1708, 2147483648
    %v1710 = vmul.f32 %v1709, 1.442695
    %v1711 = vpow.pop %v1710
    %v1712 = vadd.f32 %v1711, 1.0
    %v1713 = vrcp.pop %v1712
    %v1714 = vmul.f32 %v1712, %v1713
    %v1715 = vsub.f32 1.0, %v1714
    %v1716 = vmul.f32 %v1713, %v1715
    %v1717 = vadd.f32 %v1713, %v1716
    %vm1718 = vweird.f32 %v1712
    %vm1719 = vweird.f32 %v1713
    %vm1720 = vmor %vm1718, %vm1719
    %v1721 = vsel %vm1720, %v1713, %v1717
    %v1722 = vand.u32 2147483647, %v1712
    %vm1723 = vcmp.eq.f32.partialorder %v1722, 8.507059e+37
    %v1724 = vand.u32 %v1712, 2147483648
    %v1725 = vor.u32 1.1754944e-38, %v1724
    %v1726 = vsel %vm1723, %v1725, %v1721
    %v1727 = vmul.f32 1.0, %v1726
    %v1729 = vrot.slane %v1708, 1
    %v1731 = vxor.u32 %v1729, 2147483648
    %v1732 = vmul.f32 %v1731, 1.442695
    %v1733 = vpow.pop %v1732
    %v1734 = vadd.f32 %v1733, 1.0
    %v1735 = vrcp.pop %v1734
    %v1736 = vmul.f32 %v1734, %v1735
    %v1737 = vsub.f32 1.0, %v1736
    %v1738 = vmul.f32 %v1735, %v1737
    %v1739 = vadd.f32 %v1735, %v1738
    %vm1740 = vweird.f32 %v1734
    %vm1741 = vweird.f32 %v1735
    %vm1742 = vmor %vm1740, %vm1741
    %v1743 = vsel %vm1742, %v1735, %v1739
    %v1744 = vand.u32 2147483647, %v1734
    %vm1745 = vcmp.eq.f32.partialorder %v1744, 8.507059e+37
    %v1746 = vand.u32 %v1734, 2147483648
    %v1747 = vor.u32 1.1754944e-38, %v1746
    %v1748 = vsel %vm1745, %v1747, %v1743
    %v1749 = vmul.f32 1.0, %v1748
    %v1750 = vrot.slane %v1708, 2
    %v1752 = vtanh.pop %v1750
    %v1753 = vrot.slane %v1708, 3
    %v1755 = vxor.u32 %v1753, 2147483648
    %v1756 = vmul.f32 %v1755, 1.442695
    %v1757 = vpow.pop %v1756
    %v1758 = vadd.f32 %v1757, 1.0
    %v1759 = vrcp.pop %v1758
    %v1760 = vmul.f32 %v1758, %v1759
    %v1761 = vsub.f32 1.0, %v1760
    %v1762 = vmul.f32 %v1759, %v1761
    %v1763 = vadd.f32 %v1759, %v1762
    %vm1764 = vweird.f32 %v1758
    %vm1765 = vweird.f32 %v1759
    %vm1766 = vmor %vm1764, %vm1765
    %v1767 = vsel %vm1766, %v1759, %v1763
    %v1768 = vand.u32 2147483647, %v1758
    %vm1769 = vcmp.eq.f32.partialorder %v1768, 8.507059e+37
    %v1770 = vand.u32 %v1758, 2147483648
    %v1771 = vor.u32 1.1754944e-38, %v1770
    %v1772 = vsel %vm1769, %v1771, %v1767
    %v1773 = vmul.f32 1.0, %v1772
    %v1774 = vmul.f32 %v1749, %v1547
    %v1775 = vmul.f32 %v1727, %v1752
    %v1776 = vadd.f32 %v1774, %v1775
    %v1777 = vtanh.pop %v1776
    %v1778 = vmul.f32 %v1773, %v1777
    %1779 = vst [vmem:[#allocation3 + $0x3] sm:$0x1] %v1778
    %s1780 = scalar_lea.vmem [#allocation2], 4
    %v1781 = vld [vmem:[%s1780] ss:$8 sm:$0xf]
    %v1782 = vld [vmem:[#allocation15] sm:$0xff]
    %v1783 = vld [vmem:[#allocation15 + $0x8] sm:$0xff]
    %v1784 = vld [vmem:[#allocation15 + $0x10] sm:$0xff]
    %v1785 = vld [vmem:[#allocation15 + $0x18] sm:$0xff]
    %v1786 = vld [vmem:[#allocation15 + $0x20] sm:$0xff]
    %v1787 = vld [vmem:[#allocation15 + $0x28] sm:$0xff]
    %v1788 = vld [vmem:[#allocation15 + $0x30] sm:$0xff]
    %v1789 = vld [vmem:[#allocation15 + $0x38] sm:$0xff]
    %v1790 = vld [vmem:[#allocation15 + $0x40] sm:$0xff]
    %v1791 = vld [vmem:[#allocation15 + $0x48] sm:$0xff]
    %v1792 = vld [vmem:[#allocation15 + $0x50] sm:$0xff]
    %v1793 = vld [vmem:[#allocation15 + $0x58] sm:$0xff]
    %v1794 = vld [vmem:[#allocation15 + $0x60] sm:$0xff]
    %v1795 = vld [vmem:[#allocation15 + $0x68] sm:$0xff]
    %v1796 = vld [vmem:[#allocation15 + $0x70] sm:$0xff]
    %v1797 = vld [vmem:[#allocation15 + $0x78] sm:$0xff]
    %v1798 = vld [vmem:[#allocation15 + $0x80] sm:$0xff]
    %v1799 = vld [vmem:[#allocation15 + $0x88] sm:$0xff]
    %v1800 = vld [vmem:[#allocation15 + $0x90] sm:$0xff]
    %v1801 = vld [vmem:[#allocation15 + $0x98] sm:$0xff]
    %v1802 = vld [vmem:[#allocation15 + $0xa0] sm:$0xff]
    %v1803 = vld [vmem:[#allocation15 + $0xa8] sm:$0xff]
    %v1804 = vld [vmem:[#allocation15 + $0xb0] sm:$0xff]
    %v1805 = vld [vmem:[#allocation15 + $0xb8] sm:$0xff]
    %v1806 = vld [vmem:[#allocation15 + $0xc0] sm:$0xff]
    %v1807 = vld [vmem:[#allocation15 + $0xc8] sm:$0xff]
    %v1808 = vld [vmem:[#allocation15 + $0xd0] sm:$0xff]
    %v1809 = vld [vmem:[#allocation15 + $0xd8] sm:$0xff]
    %v1810 = vld [vmem:[#allocation15 + $0xe0] sm:$0xff]
    %v1811 = vld [vmem:[#allocation15 + $0xe8] sm:$0xff]
    %v1812 = vld [vmem:[#allocation15 + $0xf0] sm:$0xff]
    %v1813 = vld [vmem:[#allocation15 + $0xf8] sm:$0xff]
    %v1814 = vld [vmem:[#allocation15 + $0x100] sm:$0xff]
    %v1815 = vld [vmem:[#allocation15 + $0x108] sm:$0xff]
    %v1816 = vld [vmem:[#allocation15 + $0x110] sm:$0xff]
    %v1817 = vld [vmem:[#allocation15 + $0x118] sm:$0xff]
    %v1818 = vld [vmem:[#allocation15 + $0x120] sm:$0xff]
    %v1819 = vld [vmem:[#allocation15 + $0x128] sm:$0xff]
    %v1820 = vld [vmem:[#allocation15 + $0x130] sm:$0xff]
    %v1821 = vld [vmem:[#allocation15 + $0x138] sm:$0xff]
    %v1822 = vld [vmem:[#allocation15 + $0x140] sm:$0xff]
    %v1823 = vld [vmem:[#allocation15 + $0x148] sm:$0xff]
    %v1824 = vld [vmem:[#allocation15 + $0x150] sm:$0xff]
    %v1825 = vld [vmem:[#allocation15 + $0x158] sm:$0xff]
    %v1826 = vld [vmem:[#allocation15 + $0x160] sm:$0xff]
    %v1827 = vld [vmem:[#allocation15 + $0x168] sm:$0xff]
    %v1828 = vld [vmem:[#allocation15 + $0x170] sm:$0xff]
    %v1829 = vld [vmem:[#allocation15 + $0x178] sm:$0xff]
    %v1830 = vld [vmem:[#allocation15 + $0x180] sm:$0xff]
    %v1831 = vld [vmem:[#allocation15 + $0x188] sm:$0xff]
    %v1832 = vld [vmem:[#allocation15 + $0x190] sm:$0xff]
    %v1833 = vld [vmem:[#allocation15 + $0x198] sm:$0xff]
    %v1834 = vld [vmem:[#allocation15 + $0x1a0] sm:$0xff]
    %v1835 = vld [vmem:[#allocation15 + $0x1a8] sm:$0xff]
    %v1836 = vld [vmem:[#allocation15 + $0x1b0] sm:$0xff]
    %v1837 = vld [vmem:[#allocation15 + $0x1b8] sm:$0xff]
    %v1838 = vld [vmem:[#allocation15 + $0x1c0] sm:$0xff]
    %v1839 = vld [vmem:[#allocation15 + $0x1c8] sm:$0xff]
    %v1840 = vld [vmem:[#allocation15 + $0x1d0] sm:$0xff]
    %v1841 = vld [vmem:[#allocation15 + $0x1d8] sm:$0xff]
    %v1842 = vld [vmem:[#allocation15 + $0x1e0] sm:$0xff]
    %v1843 = vld [vmem:[#allocation15 + $0x1e8] sm:$0xff]
    %v1844 = vld [vmem:[#allocation15 + $0x1f0] sm:$0xff]
    %v1845 = vld [vmem:[#allocation15 + $0x1f8] sm:$0xff]
    %1846 = vmatpush.msra.mxu0 %v1842
    %1847 = vmatpush.msra.mxu0 %v1838
    %1848 = vmatpush.msra.mxu0 %v1834
    %1849 = vmatpush.msra.mxu0 %v1830
    %1850 = vmatpush.msra.mxu0 %v1826
    %1851 = vmatpush.msra.mxu0 %v1822
    %1852 = vmatpush.msra.mxu0 %v1818
    %1853 = vmatpush.msra.mxu0 %v1814
    %1854 = vmatpush.msra.mxu0 %v1810
    %1855 = vmatpush.msra.mxu0 %v1806
    %1856 = vmatpush.msra.mxu0 %v1802
    %1857 = vmatpush.msra.mxu0 %v1798
    %1858 = vmatpush.msra.mxu0 %v1794
    %1859 = vmatpush.msra.mxu0 %v1790
    %1860 = vmatpush.msra.mxu0 %v1786
    %1861 = vmatpush.msra.mxu0 %v1782
    %1862 = vmatmul.f32.gmra.mxu0 %v1778
    %v1863 = vpop.f32.mrf.mxu0
    %v1864 = vadd.f32 0.0, %v1863
    %1865 = vdwg.mxu0
    %1866 = vmatpush.msra.mxu0 %v1843
    %1867 = vmatpush.msra.mxu0 %v1839
    %1868 = vmatpush.msra.mxu0 %v1835
    %1869 = vmatpush.msra.mxu0 %v1831
    %1870 = vmatpush.msra.mxu0 %v1827
    %1871 = vmatpush.msra.mxu0 %v1823
    %1872 = vmatpush.msra.mxu0 %v1819
    %1873 = vmatpush.msra.mxu0 %v1815
    %1874 = vmatpush.msra.mxu0 %v1811
    %1875 = vmatpush.msra.mxu0 %v1807
    %1876 = vmatpush.msra.mxu0 %v1803
    %1877 = vmatpush.msra.mxu0 %v1799
    %1878 = vmatpush.msra.mxu0 %v1795
    %1879 = vmatpush.msra.mxu0 %v1791
    %1880 = vmatpush.msra.mxu0 %v1787
    %1881 = vmatpush.msra.mxu0 %v1783
    %1882 = vmatmul.f32.gmra.mxu0 %v1778
    %v1883 = vpop.f32.mrf.mxu0
    %v1884 = vadd.f32 0.0, %v1883
    %1885 = vdwg.mxu0
    %1886 = vmatpush.msra.mxu0 %v1844
    %1887 = vmatpush.msra.mxu0 %v1840
    %1888 = vmatpush.msra.mxu0 %v1836
    %1889 = vmatpush.msra.mxu0 %v1832
    %1890 = vmatpush.msra.mxu0 %v1828
    %1891 = vmatpush.msra.mxu0 %v1824
    %1892 = vmatpush.msra.mxu0 %v1820
    %1893 = vmatpush.msra.mxu0 %v1816
    %1894 = vmatpush.msra.mxu0 %v1812
    %1895 = vmatpush.msra.mxu0 %v1808
    %1896 = vmatpush.msra.mxu0 %v1804
    %1897 = vmatpush.msra.mxu0 %v1800
    %1898 = vmatpush.msra.mxu0 %v1796
    %1899 = vmatpush.msra.mxu0 %v1792
    %1900 = vmatpush.msra.mxu0 %v1788
    %1901 = vmatpush.msra.mxu0 %v1784
    %1902 = vmatmul.f32.gmra.mxu0 %v1778
    %v1903 = vpop.f32.mrf.mxu0
    %v1904 = vadd.f32 0.0, %v1903
    %1905 = vdwg.mxu0
    %1906 = vmatpush.msra.mxu0 %v1845
    %1907 = vmatpush.msra.mxu0 %v1841
    %1908 = vmatpush.msra.mxu0 %v1837
    %1909 = vmatpush.msra.mxu0 %v1833
    %1910 = vmatpush.msra.mxu0 %v1829
    %1911 = vmatpush.msra.mxu0 %v1825
    %1912 = vmatpush.msra.mxu0 %v1821
    %1913 = vmatpush.msra.mxu0 %v1817
    %1914 = vmatpush.msra.mxu0 %v1813
    %1915 = vmatpush.msra.mxu0 %v1809
    %1916 = vmatpush.msra.mxu0 %v1805
    %1917 = vmatpush.msra.mxu0 %v1801
    %1918 = vmatpush.msra.mxu0 %v1797
    %1919 = vmatpush.msra.mxu0 %v1793
    %1920 = vmatpush.msra.mxu0 %v1789
    %1921 = vmatpush.msra.mxu0 %v1785
    %1922 = vmatmul.f32.gmra.mxu0 %v1778
    %v1923 = vpop.f32.mrf.mxu0
    %v1924 = vadd.f32 0.0, %v1923
    %1925 = vdwg.mxu0
    %v1930 = vrot.slane %v1884, 7
    %v1931 = vrot.slane %v1904, 6
    %v1932 = vrot.slane %v1924, 5
    %v1933 = vsel %vm252, %v1864, %v1930
    %v1934 = vsel %vm1016, %v1931, %v1932
    %v1935 = vsel %vm1018, %v1933, %v1934
    %v1937 = vadd.f32 %v1781, %v1935
    %v1938 = vxor.u32 %v1937, 2147483648
    %v1939 = vmul.f32 %v1938, 1.442695
    %v1940 = vpow.pop %v1939
    %v1941 = vadd.f32 %v1940, 1.0
    %v1942 = vrcp.pop %v1941
    %v1943 = vmul.f32 %v1941, %v1942
    %v1944 = vsub.f32 1.0, %v1943
    %v1945 = vmul.f32 %v1942, %v1944
    %v1946 = vadd.f32 %v1942, %v1945
    %vm1947 = vweird.f32 %v1941
    %vm1948 = vweird.f32 %v1942
    %vm1949 = vmor %vm1947, %vm1948
    %v1950 = vsel %vm1949, %v1942, %v1946
    %v1951 = vand.u32 2147483647, %v1941
    %vm1952 = vcmp.eq.f32.partialorder %v1951, 8.507059e+37
    %v1953 = vand.u32 %v1941, 2147483648
    %v1954 = vor.u32 1.1754944e-38, %v1953
    %v1955 = vsel %vm1952, %v1954, %v1950
    %v1956 = vmul.f32 1.0, %v1955
    %v1958 = vrot.slane %v1937, 1
    %v1960 = vxor.u32 %v1958, 2147483648
    %v1961 = vmul.f32 %v1960, 1.442695
    %v1962 = vpow.pop %v1961
    %v1963 = vadd.f32 %v1962, 1.0
    %v1964 = vrcp.pop %v1963
    %v1965 = vmul.f32 %v1963, %v1964
    %v1966 = vsub.f32 1.0, %v1965
    %v1967 = vmul.f32 %v1964, %v1966
    %v1968 = vadd.f32 %v1964, %v1967
    %vm1969 = vweird.f32 %v1963
    %vm1970 = vweird.f32 %v1964
    %vm1971 = vmor %vm1969, %vm1970
    %v1972 = vsel %vm1971, %v1964, %v1968
    %v1973 = vand.u32 2147483647, %v1963
    %vm1974 = vcmp.eq.f32.partialorder %v1973, 8.507059e+37
    %v1975 = vand.u32 %v1963, 2147483648
    %v1976 = vor.u32 1.1754944e-38, %v1975
    %v1977 = vsel %vm1974, %v1976, %v1972
    %v1978 = vmul.f32 1.0, %v1977
    %v1979 = vrot.slane %v1937, 2
    %v1981 = vtanh.pop %v1979
    %v1982 = vrot.slane %v1937, 3
    %v1984 = vxor.u32 %v1982, 2147483648
    %v1985 = vmul.f32 %v1984, 1.442695
    %v1986 = vpow.pop %v1985
    %v1987 = vadd.f32 %v1986, 1.0
    %v1988 = vrcp.pop %v1987
    %v1989 = vmul.f32 %v1987, %v1988
    %v1990 = vsub.f32 1.0, %v1989
    %v1991 = vmul.f32 %v1988, %v1990
    %v1992 = vadd.f32 %v1988, %v1991
    %vm1993 = vweird.f32 %v1987
    %vm1994 = vweird.f32 %v1988
    %vm1995 = vmor %vm1993, %vm1994
    %v1996 = vsel %vm1995, %v1988, %v1992
    %v1997 = vand.u32 2147483647, %v1987
    %vm1998 = vcmp.eq.f32.partialorder %v1997, 8.507059e+37
    %v1999 = vand.u32 %v1987, 2147483648
    %v2000 = vor.u32 1.1754944e-38, %v1999
    %v2001 = vsel %vm1998, %v2000, %v1996
    %v2002 = vmul.f32 1.0, %v2001
    %v2003 = vmul.f32 %v1978, %v1776
    %v2004 = vmul.f32 %v1956, %v1981
    %v2005 = vadd.f32 %v2003, %v2004
    %v2006 = vtanh.pop %v2005
    %v2007 = vmul.f32 %v2002, %v2006
    %2008 = vst [vmem:[#allocation3 + $0x4] sm:$0x1] %v2007
    %s2009 = scalar_lea.vmem [#allocation2], 5
    %v2010 = vld [vmem:[%s2009] ss:$8 sm:$0xf]
    %v2011 = vld [vmem:[#allocation15] sm:$0xff]
    %v2012 = vld [vmem:[#allocation15 + $0x8] sm:$0xff]
    %v2013 = vld [vmem:[#allocation15 + $0x10] sm:$0xff]
    %v2014 = vld [vmem:[#allocation15 + $0x18] sm:$0xff]
    %v2015 = vld [vmem:[#allocation15 + $0x20] sm:$0xff]
    %v2016 = vld [vmem:[#allocation15 + $0x28] sm:$0xff]
    %v2017 = vld [vmem:[#allocation15 + $0x30] sm:$0xff]
    %v2018 = vld [vmem:[#allocation15 + $0x38] sm:$0xff]
    %v2019 = vld [vmem:[#allocation15 + $0x40] sm:$0xff]
    %v2020 = vld [vmem:[#allocation15 + $0x48] sm:$0xff]
    %v2021 = vld [vmem:[#allocation15 + $0x50] sm:$0xff]
    %v2022 = vld [vmem:[#allocation15 + $0x58] sm:$0xff]
    %v2023 = vld [vmem:[#allocation15 + $0x60] sm:$0xff]
    %v2024 = vld [vmem:[#allocation15 + $0x68] sm:$0xff]
    %v2025 = vld [vmem:[#allocation15 + $0x70] sm:$0xff]
    %v2026 = vld [vmem:[#allocation15 + $0x78] sm:$0xff]
    %v2027 = vld [vmem:[#allocation15 + $0x80] sm:$0xff]
    %v2028 = vld [vmem:[#allocation15 + $0x88] sm:$0xff]
    %v2029 = vld [vmem:[#allocation15 + $0x90] sm:$0xff]
    %v2030 = vld [vmem:[#allocation15 + $0x98] sm:$0xff]
    %v2031 = vld [vmem:[#allocation15 + $0xa0] sm:$0xff]
    %v2032 = vld [vmem:[#allocation15 + $0xa8] sm:$0xff]
    %v2033 = vld [vmem:[#allocation15 + $0xb0] sm:$0xff]
    %v2034 = vld [vmem:[#allocation15 + $0xb8] sm:$0xff]
    %v2035 = vld [vmem:[#allocation15 + $0xc0] sm:$0xff]
    %v2036 = vld [vmem:[#allocation15 + $0xc8] sm:$0xff]
    %v2037 = vld [vmem:[#allocation15 + $0xd0] sm:$0xff]
    %v2038 = vld [vmem:[#allocation15 + $0xd8] sm:$0xff]
    %v2039 = vld [vmem:[#allocation15 + $0xe0] sm:$0xff]
    %v2040 = vld [vmem:[#allocation15 + $0xe8] sm:$0xff]
    %v2041 = vld [vmem:[#allocation15 + $0xf0] sm:$0xff]
    %v2042 = vld [vmem:[#allocation15 + $0xf8] sm:$0xff]
    %v2043 = vld [vmem:[#allocation15 + $0x100] sm:$0xff]
    %v2044 = vld [vmem:[#allocation15 + $0x108] sm:$0xff]
    %v2045 = vld [vmem:[#allocation15 + $0x110] sm:$0xff]
    %v2046 = vld [vmem:[#allocation15 + $0x118] sm:$0xff]
    %v2047 = vld [vmem:[#allocation15 + $0x120] sm:$0xff]
    %v2048 = vld [vmem:[#allocation15 + $0x128] sm:$0xff]
    %v2049 = vld [vmem:[#allocation15 + $0x130] sm:$0xff]
    %v2050 = vld [vmem:[#allocation15 + $0x138] sm:$0xff]
    %v2051 = vld [vmem:[#allocation15 + $0x140] sm:$0xff]
    %v2052 = vld [vmem:[#allocation15 + $0x148] sm:$0xff]
    %v2053 = vld [vmem:[#allocation15 + $0x150] sm:$0xff]
    %v2054 = vld [vmem:[#allocation15 + $0x158] sm:$0xff]
    %v2055 = vld [vmem:[#allocation15 + $0x160] sm:$0xff]
    %v2056 = vld [vmem:[#allocation15 + $0x168] sm:$0xff]
    %v2057 = vld [vmem:[#allocation15 + $0x170] sm:$0xff]
    %v2058 = vld [vmem:[#allocation15 + $0x178] sm:$0xff]
    %v2059 = vld [vmem:[#allocation15 + $0x180] sm:$0xff]
    %v2060 = vld [vmem:[#allocation15 + $0x188] sm:$0xff]
    %v2061 = vld [vmem:[#allocation15 + $0x190] sm:$0xff]
    %v2062 = vld [vmem:[#allocation15 + $0x198] sm:$0xff]
    %v2063 = vld [vmem:[#allocation15 + $0x1a0] sm:$0xff]
    %v2064 = vld [vmem:[#allocation15 + $0x1a8] sm:$0xff]
    %v2065 = vld [vmem:[#allocation15 + $0x1b0] sm:$0xff]
    %v2066 = vld [vmem:[#allocation15 + $0x1b8] sm:$0xff]
    %v2067 = vld [vmem:[#allocation15 + $0x1c0] sm:$0xff]
    %v2068 = vld [vmem:[#allocation15 + $0x1c8] sm:$0xff]
    %v2069 = vld [vmem:[#allocation15 + $0x1d0] sm:$0xff]
    %v2070 = vld [vmem:[#allocation15 + $0x1d8] sm:$0xff]
    %v2071 = vld [vmem:[#allocation15 + $0x1e0] sm:$0xff]
    %v2072 = vld [vmem:[#allocation15 + $0x1e8] sm:$0xff]
    %v2073 = vld [vmem:[#allocation15 + $0x1f0] sm:$0xff]
    %v2074 = vld [vmem:[#allocation15 + $0x1f8] sm:$0xff]
    %2075 = vmatpush.msra.mxu0 %v2071
    %2076 = vmatpush.msra.mxu0 %v2067
    %2077 = vmatpush.msra.mxu0 %v2063
    %2078 = vmatpush.msra.mxu0 %v2059
    %2079 = vmatpush.msra.mxu0 %v2055
    %2080 = vmatpush.msra.mxu0 %v2051
    %2081 = vmatpush.msra.mxu0 %v2047
    %2082 = vmatpush.msra.mxu0 %v2043
    %2083 = vmatpush.msra.mxu0 %v2039
    %2084 = vmatpush.msra.mxu0 %v2035
    %2085 = vmatpush.msra.mxu0 %v2031
    %2086 = vmatpush.msra.mxu0 %v2027
    %2087 = vmatpush.msra.mxu0 %v2023
    %2088 = vmatpush.msra.mxu0 %v2019
    %2089 = vmatpush.msra.mxu0 %v2015
    %2090 = vmatpush.msra.mxu0 %v2011
    %2091 = vmatmul.f32.gmra.mxu0 %v2007
    %v2092 = vpop.f32.mrf.mxu0
    %v2093 = vadd.f32 0.0, %v2092
    %2094 = vdwg.mxu0
    %2095 = vmatpush.msra.mxu0 %v2072
    %2096 = vmatpush.msra.mxu0 %v2068
    %2097 = vmatpush.msra.mxu0 %v2064
    %2098 = vmatpush.msra.mxu0 %v2060
    %2099 = vmatpush.msra.mxu0 %v2056
    %2100 = vmatpush.msra.mxu0 %v2052
    %2101 = vmatpush.msra.mxu0 %v2048
    %2102 = vmatpush.msra.mxu0 %v2044
    %2103 = vmatpush.msra.mxu0 %v2040
    %2104 = vmatpush.msra.mxu0 %v2036
    %2105 = vmatpush.msra.mxu0 %v2032
    %2106 = vmatpush.msra.mxu0 %v2028
    %2107 = vmatpush.msra.mxu0 %v2024
    %2108 = vmatpush.msra.mxu0 %v2020
    %2109 = vmatpush.msra.mxu0 %v2016
    %2110 = vmatpush.msra.mxu0 %v2012
    %2111 = vmatmul.f32.gmra.mxu0 %v2007
    %v2112 = vpop.f32.mrf.mxu0
    %v2113 = vadd.f32 0.0, %v2112
    %2114 = vdwg.mxu0
    %2115 = vmatpush.msra.mxu0 %v2073
    %2116 = vmatpush.msra.mxu0 %v2069
    %2117 = vmatpush.msra.mxu0 %v2065
    %2118 = vmatpush.msra.mxu0 %v2061
    %2119 = vmatpush.msra.mxu0 %v2057
    %2120 = vmatpush.msra.mxu0 %v2053
    %2121 = vmatpush.msra.mxu0 %v2049
    %2122 = vmatpush.msra.mxu0 %v2045
    %2123 = vmatpush.msra.mxu0 %v2041
    %2124 = vmatpush.msra.mxu0 %v2037
    %2125 = vmatpush.msra.mxu0 %v2033
    %2126 = vmatpush.msra.mxu0 %v2029
    %2127 = vmatpush.msra.mxu0 %v2025
    %2128 = vmatpush.msra.mxu0 %v2021
    %2129 = vmatpush.msra.mxu0 %v2017
    %2130 = vmatpush.msra.mxu0 %v2013
    %2131 = vmatmul.f32.gmra.mxu0 %v2007
    %v2132 = vpop.f32.mrf.mxu0
    %v2133 = vadd.f32 0.0, %v2132
    %2134 = vdwg.mxu0
    %2135 = vmatpush.msra.mxu0 %v2074
    %2136 = vmatpush.msra.mxu0 %v2070
    %2137 = vmatpush.msra.mxu0 %v2066
    %2138 = vmatpush.msra.mxu0 %v2062
    %2139 = vmatpush.msra.mxu0 %v2058
    %2140 = vmatpush.msra.mxu0 %v2054
    %2141 = vmatpush.msra.mxu0 %v2050
    %2142 = vmatpush.msra.mxu0 %v2046
    %2143 = vmatpush.msra.mxu0 %v2042
    %2144 = vmatpush.msra.mxu0 %v2038
    %2145 = vmatpush.msra.mxu0 %v2034
    %2146 = vmatpush.msra.mxu0 %v2030
    %2147 = vmatpush.msra.mxu0 %v2026
    %2148 = vmatpush.msra.mxu0 %v2022
    %2149 = vmatpush.msra.mxu0 %v2018
    %2150 = vmatpush.msra.mxu0 %v2014
    %2151 = vmatmul.f32.gmra.mxu0 %v2007
    %v2152 = vpop.f32.mrf.mxu0
    %v2153 = vadd.f32 0.0, %v2152
    %2154 = vdwg.mxu0
    %v2159 = vrot.slane %v2113, 7
    %v2160 = vrot.slane %v2133, 6
    %v2161 = vrot.slane %v2153, 5
    %v2162 = vsel %vm252, %v2093, %v2159
    %v2163 = vsel %vm1016, %v2160, %v2161
    %v2164 = vsel %vm1018, %v2162, %v2163
    %v2166 = vadd.f32 %v2010, %v2164
    %v2167 = vxor.u32 %v2166, 2147483648
    %v2168 = vmul.f32 %v2167, 1.442695
    %v2169 = vpow.pop %v2168
    %v2170 = vadd.f32 %v2169, 1.0
    %v2171 = vrcp.pop %v2170
    %v2172 = vmul.f32 %v2170, %v2171
    %v2173 = vsub.f32 1.0, %v2172
    %v2174 = vmul.f32 %v2171, %v2173
    %v2175 = vadd.f32 %v2171, %v2174
    %vm2176 = vweird.f32 %v2170
    %vm2177 = vweird.f32 %v2171
    %vm2178 = vmor %vm2176, %vm2177
    %v2179 = vsel %vm2178, %v2171, %v2175
    %v2180 = vand.u32 2147483647, %v2170
    %vm2181 = vcmp.eq.f32.partialorder %v2180, 8.507059e+37
    %v2182 = vand.u32 %v2170, 2147483648
    %v2183 = vor.u32 1.1754944e-38, %v2182
    %v2184 = vsel %vm2181, %v2183, %v2179
    %v2185 = vmul.f32 1.0, %v2184
    %v2187 = vrot.slane %v2166, 1
    %v2189 = vxor.u32 %v2187, 2147483648
    %v2190 = vmul.f32 %v2189, 1.442695
    %v2191 = vpow.pop %v2190
    %v2192 = vadd.f32 %v2191, 1.0
    %v2193 = vrcp.pop %v2192
    %v2194 = vmul.f32 %v2192, %v2193
    %v2195 = vsub.f32 1.0, %v2194
    %v2196 = vmul.f32 %v2193, %v2195
    %v2197 = vadd.f32 %v2193, %v2196
    %vm2198 = vweird.f32 %v2192
    %vm2199 = vweird.f32 %v2193
    %vm2200 = vmor %vm2198, %vm2199
    %v2201 = vsel %vm2200, %v2193, %v2197
    %v2202 = vand.u32 2147483647, %v2192
    %vm2203 = vcmp.eq.f32.partialorder %v2202, 8.507059e+37
    %v2204 = vand.u32 %v2192, 2147483648
    %v2205 = vor.u32 1.1754944e-38, %v2204
    %v2206 = vsel %vm2203, %v2205, %v2201
    %v2207 = vmul.f32 1.0, %v2206
    %v2208 = vrot.slane %v2166, 2
    %v2210 = vtanh.pop %v2208
    %v2211 = vrot.slane %v2166, 3
    %v2213 = vxor.u32 %v2211, 2147483648
    %v2214 = vmul.f32 %v2213, 1.442695
    %v2215 = vpow.pop %v2214
    %v2216 = vadd.f32 %v2215, 1.0
    %v2217 = vrcp.pop %v2216
    %v2218 = vmul.f32 %v2216, %v2217
    %v2219 = vsub.f32 1.0, %v2218
    %v2220 = vmul.f32 %v2217, %v2219
    %v2221 = vadd.f32 %v2217, %v2220
    %vm2222 = vweird.f32 %v2216
    %vm2223 = vweird.f32 %v2217
    %vm2224 = vmor %vm2222, %vm2223
    %v2225 = vsel %vm2224, %v2217, %v2221
    %v2226 = vand.u32 2147483647, %v2216
    %vm2227 = vcmp.eq.f32.partialorder %v2226, 8.507059e+37
    %v2228 = vand.u32 %v2216, 2147483648
    %v2229 = vor.u32 1.1754944e-38, %v2228
    %v2230 = vsel %vm2227, %v2229, %v2225
    %v2231 = vmul.f32 1.0, %v2230
    %v2232 = vmul.f32 %v2207, %v2005
    %v2233 = vmul.f32 %v2185, %v2210
    %v2234 = vadd.f32 %v2232, %v2233
    %v2235 = vtanh.pop %v2234
    %v2236 = vmul.f32 %v2231, %v2235
    %2237 = vst [vmem:[#allocation3 + $0x5] sm:$0x1] %v2236
    %s2238 = scalar_lea.vmem [#allocation2], 6
    %v2239 = vld [vmem:[%s2238] ss:$8 sm:$0xf]
    %v2240 = vld [vmem:[#allocation15] sm:$0xff]
    %v2241 = vld [vmem:[#allocation15 + $0x8] sm:$0xff]
    %v2242 = vld [vmem:[#allocation15 + $0x10] sm:$0xff]
    %v2243 = vld [vmem:[#allocation15 + $0x18] sm:$0xff]
    %v2244 = vld [vmem:[#allocation15 + $0x20] sm:$0xff]
    %v2245 = vld [vmem:[#allocation15 + $0x28] sm:$0xff]
    %v2246 = vld [vmem:[#allocation15 + $0x30] sm:$0xff]
    %v2247 = vld [vmem:[#allocation15 + $0x38] sm:$0xff]
    %v2248 = vld [vmem:[#allocation15 + $0x40] sm:$0xff]
    %v2249 = vld [vmem:[#allocation15 + $0x48] sm:$0xff]
    %v2250 = vld [vmem:[#allocation15 + $0x50] sm:$0xff]
    %v2251 = vld [vmem:[#allocation15 + $0x58] sm:$0xff]
    %v2252 = vld [vmem:[#allocation15 + $0x60] sm:$0xff]
    %v2253 = vld [vmem:[#allocation15 + $0x68] sm:$0xff]
    %v2254 = vld [vmem:[#allocation15 + $0x70] sm:$0xff]
    %v2255 = vld [vmem:[#allocation15 + $0x78] sm:$0xff]
    %v2256 = vld [vmem:[#allocation15 + $0x80] sm:$0xff]
    %v2257 = vld [vmem:[#allocation15 + $0x88] sm:$0xff]
    %v2258 = vld [vmem:[#allocation15 + $0x90] sm:$0xff]
    %v2259 = vld [vmem:[#allocation15 + $0x98] sm:$0xff]
    %v2260 = vld [vmem:[#allocation15 + $0xa0] sm:$0xff]
    %v2261 = vld [vmem:[#allocation15 + $0xa8] sm:$0xff]
    %v2262 = vld [vmem:[#allocation15 + $0xb0] sm:$0xff]
    %v2263 = vld [vmem:[#allocation15 + $0xb8] sm:$0xff]
    %v2264 = vld [vmem:[#allocation15 + $0xc0] sm:$0xff]
    %v2265 = vld [vmem:[#allocation15 + $0xc8] sm:$0xff]
    %v2266 = vld [vmem:[#allocation15 + $0xd0] sm:$0xff]
    %v2267 = vld [vmem:[#allocation15 + $0xd8] sm:$0xff]
    %v2268 = vld [vmem:[#allocation15 + $0xe0] sm:$0xff]
    %v2269 = vld [vmem:[#allocation15 + $0xe8] sm:$0xff]
    %v2270 = vld [vmem:[#allocation15 + $0xf0] sm:$0xff]
    %v2271 = vld [vmem:[#allocation15 + $0xf8] sm:$0xff]
    %v2272 = vld [vmem:[#allocation15 + $0x100] sm:$0xff]
    %v2273 = vld [vmem:[#allocation15 + $0x108] sm:$0xff]
    %v2274 = vld [vmem:[#allocation15 + $0x110] sm:$0xff]
    %v2275 = vld [vmem:[#allocation15 + $0x118] sm:$0xff]
    %v2276 = vld [vmem:[#allocation15 + $0x120] sm:$0xff]
    %v2277 = vld [vmem:[#allocation15 + $0x128] sm:$0xff]
    %v2278 = vld [vmem:[#allocation15 + $0x130] sm:$0xff]
    %v2279 = vld [vmem:[#allocation15 + $0x138] sm:$0xff]
    %v2280 = vld [vmem:[#allocation15 + $0x140] sm:$0xff]
    %v2281 = vld [vmem:[#allocation15 + $0x148] sm:$0xff]
    %v2282 = vld [vmem:[#allocation15 + $0x150] sm:$0xff]
    %v2283 = vld [vmem:[#allocation15 + $0x158] sm:$0xff]
    %v2284 = vld [vmem:[#allocation15 + $0x160] sm:$0xff]
    %v2285 = vld [vmem:[#allocation15 + $0x168] sm:$0xff]
    %v2286 = vld [vmem:[#allocation15 + $0x170] sm:$0xff]
    %v2287 = vld [vmem:[#allocation15 + $0x178] sm:$0xff]
    %v2288 = vld [vmem:[#allocation15 + $0x180] sm:$0xff]
    %v2289 = vld [vmem:[#allocation15 + $0x188] sm:$0xff]
    %v2290 = vld [vmem:[#allocation15 + $0x190] sm:$0xff]
    %v2291 = vld [vmem:[#allocation15 + $0x198] sm:$0xff]
    %v2292 = vld [vmem:[#allocation15 + $0x1a0] sm:$0xff]
    %v2293 = vld [vmem:[#allocation15 + $0x1a8] sm:$0xff]
    %v2294 = vld [vmem:[#allocation15 + $0x1b0] sm:$0xff]
    %v2295 = vld [vmem:[#allocation15 + $0x1b8] sm:$0xff]
    %v2296 = vld [vmem:[#allocation15 + $0x1c0] sm:$0xff]
    %v2297 = vld [vmem:[#allocation15 + $0x1c8] sm:$0xff]
    %v2298 = vld [vmem:[#allocation15 + $0x1d0] sm:$0xff]
    %v2299 = vld [vmem:[#allocation15 + $0x1d8] sm:$0xff]
    %v2300 = vld [vmem:[#allocation15 + $0x1e0] sm:$0xff]
    %v2301 = vld [vmem:[#allocation15 + $0x1e8] sm:$0xff]
    %v2302 = vld [vmem:[#allocation15 + $0x1f0] sm:$0xff]
    %v2303 = vld [vmem:[#allocation15 + $0x1f8] sm:$0xff]
    %2304 = vmatpush.msra.mxu0 %v2300
    %2305 = vmatpush.msra.mxu0 %v2296
    %2306 = vmatpush.msra.mxu0 %v2292
    %2307 = vmatpush.msra.mxu0 %v2288
    %2308 = vmatpush.msra.mxu0 %v2284
    %2309 = vmatpush.msra.mxu0 %v2280
    %2310 = vmatpush.msra.mxu0 %v2276
    %2311 = vmatpush.msra.mxu0 %v2272
    %2312 = vmatpush.msra.mxu0 %v2268
    %2313 = vmatpush.msra.mxu0 %v2264
    %2314 = vmatpush.msra.mxu0 %v2260
    %2315 = vmatpush.msra.mxu0 %v2256
    %2316 = vmatpush.msra.mxu0 %v2252
    %2317 = vmatpush.msra.mxu0 %v2248
    %2318 = vmatpush.msra.mxu0 %v2244
    %2319 = vmatpush.msra.mxu0 %v2240
    %2320 = vmatmul.f32.gmra.mxu0 %v2236
    %v2321 = vpop.f32.mrf.mxu0
    %v2322 = vadd.f32 0.0, %v2321
    %2323 = vdwg.mxu0
    %2324 = vmatpush.msra.mxu0 %v2301
    %2325 = vmatpush.msra.mxu0 %v2297
    %2326 = vmatpush.msra.mxu0 %v2293
    %2327 = vmatpush.msra.mxu0 %v2289
    %2328 = vmatpush.msra.mxu0 %v2285
    %2329 = vmatpush.msra.mxu0 %v2281
    %2330 = vmatpush.msra.mxu0 %v2277
    %2331 = vmatpush.msra.mxu0 %v2273
    %2332 = vmatpush.msra.mxu0 %v2269
    %2333 = vmatpush.msra.mxu0 %v2265
    %2334 = vmatpush.msra.mxu0 %v2261
    %2335 = vmatpush.msra.mxu0 %v2257
    %2336 = vmatpush.msra.mxu0 %v2253
    %2337 = vmatpush.msra.mxu0 %v2249
    %2338 = vmatpush.msra.mxu0 %v2245
    %2339 = vmatpush.msra.mxu0 %v2241
    %2340 = vmatmul.f32.gmra.mxu0 %v2236
    %v2341 = vpop.f32.mrf.mxu0
    %v2342 = vadd.f32 0.0, %v2341
    %2343 = vdwg.mxu0
    %2344 = vmatpush.msra.mxu0 %v2302
    %2345 = vmatpush.msra.mxu0 %v2298
    %2346 = vmatpush.msra.mxu0 %v2294
    %2347 = vmatpush.msra.mxu0 %v2290
    %2348 = vmatpush.msra.mxu0 %v2286
    %2349 = vmatpush.msra.mxu0 %v2282
    %2350 = vmatpush.msra.mxu0 %v2278
    %2351 = vmatpush.msra.mxu0 %v2274
    %2352 = vmatpush.msra.mxu0 %v2270
    %2353 = vmatpush.msra.mxu0 %v2266
    %2354 = vmatpush.msra.mxu0 %v2262
    %2355 = vmatpush.msra.mxu0 %v2258
    %2356 = vmatpush.msra.mxu0 %v2254
    %2357 = vmatpush.msra.mxu0 %v2250
    %2358 = vmatpush.msra.mxu0 %v2246
    %2359 = vmatpush.msra.mxu0 %v2242
    %2360 = vmatmul.f32.gmra.mxu0 %v2236
    %v2361 = vpop.f32.mrf.mxu0
    %v2362 = vadd.f32 0.0, %v2361
    %2363 = vdwg.mxu0
    %2364 = vmatpush.msra.mxu0 %v2303
    %2365 = vmatpush.msra.mxu0 %v2299
    %2366 = vmatpush.msra.mxu0 %v2295
    %2367 = vmatpush.msra.mxu0 %v2291
    %2368 = vmatpush.msra.mxu0 %v2287
    %2369 = vmatpush.msra.mxu0 %v2283
    %2370 = vmatpush.msra.mxu0 %v2279
    %2371 = vmatpush.msra.mxu0 %v2275
    %2372 = vmatpush.msra.mxu0 %v2271
    %2373 = vmatpush.msra.mxu0 %v2267
    %2374 = vmatpush.msra.mxu0 %v2263
    %2375 = vmatpush.msra.mxu0 %v2259
    %2376 = vmatpush.msra.mxu0 %v2255
    %2377 = vmatpush.msra.mxu0 %v2251
    %2378 = vmatpush.msra.mxu0 %v2247
    %2379 = vmatpush.msra.mxu0 %v2243
    %2380 = vmatmul.f32.gmra.mxu0 %v2236
    %v2381 = vpop.f32.mrf.mxu0
    %v2382 = vadd.f32 0.0, %v2381
    %2383 = vdwg.mxu0
    %v2388 = vrot.slane %v2342, 7
    %v2389 = vrot.slane %v2362, 6
    %v2390 = vrot.slane %v2382, 5
    %v2391 = vsel %vm252, %v2322, %v2388
    %v2392 = vsel %vm1016, %v2389, %v2390
    %v2393 = vsel %vm1018, %v2391, %v2392
    %v2395 = vadd.f32 %v2239, %v2393
    %v2396 = vxor.u32 %v2395, 2147483648
    %v2397 = vmul.f32 %v2396, 1.442695
    %v2398 = vpow.pop %v2397
    %v2399 = vadd.f32 %v2398, 1.0
    %v2400 = vrcp.pop %v2399
    %v2401 = vmul.f32 %v2399, %v2400
    %v2402 = vsub.f32 1.0, %v2401
    %v2403 = vmul.f32 %v2400, %v2402
    %v2404 = vadd.f32 %v2400, %v2403
    %vm2405 = vweird.f32 %v2399
    %vm2406 = vweird.f32 %v2400
    %vm2407 = vmor %vm2405, %vm2406
    %v2408 = vsel %vm2407, %v2400, %v2404
    %v2409 = vand.u32 2147483647, %v2399
    %vm2410 = vcmp.eq.f32.partialorder %v2409, 8.507059e+37
    %v2411 = vand.u32 %v2399, 2147483648
    %v2412 = vor.u32 1.1754944e-38, %v2411
    %v2413 = vsel %vm2410, %v2412, %v2408
    %v2414 = vmul.f32 1.0, %v2413
    %v2416 = vrot.slane %v2395, 1
    %v2418 = vxor.u32 %v2416, 2147483648
    %v2419 = vmul.f32 %v2418, 1.442695
    %v2420 = vpow.pop %v2419
    %v2421 = vadd.f32 %v2420, 1.0
    %v2422 = vrcp.pop %v2421
    %v2423 = vmul.f32 %v2421, %v2422
    %v2424 = vsub.f32 1.0, %v2423
    %v2425 = vmul.f32 %v2422, %v2424
    %v2426 = vadd.f32 %v2422, %v2425
    %vm2427 = vweird.f32 %v2421
    %vm2428 = vweird.f32 %v2422
    %vm2429 = vmor %vm2427, %vm2428
    %v2430 = vsel %vm2429, %v2422, %v2426
    %v2431 = vand.u32 2147483647, %v2421
    %vm2432 = vcmp.eq.f32.partialorder %v2431, 8.507059e+37
    %v2433 = vand.u32 %v2421, 2147483648
    %v2434 = vor.u32 1.1754944e-38, %v2433
    %v2435 = vsel %vm2432, %v2434, %v2430
    %v2436 = vmul.f32 1.0, %v2435
    %v2437 = vrot.slane %v2395, 2
    %v2439 = vtanh.pop %v2437
    %v2440 = vrot.slane %v2395, 3
    %v2442 = vxor.u32 %v2440, 2147483648
    %v2443 = vmul.f32 %v2442, 1.442695
    %v2444 = vpow.pop %v2443
    %v2445 = vadd.f32 %v2444, 1.0
    %v2446 = vrcp.pop %v2445
    %v2447 = vmul.f32 %v2445, %v2446
    %v2448 = vsub.f32 1.0, %v2447
    %v2449 = vmul.f32 %v2446, %v2448
    %v2450 = vadd.f32 %v2446, %v2449
    %vm2451 = vweird.f32 %v2445
    %vm2452 = vweird.f32 %v2446
    %vm2453 = vmor %vm2451, %vm2452
    %v2454 = vsel %vm2453, %v2446, %v2450
    %v2455 = vand.u32 2147483647, %v2445
    %vm2456 = vcmp.eq.f32.partialorder %v2455, 8.507059e+37
    %v2457 = vand.u32 %v2445, 2147483648
    %v2458 = vor.u32 1.1754944e-38, %v2457
    %v2459 = vsel %vm2456, %v2458, %v2454
    %v2460 = vmul.f32 1.0, %v2459
    %v2461 = vmul.f32 %v2436, %v2234
    %v2462 = vmul.f32 %v2414, %v2439
    %v2463 = vadd.f32 %v2461, %v2462
    %v2464 = vtanh.pop %v2463
    %v2465 = vmul.f32 %v2460, %v2464
    %2466 = vst [vmem:[#allocation3 + $0x6] sm:$0x1] %v2465
    %s2467 = scalar_lea.vmem [#allocation2], 7
    %v2468 = vld [vmem:[%s2467] ss:$8 sm:$0xf]
    %v2469 = vld [vmem:[#allocation15] sm:$0xff]
    %v2470 = vld [vmem:[#allocation15 + $0x8] sm:$0xff]
    %v2471 = vld [vmem:[#allocation15 + $0x10] sm:$0xff]
    %v2472 = vld [vmem:[#allocation15 + $0x18] sm:$0xff]
    %v2473 = vld [vmem:[#allocation15 + $0x20] sm:$0xff]
    %v2474 = vld [vmem:[#allocation15 + $0x28] sm:$0xff]
    %v2475 = vld [vmem:[#allocation15 + $0x30] sm:$0xff]
    %v2476 = vld [vmem:[#allocation15 + $0x38] sm:$0xff]
    %v2477 = vld [vmem:[#allocation15 + $0x40] sm:$0xff]
    %v2478 = vld [vmem:[#allocation15 + $0x48] sm:$0xff]
    %v2479 = vld [vmem:[#allocation15 + $0x50] sm:$0xff]
    %v2480 = vld [vmem:[#allocation15 + $0x58] sm:$0xff]
    %v2481 = vld [vmem:[#allocation15 + $0x60] sm:$0xff]
    %v2482 = vld [vmem:[#allocation15 + $0x68] sm:$0xff]
    %v2483 = vld [vmem:[#allocation15 + $0x70] sm:$0xff]
    %v2484 = vld [vmem:[#allocation15 + $0x78] sm:$0xff]
    %v2485 = vld [vmem:[#allocation15 + $0x80] sm:$0xff]
    %v2486 = vld [vmem:[#allocation15 + $0x88] sm:$0xff]
    %v2487 = vld [vmem:[#allocation15 + $0x90] sm:$0xff]
    %v2488 = vld [vmem:[#allocation15 + $0x98] sm:$0xff]
    %v2489 = vld [vmem:[#allocation15 + $0xa0] sm:$0xff]
    %v2490 = vld [vmem:[#allocation15 + $0xa8] sm:$0xff]
    %v2491 = vld [vmem:[#allocation15 + $0xb0] sm:$0xff]
    %v2492 = vld [vmem:[#allocation15 + $0xb8] sm:$0xff]
    %v2493 = vld [vmem:[#allocation15 + $0xc0] sm:$0xff]
    %v2494 = vld [vmem:[#allocation15 + $0xc8] sm:$0xff]
    %v2495 = vld [vmem:[#allocation15 + $0xd0] sm:$0xff]
    %v2496 = vld [vmem:[#allocation15 + $0xd8] sm:$0xff]
    %v2497 = vld [vmem:[#allocation15 + $0xe0] sm:$0xff]
    %v2498 = vld [vmem:[#allocation15 + $0xe8] sm:$0xff]
    %v2499 = vld [vmem:[#allocation15 + $0xf0] sm:$0xff]
    %v2500 = vld [vmem:[#allocation15 + $0xf8] sm:$0xff]
    %v2501 = vld [vmem:[#allocation15 + $0x100] sm:$0xff]
    %v2502 = vld [vmem:[#allocation15 + $0x108] sm:$0xff]
    %v2503 = vld [vmem:[#allocation15 + $0x110] sm:$0xff]
    %v2504 = vld [vmem:[#allocation15 + $0x118] sm:$0xff]
    %v2505 = vld [vmem:[#allocation15 + $0x120] sm:$0xff]
    %v2506 = vld [vmem:[#allocation15 + $0x128] sm:$0xff]
    %v2507 = vld [vmem:[#allocation15 + $0x130] sm:$0xff]
    %v2508 = vld [vmem:[#allocation15 + $0x138] sm:$0xff]
    %v2509 = vld [vmem:[#allocation15 + $0x140] sm:$0xff]
    %v2510 = vld [vmem:[#allocation15 + $0x148] sm:$0xff]
    %v2511 = vld [vmem:[#allocation15 + $0x150] sm:$0xff]
    %v2512 = vld [vmem:[#allocation15 + $0x158] sm:$0xff]
    %v2513 = vld [vmem:[#allocation15 + $0x160] sm:$0xff]
    %v2514 = vld [vmem:[#allocation15 + $0x168] sm:$0xff]
    %v2515 = vld [vmem:[#allocation15 + $0x170] sm:$0xff]
    %v2516 = vld [vmem:[#allocation15 + $0x178] sm:$0xff]
    %v2517 = vld [vmem:[#allocation15 + $0x180] sm:$0xff]
    %v2518 = vld [vmem:[#allocation15 + $0x188] sm:$0xff]
    %v2519 = vld [vmem:[#allocation15 + $0x190] sm:$0xff]
    %v2520 = vld [vmem:[#allocation15 + $0x198] sm:$0xff]
    %v2521 = vld [vmem:[#allocation15 + $0x1a0] sm:$0xff]
    %v2522 = vld [vmem:[#allocation15 + $0x1a8] sm:$0xff]
    %v2523 = vld [vmem:[#allocation15 + $0x1b0] sm:$0xff]
    %v2524 = vld [vmem:[#allocation15 + $0x1b8] sm:$0xff]
    %v2525 = vld [vmem:[#allocation15 + $0x1c0] sm:$0xff]
    %v2526 = vld [vmem:[#allocation15 + $0x1c8] sm:$0xff]
    %v2527 = vld [vmem:[#allocation15 + $0x1d0] sm:$0xff]
    %v2528 = vld [vmem:[#allocation15 + $0x1d8] sm:$0xff]
    %v2529 = vld [vmem:[#allocation15 + $0x1e0] sm:$0xff]
    %v2530 = vld [vmem:[#allocation15 + $0x1e8] sm:$0xff]
    %v2531 = vld [vmem:[#allocation15 + $0x1f0] sm:$0xff]
    %v2532 = vld [vmem:[#allocation15 + $0x1f8] sm:$0xff]
    %2533 = vmatpush.msra.mxu0 %v2529
    %2534 = vmatpush.msra.mxu0 %v2525
    %2535 = vmatpush.msra.mxu0 %v2521
    %2536 = vmatpush.msra.mxu0 %v2517
    %2537 = vmatpush.msra.mxu0 %v2513
    %2538 = vmatpush.msra.mxu0 %v2509
    %2539 = vmatpush.msra.mxu0 %v2505
    %2540 = vmatpush.msra.mxu0 %v2501
    %2541 = vmatpush.msra.mxu0 %v2497
    %2542 = vmatpush.msra.mxu0 %v2493
    %2543 = vmatpush.msra.mxu0 %v2489
    %2544 = vmatpush.msra.mxu0 %v2485
    %2545 = vmatpush.msra.mxu0 %v2481
    %2546 = vmatpush.msra.mxu0 %v2477
    %2547 = vmatpush.msra.mxu0 %v2473
    %2548 = vmatpush.msra.mxu0 %v2469
    %2549 = vmatmul.f32.gmra.mxu0 %v2465
    %v2550 = vpop.f32.mrf.mxu0
    %v2551 = vadd.f32 0.0, %v2550
    %2552 = vdwg.mxu0
    %2553 = vmatpush.msra.mxu0 %v2530
    %2554 = vmatpush.msra.mxu0 %v2526
    %2555 = vmatpush.msra.mxu0 %v2522
    %2556 = vmatpush.msra.mxu0 %v2518
    %2557 = vmatpush.msra.mxu0 %v2514
    %2558 = vmatpush.msra.mxu0 %v2510
    %2559 = vmatpush.msra.mxu0 %v2506
    %2560 = vmatpush.msra.mxu0 %v2502
    %2561 = vmatpush.msra.mxu0 %v2498
    %2562 = vmatpush.msra.mxu0 %v2494
    %2563 = vmatpush.msra.mxu0 %v2490
    %2564 = vmatpush.msra.mxu0 %v2486
    %2565 = vmatpush.msra.mxu0 %v2482
    %2566 = vmatpush.msra.mxu0 %v2478
    %2567 = vmatpush.msra.mxu0 %v2474
    %2568 = vmatpush.msra.mxu0 %v2470
    %2569 = vmatmul.f32.gmra.mxu0 %v2465
    %v2570 = vpop.f32.mrf.mxu0
    %v2571 = vadd.f32 0.0, %v2570
    %2572 = vdwg.mxu0
    %2573 = vmatpush.msra.mxu0 %v2531
    %2574 = vmatpush.msra.mxu0 %v2527
    %2575 = vmatpush.msra.mxu0 %v2523
    %2576 = vmatpush.msra.mxu0 %v2519
    %2577 = vmatpush.msra.mxu0 %v2515
    %2578 = vmatpush.msra.mxu0 %v2511
    %2579 = vmatpush.msra.mxu0 %v2507
    %2580 = vmatpush.msra.mxu0 %v2503
    %2581 = vmatpush.msra.mxu0 %v2499
    %2582 = vmatpush.msra.mxu0 %v2495
    %2583 = vmatpush.msra.mxu0 %v2491
    %2584 = vmatpush.msra.mxu0 %v2487
    %2585 = vmatpush.msra.mxu0 %v2483
    %2586 = vmatpush.msra.mxu0 %v2479
    %2587 = vmatpush.msra.mxu0 %v2475
    %2588 = vmatpush.msra.mxu0 %v2471
    %2589 = vmatmul.f32.gmra.mxu0 %v2465
    %v2590 = vpop.f32.mrf.mxu0
    %v2591 = vadd.f32 0.0, %v2590
    %2592 = vdwg.mxu0
    %2593 = vmatpush.msra.mxu0 %v2532
    %2594 = vmatpush.msra.mxu0 %v2528
    %2595 = vmatpush.msra.mxu0 %v2524
    %2596 = vmatpush.msra.mxu0 %v2520
    %2597 = vmatpush.msra.mxu0 %v2516
    %2598 = vmatpush.msra.mxu0 %v2512
    %2599 = vmatpush.msra.mxu0 %v2508
    %2600 = vmatpush.msra.mxu0 %v2504
    %2601 = vmatpush.msra.mxu0 %v2500
    %2602 = vmatpush.msra.mxu0 %v2496
    %2603 = vmatpush.msra.mxu0 %v2492
    %2604 = vmatpush.msra.mxu0 %v2488
    %2605 = vmatpush.msra.mxu0 %v2484
    %2606 = vmatpush.msra.mxu0 %v2480
    %2607 = vmatpush.msra.mxu0 %v2476
    %2608 = vmatpush.msra.mxu0 %v2472
    %2609 = vmatmul.f32.gmra.mxu0 %v2465
    %v2610 = vpop.f32.mrf.mxu0
    %v2611 = vadd.f32 0.0, %v2610
    %2612 = vdwg.mxu0
    %v2617 = vrot.slane %v2571, 7
    %v2618 = vrot.slane %v2591, 6
    %v2619 = vrot.slane %v2611, 5
    %v2620 = vsel %vm252, %v2551, %v2617
    %v2621 = vsel %vm1016, %v2618, %v2619
    %v2622 = vsel %vm1018, %v2620, %v2621
    %v2624 = vadd.f32 %v2468, %v2622
    %v2625 = vxor.u32 %v2624, 2147483648
    %v2626 = vmul.f32 %v2625, 1.442695
    %v2627 = vpow.pop %v2626
    %v2628 = vadd.f32 %v2627, 1.0
    %v2629 = vrcp.pop %v2628
    %v2630 = vmul.f32 %v2628, %v2629
    %v2631 = vsub.f32 1.0, %v2630
    %v2632 = vmul.f32 %v2629, %v2631
    %v2633 = vadd.f32 %v2629, %v2632
    %vm2634 = vweird.f32 %v2628
    %vm2635 = vweird.f32 %v2629
    %vm2636 = vmor %vm2634, %vm2635
    %v2637 = vsel %vm2636, %v2629, %v2633
    %v2638 = vand.u32 2147483647, %v2628
    %vm2639 = vcmp.eq.f32.partialorder %v2638, 8.507059e+37
    %v2640 = vand.u32 %v2628, 2147483648
    %v2641 = vor.u32 1.1754944e-38, %v2640
    %v2642 = vsel %vm2639, %v2641, %v2637
    %v2643 = vmul.f32 1.0, %v2642
    %v2645 = vrot.slane %v2624, 1
    %v2647 = vxor.u32 %v2645, 2147483648
    %v2648 = vmul.f32 %v2647, 1.442695
    %v2649 = vpow.pop %v2648
    %v2650 = vadd.f32 %v2649, 1.0
    %v2651 = vrcp.pop %v2650
    %v2652 = vmul.f32 %v2650, %v2651
    %v2653 = vsub.f32 1.0, %v2652
    %v2654 = vmul.f32 %v2651, %v2653
    %v2655 = vadd.f32 %v2651, %v2654
    %vm2656 = vweird.f32 %v2650
    %vm2657 = vweird.f32 %v2651
    %vm2658 = vmor %vm2656, %vm2657
    %v2659 = vsel %vm2658, %v2651, %v2655
    %v2660 = vand.u32 2147483647, %v2650
    %vm2661 = vcmp.eq.f32.partialorder %v2660, 8.507059e+37
    %v2662 = vand.u32 %v2650, 2147483648
    %v2663 = vor.u32 1.1754944e-38, %v2662
    %v2664 = vsel %vm2661, %v2663, %v2659
    %v2665 = vmul.f32 1.0, %v2664
    %v2666 = vrot.slane %v2624, 2
    %v2668 = vtanh.pop %v2666
    %v2669 = vrot.slane %v2624, 3
    %v2671 = vxor.u32 %v2669, 2147483648
    %v2672 = vmul.f32 %v2671, 1.442695
    %v2673 = vpow.pop %v2672
    %v2674 = vadd.f32 %v2673, 1.0
    %v2675 = vrcp.pop %v2674
    %v2676 = vmul.f32 %v2674, %v2675
    %v2677 = vsub.f32 1.0, %v2676
    %v2678 = vmul.f32 %v2675, %v2677
    %v2679 = vadd.f32 %v2675, %v2678
    %vm2680 = vweird.f32 %v2674
    %vm2681 = vweird.f32 %v2675
    %vm2682 = vmor %vm2680, %vm2681
    %v2683 = vsel %vm2682, %v2675, %v2679
    %v2684 = vand.u32 2147483647, %v2674
    %vm2685 = vcmp.eq.f32.partialorder %v2684, 8.507059e+37
    %v2686 = vand.u32 %v2674, 2147483648
    %v2687 = vor.u32 1.1754944e-38, %v2686
    %v2688 = vsel %vm2685, %v2687, %v2683
    %v2689 = vmul.f32 1.0, %v2688
    %v2690 = vmul.f32 %v2665, %v2463
    %v2691 = vmul.f32 %v2643, %v2668
    %v2692 = vadd.f32 %v2690, %v2691
    %v2693 = vtanh.pop %v2692
    %v2694 = vmul.f32 %v2689, %v2693
    %2695 = vst [vmem:[#allocation3 + $0x7] sm:$0x1] %v2694
    %2696 = vst [vmem:[#allocation21] sm:$0x1] %v2694
    %2697 = vst [vmem:[#allocation23] sm:$0x1] %v2692
    %v2698 = vld [vmem:[#allocation3] sm:$0xff]
    %v2699 = vld [vmem:[#allocation17] sm:$0xff]
    %v2700 = vld [vmem:[#allocation17 + $0x8] sm:$0xff]
    %v2701 = vld [vmem:[#allocation17 + $0x10] sm:$0xff]
    %v2702 = vld [vmem:[#allocation17 + $0x18] sm:$0xff]
    %v2703 = vld [vmem:[#allocation17 + $0x20] sm:$0xff]
    %v2704 = vld [vmem:[#allocation17 + $0x28] sm:$0xff]
    %v2705 = vld [vmem:[#allocation17 + $0x30] sm:$0xff]
    %v2706 = vld [vmem:[#allocation17 + $0x38] sm:$0xff]
    %v2707 = vld [vmem:[#allocation17 + $0x40] sm:$0xff]
    %v2708 = vld [vmem:[#allocation17 + $0x48] sm:$0xff]
    %v2709 = vld [vmem:[#allocation17 + $0x50] sm:$0xff]
    %v2710 = vld [vmem:[#allocation17 + $0x58] sm:$0xff]
    %v2711 = vld [vmem:[#allocation17 + $0x60] sm:$0xff]
    %v2712 = vld [vmem:[#allocation17 + $0x68] sm:$0xff]
    %v2713 = vld [vmem:[#allocation17 + $0x70] sm:$0xff]
    %v2714 = vld [vmem:[#allocation17 + $0x78] sm:$0xff]
    %v2715 = vld [vmem:[#allocation18] sm:$0x1]
    %v2717 = vperm.slane %v2715, 0
    %2719 = vmatpush.msra.mxu0 %v2714
    %2720 = vmatpush.msra.mxu0 %v2713
    %2721 = vmatpush.msra.mxu0 %v2712
    %2722 = vmatpush.msra.mxu0 %v2711
    %2723 = vmatpush.msra.mxu0 %v2710
    %2724 = vmatpush.msra.mxu0 %v2709
    %2725 = vmatpush.msra.mxu0 %v2708
    %2726 = vmatpush.msra.mxu0 %v2707
    %2727 = vmatpush.msra.mxu0 %v2706
    %2728 = vmatpush.msra.mxu0 %v2705
    %2729 = vmatpush.msra.mxu0 %v2704
    %2730 = vmatpush.msra.mxu0 %v2703
    %2731 = vmatpush.msra.mxu0 %v2702
    %2732 = vmatpush.msra.mxu0 %v2701
    %2733 = vmatpush.msra.mxu0 %v2700
    %2734 = vmatpush.msra.mxu0 %v2699
    %2735 = vmatmul.f32.gmra.mxu0 %v2698
    %v2736 = vpop.f32.mrf.mxu0
    %v2737 = vadd.f32 %v2717, %v2736
    %2738 = vdwg.mxu0
    %2739 = vst [vmem:[#allocation20] sm:$0xff] %v2737
    // Predicated region
    $region86: #{forward.1} parent=1 // pred_check
      _
    $region87: #{forward.1} parent=1 // pred_check_branch
      %2741 = sbr.rel (0) target = $region89
    $region88: #{forward.1} parent=1 // pred_region
      _
    $region89: #{forward.1} parent=1 // pred_fallthru
      _
    // Predicated region
    $region90: #{forward.1} parent=1 // pred_check
      _
    $region91: #{forward.1} parent=1 // pred_check_branch
      %2743 = sbr.rel (0) target = $region93
    $region92: #{forward.1} parent=1 // pred_region
      %2745 = vsyncadd [#allocation8], 0
      %s2747 = sshll.u32 [#allocation20], 4
      %s2748 = int_to_ptr.vmem [resolvable:$true] %s2747
      %s2749 = sshll.u32 %s15, 4
      %s2750 = int_to_ptr.hbm [resolvable:$true] %s2749
      %2752 = dma.vmem_to_hbm [thread:$0]  %s2748, 128, %s2750, [#allocation8]
    $region93: #{forward.1} parent=1 // pred_fallthru
      _
    // Predicated region
    $region94: #{forward.1} parent=1 // pred_check
      _
    $region95: #{forward.1} parent=1 // pred_check_branch
      %2754 = sbr.rel (0) target = $region97
    $region96: #{forward.1} parent=1 // pred_region
      %2756 = vsyncadd [#allocation22], 0
      %s2758 = sshll.u32 [#allocation21], 4
      %s2759 = int_to_ptr.vmem [resolvable:$true] %s2758
      %s2760 = sshll.u32 %s16, 4
      %s2761 = int_to_ptr.hbm [resolvable:$true] %s2760
      %2763 = dma.vmem_to_hbm [thread:$0]  %s2759, 16, %s2761, [#allocation22]
    $region97: #{forward.1} parent=1 // pred_fallthru
      _
    // Predicated region
    $region98: #{forward.1} parent=1 // pred_check
      _
    $region99: #{forward.1} parent=1 // pred_check_branch
      %2765 = sbr.rel (0) target = $region101
    $region100: #{forward.1} parent=1 // pred_region
      %2767 = vsyncadd [#allocation22], 0
      %s2769 = sshll.u32 [#allocation23], 4
      %s2770 = int_to_ptr.vmem [resolvable:$true] %s2769
      %s2771 = sshll.u32 %s17, 4
      %s2772 = int_to_ptr.hbm [resolvable:$true] %s2771
      %2774 = dma.vmem_to_hbm [thread:$0]  %s2770, 16, %s2772, [#allocation22]
    $region101: #{forward.1} parent=1 // pred_fallthru
      _
    // Predicated region
    $region102: #{forward.1} parent=1 // pred_check
      _
    $region103: #{forward.1} parent=1 // pred_check_branch
      %2776 = sbr.rel (0) target = $region105
    $region104: #{forward.1} parent=1 // pred_region
      _
    $region105: #{forward.1} parent=1 // pred_fallthru
      _
    // Predicated region
    $region106: #{forward.1} parent=1 // pred_check
      _
    $region107: #{forward.1} parent=1 // pred_check_branch
      %2778 = sbr.rel (0) target = $region109
    $region108: #{forward.1} parent=1 // pred_region
      %2780 = dma.done [#allocation8], 128
    $region109: #{forward.1} parent=1 // pred_fallthru
      _
    // Predicated region
    $region110: #{forward.1} parent=1 // pred_check
      _
    $region111: #{forward.1} parent=1 // pred_check_branch
      %2782 = sbr.rel (0) target = $region113
    $region112: #{forward.1} parent=1 // pred_region
      %2784 = dma.done [#allocation22], 16
    $region113: #{forward.1} parent=1 // pred_fallthru
      _
    // Predicated region
    $region114: #{forward.1} parent=1 // pred_check
      _
    $region115: #{forward.1} parent=1 // pred_check_branch
      %2786 = sbr.rel (0) target = $region117
    $region116: #{forward.1} parent=1 // pred_region
      %2788 = dma.done [#allocation22], 16
    $region117: #{forward.1} parent=1 // pred_fallthru
      _
    %2789 = vsyncpa [#allocation7], 1
    %2790 = vsyncpa [#allocation10], 1
    %2791 = vsyncpa [#allocation13], 1
    %2792 = vsyncpa [#allocation16], 1
    %2793 = vsyncpa [#allocation19], 1
    %2794 = vsyncpa [#allocation8], 1
    %2795 = vsyncpa [#allocation22], 1

</llo_original>
